<compile_context>
chip_gen: v7x
topology: tpu7x:2x2x1
jax: 0.10.0
libtpu: 0.0.40
codegen_flags: <defaults>
</compile_context>

<pallas_src>
import jax
import jax.numpy as jnp
from jax.experimental import pallas as pl
from jax.experimental.pallas import tpu as pltpu


# ----------------------------------------------------------------------------
# Tiling helpers
# ----------------------------------------------------------------------------
def _round_up(n, m):
    return ((n + m - 1) // m) * m


def _choose_tiles(B, IN, OUT, max_tb=128, max_ti=256, max_to=128):
    """Tile sizes + padded dims.  TO/TI multiples of 128 (lane-dense), TB multiple of 8."""
    TB = min(max_tb, _round_up(B, 8))
    TI = min(max_ti, _round_up(IN, 128))
    TO = min(max_to, _round_up(OUT, 128))
    return TB, TI, TO, _round_up(B, TB), _round_up(IN, TI), _round_up(OUT, TO)


def _pad2d(a, rows, cols):
    return jnp.pad(a, ((0, rows - a.shape[0]), (0, cols - a.shape[1])))


# ----------------------------------------------------------------------------
# Weight-prep kernels (run once per weight update, NOT per batch tile)
# ----------------------------------------------------------------------------
def _train_weight_prep_kernel(lmag_ref, lsgn_ref, wmean_ref, wvar_ref):
    p_mag = jax.nn.sigmoid(lmag_ref[...])
    p_sgn = jax.nn.sigmoid(lsgn_ref[...])
    two_sgn = 2.0 * p_sgn - 1.0
    w_mean = p_mag * two_sgn                                   # == 2*p_mag*p_sgn - p_mag
    w_var = p_mag - (p_mag * p_mag) * (two_sgn * two_sgn)
    wmean_ref[...] = w_mean.astype(wmean_ref.dtype)
    wvar_ref[...] = w_var.astype(wvar_ref.dtype)


def _eval_weight_prep_kernel(lmag_ref, lsgn_ref, w_ref):
    # {-1, 0, +1} are exactly representable in bf16 (works on v7x where the MXU has no int path).
    # TODO(synk): on v5e/v6e an int8 eval-weight variant would cut weight traffic another 2x.
    w_mag = (lmag_ref[...] > 0.0).astype(jnp.float32)
    w_sgn = 2.0 * (lsgn_ref[...] > 0.0).astype(jnp.float32) - 1.0
    w_ref[...] = (w_sgn * w_mag).astype(w_ref.dtype)


def _prep_call(kernel, lmag_p, lsgn_p, n_out, ti, to):
    INp, OUTp = lmag_p.shape
    spec = pl.BlockSpec((ti, to), lambda i, j: (i, j))
    out_shape = tuple(jax.ShapeDtypeStruct((INp, OUTp), jnp.bfloat16) for _ in range(n_out))
    out_specs = tuple(spec for _ in range(n_out))
    if n_out == 1:
        out_shape, out_specs = out_shape[0], out_specs[0]
    return pl.pallas_call(
        kernel,
        out_shape=out_shape,
        grid=(INp // ti, OUTp // to),
        in_specs=[spec, spec],
        out_specs=out_specs,
        compiler_params=pltpu.CompilerParams(
            dimension_semantics=("parallel", "parallel")),
    )(lmag_p, lsgn_p)


# ----------------------------------------------------------------------------
# Tiled forward kernels (grid = (B tiles, OUT tiles, IN tiles); IN is the reduction)
# ----------------------------------------------------------------------------
def _train_matmul_kernel(x_ref, wmean_ref, wvar_ref, scale_ref, shift_ref, noise_ref,
                         o_ref, acc_mean, acc_var):
    k = pl.program_id(2)

    @pl.when(k == 0)
    def _init():
        acc_mean[...] = jnp.zeros_like(acc_mean)
        acc_var[...] = jnp.zeros_like(acc_var)

    x = x_ref[...]                                             # (TB, TI) bf16
    acc_mean[...] += jnp.dot(x, wmean_ref[...], preferred_element_type=jnp.float32)
    acc_var[...] += jnp.dot(x * x, wvar_ref[...], preferred_element_type=jnp.float32)

    @pl.when(k == pl.num_programs(2) - 1)
    def _finalize():
        out_std = jnp.sqrt(jnp.maximum(acc_var[...], 1e-4))    # clamp(var, 1e-4).sqrt()
        out = acc_mean[...] + out_std * noise_ref[...]
        o_ref[...] = jax.nn.softplus(scale_ref[...]) * out + shift_ref[...]


def _eval_matmul_kernel(x_ref, w_ref, scale_ref, shift_ref, o_ref, acc):
    k = pl.program_id(2)

    @pl.when(k == 0)
    def _init():
        acc[...] = jnp.zeros_like(acc)

    acc[...] += jnp.dot(x_ref[...], w_ref[...], preferred_element_type=jnp.float32)

    @pl.when(k == pl.num_programs(2) - 1)
    def _finalize():
        o_ref[...] = jax.nn.softplus(scale_ref[...]) * acc[...] + shift_ref[...]


# ----------------------------------------------------------------------------
# Forward wrappers (handle arbitrary shapes via zero-padding to tile multiples)
# ----------------------------------------------------------------------------
@jax.jit
def ternary_train_forward(x, weight_logits, scale, shift, noise):
    """train_forward: local reparameterization.  noise ~ N(0,1) of shape (B, OUT) is passed in
    (matches torch.randn_like).  # TODO(synk): could use pltpu.prng_random_bits in-kernel to
    avoid the (B, OUT) HBM read at very large batch."""
    B, IN = x.shape
    OUT = weight_logits.shape[0]
    TB, TI, TO, Bp, INp, OUTp = _choose_tiles(B, IN, OUT)

    # Weight transform once, in a Pallas prep kernel (emitted as bf16 MXU operands).
    lmag = _pad2d(weight_logits[..., 0].T.astype(jnp.float32), INp, OUTp)
    lsgn = _pad2d(weight_logits[..., 1].T.astype(jnp.float32), INp, OUTp)
    w_mean, w_var = _prep_call(_train_weight_prep_kernel, lmag, lsgn, 2, TI, TO)

    x_p = _pad2d(x.astype(jnp.float32), Bp, INp).astype(jnp.bfloat16)
    noise_p = _pad2d(noise.astype(jnp.float32), Bp, OUTp)
    scale_p = jnp.pad(scale.astype(jnp.float32), (0, OUTp - OUT)).reshape(1, OUTp)
    shift_p = jnp.pad(shift.astype(jnp.float32), (0, OUTp - OUT)).reshape(1, OUTp)

    out = pl.pallas_call(
        _train_matmul_kernel,
        out_shape=jax.ShapeDtypeStruct((Bp, OUTp), jnp.float32),
        grid=(Bp // TB, OUTp // TO, INp // TI),
        in_specs=[
            pl.BlockSpec((TB, TI), lambda b, o, k: (b, k)),    # x
            pl.BlockSpec((TI, TO), lambda b, o, k: (k, o)),    # w_mean (bf16)
            pl.BlockSpec((TI, TO), lambda b, o, k: (k, o)),    # w_var  (bf16)
            pl.BlockSpec((1, TO), lambda b, o, k: (0, o)),     # scale
            pl.BlockSpec((1, TO), lambda b, o, k: (0, o)),     # shift
            pl.BlockSpec((TB, TO), lambda b, o, k: (b, o)),    # noise
        ],
        out_specs=pl.BlockSpec((TB, TO), lambda b, o, k: (b, o)),
        scratch_shapes=[pltpu.VMEM((TB, TO), jnp.float32),     # acc_mean (f32 accumulation)
                        pltpu.VMEM((TB, TO), jnp.float32)],    # acc_var
        compiler_params=pltpu.CompilerParams(
            dimension_semantics=("parallel", "parallel", "arbitrary"),
            vmem_limit_bytes=32 * 1024 * 1024),
    )(x_p, w_mean, w_var, scale_p, shift_p, noise_p)
    return out[:B, :OUT]


@jax.jit
def make_eval_weight(weight_logits):
    """refresh_eval_params(): hard-ternarize the logits once; caller caches the result.
    # TODO(synk): the stale_eval_params flag / backward hook is host-side training-state
    # bookkeeping with no Pallas equivalent; the caller decides when to recompute."""
    OUT, IN = weight_logits.shape[:2]
    _, TI, TO, _, INp, OUTp = _choose_tiles(1, IN, OUT)
    lmag = _pad2d(weight_logits[..., 0].T.astype(jnp.float32), INp, OUTp)
    lsgn = _pad2d(weight_logits[..., 1].T.astype(jnp.float32), INp, OUTp)
    return _prep_call(_eval_weight_prep_kernel, lmag, lsgn, 1, TI, TO)   # (INp, OUTp) bf16


@jax.jit
def ternary_eval_forward(x, eval_weight_padded, scale, shift):
    B, IN = x.shape
    OUT = scale.shape[0]
    TB, TI, TO, Bp, INp, OUTp = _choose_tiles(B, IN, OUT)
    assert eval_weight_padded.shape == (INp, OUTp)

    x_p = _pad2d(x.astype(jnp.float32), Bp, INp).astype(jnp.bfloat16)
    scale_p = jnp.pad(scale.astype(jnp.float32), (0, OUTp - OUT)).reshape(1, OUTp)
    shift_p = jnp.pad(shift.astype(jnp.float32), (0, OUTp - OUT)).reshape(1, OUTp)

    out = pl.pallas_call(
        _eval_matmul_kernel,
        out_shape=jax.ShapeDtypeStruct((Bp, OUTp), jnp.float32),
        grid=(Bp // TB, OUTp // TO, INp // TI),
        in_specs=[
            pl.BlockSpec((TB, TI), lambda b, o, k: (b, k)),    # x
            pl.BlockSpec((TI, TO), lambda b, o, k: (k, o)),    # ternary weight (bf16)
            pl.BlockSpec((1, TO), lambda b, o, k: (0, o)),     # scale
            pl.BlockSpec((1, TO), lambda b, o, k: (0, o)),     # shift
        ],
        out_specs=pl.BlockSpec((TB, TO), lambda b, o, k: (b, o)),
        scratch_shapes=[pltpu.VMEM((TB, TO), jnp.float32)],
        compiler_params=pltpu.CompilerParams(
            dimension_semantics=("parallel", "parallel", "arbitrary"),
            vmem_limit_bytes=32 * 1024 * 1024),
    )(x_p, eval_weight_padded, scale_p, shift_p)
    return out[:B, :OUT]


# ----------------------------------------------------------------------------
# Deterministic parameter construction (mirrors __init__ / reset_params)
# ----------------------------------------------------------------------------
def init_ternary_params(key, out_features, in_features, p_min=0.05, p_max=0.95):
    w0 = jax.random.normal(key, (out_features, in_features), dtype=jnp.float32)
    w0 = w0 / jnp.std(w0)
    p_0 = p_max - (p_max - p_min) * jnp.abs(w0)
    p_1 = 0.5 * (1.0 + w0 / (1.0 - p_0))
    p_0 = jnp.clip(p_0, p_min, p_max)
    p_1 = jnp.clip(p_1, p_min, p_max)
    logit = lambda p: jnp.log(p) - jnp.log1p(-p)
    weight_logits = jnp.stack([logit(p_0), logit(p_1)], axis=-1)         # (OUT, IN, 2)
    scale = jnp.ones((out_features,), dtype=jnp.float32)
    shift = jnp.full((out_features,), 0.01, dtype=jnp.float32)
    return weight_logits, scale, shift


# ----------------------------------------------------------------------------
# Pure-JAX references (f32 semantics of the PyTorch module)
# ----------------------------------------------------------------------------
def ref_train(x, weight_logits, scale, shift, noise):
    p = jax.nn.sigmoid(weight_logits)
    p_mag, p_sgn = p[..., 0], p[..., 1]
    w_mean = 2.0 * p_mag * p_sgn - p_mag
    w_var = p_mag - p_mag ** 2 * (2.0 * p_sgn - 1.0) ** 2
    out_mean = x @ w_mean.T
    out_var = (x * x) @ w_var.T
    out = out_mean + jnp.sqrt(jnp.maximum(out_var, 1e-4)) * noise
    return jax.nn.softplus(scale) * out + shift


def ref_eval(x, weight_logits, scale, shift):
    w = ref_eval_weight(weight_logits)
    return jax.nn.softplus(scale) * (x @ w.T) + shift


def ref_eval_weight(weight_logits):
    w_mag = (weight_logits[..., 0] > 0.0).astype(jnp.float32)
    w_sgn = 2.0 * (weight_logits[..., 1] > 0.0).astype(jnp.float32) - 1.0
    return w_sgn * w_mag                                                  # (OUT, IN)


def _check_case(key, B, IN, OUT):
    k_w, k_x, k_noise = jax.random.split(key, 3)
    weight_logits, scale, shift = init_ternary_params(k_w, OUT, IN)
    x = jax.random.normal(k_x, (B, IN), dtype=jnp.float32)
    noise = jax.random.normal(k_noise, (B, OUT), dtype=jnp.float32)

    out_train = jax.block_until_ready(
        ternary_train_forward(x, weight_logits, scale, shift, noise))
    eval_w_p = jax.block_until_ready(make_eval_weight(weight_logits))
    out_eval = jax.block_until_ready(
        ternary_eval_forward(x, eval_w_p, scale, shift))

    # Hard ternary weights are exact in bf16: tight check on the prep kernel.
    assert jnp.allclose(eval_w_p[:IN, :OUT].astype(jnp.float32),
                        ref_eval_weight(weight_logits).T, atol=0.0), "eval weight mismatch"

    # Forward outputs use bf16 MXU operands (f32 accumulation), so compare against the
    # f32 reference with a bf16-level tolerance.
    ref_t = ref_train(x, weight_logits, scale, shift, noise)
    ref_e = ref_eval(x, weight_logits, scale, shift)
    assert jnp.allclose(out_train, ref_t, atol=0.5, rtol=5e-2), "train forward mismatch"
    assert jnp.allclose(out_eval, ref_e, atol=0.2, rtol=2e-2), "eval forward mismatch"


if __name__ == "__main__":
    key = jax.random.PRNGKey(0)
    k1, k2 = jax.random.split(key)

    # Tile-aligned case: real (2, 2, 2) grid, lane-dense output, bf16 MXU path.
    _check_case(k1, B=256, IN=512, OUT=256)
    # Small unaligned case (exercises the zero-padding path, matches module's "any dims").
    _check_case(k2, B=8, IN=40, OUT=24)

    # TODO(synk): the backward hook / stale_eval_params bookkeeping is host-side training-state
    # management with no Pallas equivalent; only the forward math is implemented.
    print("KERNEL_OK")
</pallas_src>

<mosaic_0001>
module attributes {stable_mosaic.version = 11 : i64} {
  func.func @_train_weight_prep_kernel(%arg0: i32, %arg1: i32, %arg2: memref<256x128xf32, #tpu.memory_space<vmem>>, %arg3: memref<256x128xf32, #tpu.memory_space<vmem>>, %arg4: memref<256x128xbf16, #tpu.memory_space<vmem>>, %arg5: memref<256x128xbf16, #tpu.memory_space<vmem>>) attributes {dimension_semantics = [#tpu.dimension_semantics<parallel>, #tpu.dimension_semantics<parallel>], iteration_bounds = array<i64: 2, 2>, scalar_prefetch = 0 : i64, scratch_operands = 0 : i64, tpu.core_type = #tpu.core_type<tc>, window_params = [{transform_indices = @transform_0, window_bounds = array<i64: 256, 128>}, {transform_indices = @transform_1, window_bounds = array<i64: 256, 128>}, {transform_indices = @transform_2, window_bounds = array<i64: 256, 128>}, {transform_indices = @transform_3, window_bounds = array<i64: 256, 128>}]} {
    %c0 = arith.constant 0 : index
    %c0_0 = arith.constant 0 : index
    %0 = vector.load %arg2[%c0, %c0_0] : memref<256x128xf32, #tpu.memory_space<vmem>>, vector<256x128xf32>
    %1 = arith.negf %0 : vector<256x128xf32>
    %2 = math.exp %1 : vector<256x128xf32>
    %cst = arith.constant 1.000000e+00 : f32
    %3 = vector.broadcast %cst : f32 to vector<256x128xf32>
    %4 = arith.addf %3, %2 : vector<256x128xf32>
    %5 = arith.divf %3, %4 : vector<256x128xf32>
    %c0_1 = arith.constant 0 : index
    %c0_2 = arith.constant 0 : index
    %6 = vector.load %arg3[%c0_1, %c0_2] : memref<256x128xf32, #tpu.memory_space<vmem>>, vector<256x128xf32>
    %7 = arith.negf %6 : vector<256x128xf32>
    %8 = math.exp %7 : vector<256x128xf32>
    %cst_3 = arith.constant 1.000000e+00 : f32
    %9 = vector.broadcast %cst_3 : f32 to vector<256x128xf32>
    %10 = arith.addf %9, %8 : vector<256x128xf32>
    %11 = arith.divf %9, %10 : vector<256x128xf32>
    %cst_4 = arith.constant 2.000000e+00 : f32
    %12 = vector.broadcast %cst_4 : f32 to vector<256x128xf32>
    %13 = arith.mulf %12, %11 : vector<256x128xf32>
    %cst_5 = arith.constant 1.000000e+00 : f32
    %14 = vector.broadcast %cst_5 : f32 to vector<256x128xf32>
    %15 = arith.subf %13, %14 : vector<256x128xf32>
    %16 = arith.mulf %5, %15 : vector<256x128xf32>
    %17 = arith.mulf %5, %5 : vector<256x128xf32>
    %18 = arith.mulf %15, %15 : vector<256x128xf32>
    %19 = arith.mulf %17, %18 : vector<256x128xf32>
    %20 = arith.subf %5, %19 : vector<256x128xf32>
    %21 = arith.truncf %16 : vector<256x128xf32> to vector<256x128xbf16>
    %c0_6 = arith.constant 0 : index
    %c0_7 = arith.constant 0 : index
    %22 = vector.load %arg4[%c0_6, %c0_7] : memref<256x128xbf16, #tpu.memory_space<vmem>>, vector<256x128xbf16>
    tpu.vector_store %arg4[%c0_6, %c0_7], %21 {strides = array<i32>} : memref<256x128xbf16, #tpu.memory_space<vmem>>, vector<256x128xbf16>,
    %23 = arith.truncf %20 : vector<256x128xf32> to vector<256x128xbf16>
    %c0_8 = arith.constant 0 : index
    %c0_9 = arith.constant 0 : index
    %24 = vector.load %arg5[%c0_8, %c0_9] : memref<256x128xbf16, #tpu.memory_space<vmem>>, vector<256x128xbf16>
    tpu.vector_store %arg5[%c0_8, %c0_9], %23 {strides = array<i32>} : memref<256x128xbf16, #tpu.memory_space<vmem>>, vector<256x128xbf16>,
    return
  }
  func.func @transform_0(%arg0: i32, %arg1: i32) -> (i32, i32) {
    %c0_i32 = arith.constant 0 : i32
    return %arg0, %arg1 : i32, i32
  }
  func.func @transform_1(%arg0: i32, %arg1: i32) -> (i32, i32) {
    %c0_i32 = arith.constant 0 : i32
    return %arg0, %arg1 : i32, i32
  }
  func.func @transform_2(%arg0: i32, %arg1: i32) -> (i32, i32) {
    %c0_i32 = arith.constant 0 : i32
    return %arg0, %arg1 : i32, i32
  }
  func.func @transform_3(%arg0: i32, %arg1: i32) -> (i32, i32) {
    %c0_i32 = arith.constant 0 : i32
    return %arg0, %arg1 : i32, i32
  }
}

module attributes {stable_mosaic.version = 11 : i64} {
  func.func @_train_matmul_kernel(%arg0: i32, %arg1: i32, %arg2: i32, %arg3: memref<128x256xbf16, #tpu.memory_space<vmem>>, %arg4: memref<256x128xbf16, #tpu.memory_space<vmem>>, %arg5: memref<256x128xbf16, #tpu.memory_space<vmem>>, %arg6: memref<1x128xf32, #tpu.memory_space<vmem>>, %arg7: memref<1x128xf32, #tpu.memory_space<vmem>>, %arg8: memref<128x128xf32, #tpu.memory_space<vmem>>, %arg9: memref<128x128xf32, #tpu.memory_space<vmem>>, %arg10: memref<128x128xf32, #tpu.memory_space<vmem>>, %arg11: memref<128x128xf32, #tpu.memory_space<vmem>>) attributes {dimension_semantics = [#tpu.dimension_semantics<parallel>, #tpu.dimension_semantics<parallel>, #tpu.dimension_semantics<arbitrary>], iteration_bounds = array<i64: 2, 2, 2>, scalar_prefetch = 0 : i64, scratch_operands = 2 : i64, tpu.core_type = #tpu.core_type<tc>, window_params = [{transform_indices = @transform_0, window_bounds = array<i64: 128, 256>}, {transform_indices = @transform_1, window_bounds = array<i64: 256, 128>}, {transform_indices = @transform_2, window_bounds = array<i64: 256, 128>}, {transform_indices = @transform_3, window_bounds = array<i64: 1, 128>}, {transform_indices = @transform_4, window_bounds = array<i64: 1, 128>}, {transform_indices = @transform_5, window_bounds = array<i64: 128, 128>}, {transform_indices = @transform_6, window_bounds = array<i64: 128, 128>}]} {
    %c0_i32 = arith.constant 0 : i32
    %0 = arith.cmpi eq, %arg2, %c0_i32 : i32
    %1 = arith.extui %0 : i1 to i32
    %c0_i32_0 = arith.constant 0 : i32
    %2 = arith.cmpi ne, %1, %c0_i32_0 : i32
    scf.if %2 {
      %cst_16 = arith.constant 0.000000e+00 : f32
      %18 = vector.broadcast %cst_16 : f32 to vector<128x128xf32>
      %c0_17 = arith.constant 0 : index
      %c0_18 = arith.constant 0 : index
      %19 = vector.load %arg10[%c0_17, %c0_18] : memref<128x128xf32, #tpu.memory_space<vmem>>, vector<128x128xf32>
      tpu.vector_store %arg10[%c0_17, %c0_18], %18 {strides = array<i32>} : memref<128x128xf32, #tpu.memory_space<vmem>>, vector<128x128xf32>,
      %cst_19 = arith.constant 0.000000e+00 : f32
      %20 = vector.broadcast %cst_19 : f32 to vector<128x128xf32>
      %c0_20 = arith.constant 0 : index
      %c0_21 = arith.constant 0 : index
      %21 = vector.load %arg11[%c0_20, %c0_21] : memref<128x128xf32, #tpu.memory_space<vmem>>, vector<128x128xf32>
      tpu.vector_store %arg11[%c0_20, %c0_21], %20 {strides = array<i32>} : memref<128x128xf32, #tpu.memory_space<vmem>>, vector<128x128xf32>,
    } else {
    }
    %c0 = arith.constant 0 : index
    %c0_1 = arith.constant 0 : index
    %3 = vector.load %arg3[%c0, %c0_1] : memref<128x256xbf16, #tpu.memory_space<vmem>>, vector<128x256xbf16>
    %c0_2 = arith.constant 0 : index
    %c0_3 = arith.constant 0 : index
    %4 = vector.load %arg10[%c0_2, %c0_3] : memref<128x128xf32, #tpu.memory_space<vmem>>, vector<128x128xf32>
    %c0_4 = arith.constant 0 : index
    %c0_5 = arith.constant 0 : index
    %5 = vector.load %arg4[%c0_4, %c0_5] : memref<256x128xbf16, #tpu.memory_space<vmem>>, vector<256x128xbf16>
    %cst = arith.constant dense<0.000000e+00> : vector<128x128xf32>
    %6 = tpu.matmul %3, %5, %cst {dimension_numbers = #tpu.dot_dimension_numbers<[1], [0], [0], [1], [0, 0, 1, 1], [], []>} : vector<128x256xbf16>, vector<256x128xbf16>, vector<128x128xf32> -> vector<128x128xf32>
    %7 = arith.addf %4, %6 : vector<128x128xf32>
    %c0_6 = arith.constant 0 : index
    %c0_7 = arith.constant 0 : index
    %8 = vector.load %arg10[%c0_6, %c0_7] : memref<128x128xf32, #tpu.memory_space<vmem>>, vector<128x128xf32>
    tpu.vector_store %arg10[%c0_6, %c0_7], %7 {strides = array<i32>} : memref<128x128xf32, #tpu.memory_space<vmem>>, vector<128x128xf32>,
    %c0_8 = arith.constant 0 : index
    %c0_9 = arith.constant 0 : index
    %9 = vector.load %arg11[%c0_8, %c0_9] : memref<128x128xf32, #tpu.memory_space<vmem>>, vector<128x128xf32>
    %10 = arith.mulf %3, %3 : vector<128x256xbf16>
    %c0_10 = arith.constant 0 : index
    %c0_11 = arith.constant 0 : index
    %11 = vector.load %arg5[%c0_10, %c0_11] : memref<256x128xbf16, #tpu.memory_space<vmem>>, vector<256x128xbf16>
    %cst_12 = arith.constant dense<0.000000e+00> : vector<128x128xf32>
    %12 = tpu.matmul %10, %11, %cst_12 {dimension_numbers = #tpu.dot_dimension_numbers<[1], [0], [0], [1], [0, 0, 1, 1], [], []>} : vector<128x256xbf16>, vector<256x128xbf16>, vector<128x128xf32> -> vector<128x128xf32>
    %13 = arith.addf %9, %12 : vector<128x128xf32>
    %c0_13 = arith.constant 0 : index
    %c0_14 = arith.constant 0 : index
    %14 = vector.load %arg11[%c0_13, %c0_14] : memref<128x128xf32, #tpu.memory_space<vmem>>, vector<128x128xf32>
    tpu.vector_store %arg11[%c0_13, %c0_14], %13 {strides = array<i32>} : memref<128x128xf32, #tpu.memory_space<vmem>>, vector<128x128xf32>,
    %c1_i32 = arith.constant 1 : i32
    %15 = arith.cmpi eq, %arg2, %c1_i32 : i32
    %16 = arith.extui %15 : i1 to i32
    %c0_i32_15 = arith.constant 0 : i32
    %17 = arith.cmpi ne, %16, %c0_i32_15 : i32
    scf.if %17 {
      %c0_16 = arith.constant 0 : index
      %c0_17 = arith.constant 0 : index
      %18 = vector.load %arg11[%c0_16, %c0_17] : memref<128x128xf32, #tpu.memory_space<vmem>>, vector<128x128xf32>
      %cst_18 = arith.constant 9.99999974E-5 : f32
      %19 = vector.broadcast %cst_18 : f32 to vector<128x128xf32>
      %20 = arith.maximumf %18, %19 : vector<128x128xf32>
      %21 = math.sqrt %20 : vector<128x128xf32>
      %c0_19 = arith.constant 0 : index
      %c0_20 = arith.constant 0 : index
      %22 = vector.load %arg10[%c0_19, %c0_20] : memref<128x128xf32, #tpu.memory_space<vmem>>, vector<128x128xf32>
      %c0_21 = arith.constant 0 : index
      %c0_22 = arith.constant 0 : index
      %23 = vector.load %arg8[%c0_21, %c0_22] : memref<128x128xf32, #tpu.memory_space<vmem>>, vector<128x128xf32>
      %24 = arith.mulf %21, %23 : vector<128x128xf32>
      %25 = arith.addf %22, %24 : vector<128x128xf32>
      %c0_23 = arith.constant 0 : index
      %c0_24 = arith.constant 0 : index
      %26 = vector.load %arg6[%c0_23, %c0_24] : memref<1x128xf32, #tpu.memory_space<vmem>>, vector<1x128xf32>
      %cst_25 = arith.constant 0.000000e+00 : f32
      %27 = vector.broadcast %cst_25 : f32 to vector<1x128xf32>
      %28 = arith.maximumf %26, %27 : vector<1x128xf32>
      %29 = vector.broadcast %cst_25 : f32 to vector<1x128xf32>
      %30 = arith.subf %26, %29 : vector<1x128xf32>
      %31 = arith.cmpf one, %30, %30 : vector<1x128xf32>
      %32 = vector.broadcast %cst_25 : f32 to vector<1x128xf32>
      %33 = arith.addf %26, %32 : vector<1x128xf32>
      %34 = math.absf %30 : vector<1x128xf32>
      %cst_26 = arith.constant 0.000000e+00 : f32
      %35 = vector.broadcast %cst_26 : f32 to vector<1x128xf32>
      %36 = arith.subf %35, %34 : vector<1x128xf32>
      %37 = math.exp %36 : vector<1x128xf32>
      %38 = math.log1p %37 : vector<1x128xf32>
      %39 = arith.addf %28, %38 : vector<1x128xf32>
      %40 = arith.select %31, %33, %39 : vector<1x128xi1>, vector<1x128xf32>
      %41 = vector.broadcast %40 : vector<1x128xf32> to vector<128x128xf32>
      %42 = arith.mulf %41, %25 : vector<128x128xf32>
      %c0_27 = arith.constant 0 : index
      %c0_28 = arith.constant 0 : index
      %43 = vector.load %arg7[%c0_27, %c0_28] : memref<1x128xf32, #tpu.memory_space<vmem>>, vector<1x128xf32>
      %44 = vector.broadcast %43 : vector<1x128xf32> to vector<128x128xf32>
      %45 = arith.addf %42, %44 : vector<128x128xf32>
      %c0_29 = arith.constant 0 : index
      %c0_30 = arith.constant 0 : index
      %46 = vector.load %arg9[%c0_29, %c0_30] : memref<128x128xf32, #tpu.memory_space<vmem>>, vector<128x128xf32>
      tpu.vector_store %arg9[%c0_29, %c0_30], %45 {strides = array<i32>} : memref<128x128xf32, #tpu.memory_space<vmem>>, vector<128x128xf32>,
    } else {
    }
    return
  }
  func.func @transform_0(%arg0: i32, %arg1: i32, %arg2: i32) -> (i32, i32) {
    %c0_i32 = arith.constant 0 : i32
    return %arg0, %arg2 : i32, i32
  }
  func.func @transform_1(%arg0: i32, %arg1: i32, %arg2: i32) -> (i32, i32) {
    %c0_i32 = arith.constant 0 : i32
    return %arg2, %arg1 : i32, i32
  }
  func.func @transform_2(%arg0: i32, %arg1: i32, %arg2: i32) -> (i32, i32) {
    %c0_i32 = arith.constant 0 : i32
    return %arg2, %arg1 : i32, i32
  }
  func.func @transform_3(%arg0: i32, %arg1: i32, %arg2: i32) -> (i32, i32) {
    %c0_i32 = arith.constant 0 : i32
    %c0_i32_0 = arith.constant 0 : i32
    return %c0_i32, %arg1 : i32, i32
  }
  func.func @transform_4(%arg0: i32, %arg1: i32, %arg2: i32) -> (i32, i32) {
    %c0_i32 = arith.constant 0 : i32
    %c0_i32_0 = arith.constant 0 : i32
    return %c0_i32, %arg1 : i32, i32
  }
  func.func @transform_5(%arg0: i32, %arg1: i32, %arg2: i32) -> (i32, i32) {
    %c0_i32 = arith.constant 0 : i32
    return %arg0, %arg1 : i32, i32
  }
  func.func @transform_6(%arg0: i32, %arg1: i32, %arg2: i32) -> (i32, i32) {
    %c0_i32 = arith.constant 0 : i32
    return %arg0, %arg1 : i32, i32
  }
}

</mosaic_0001>

<llo_original>
// kernel: ternary_train_forward.2
$region0: #{ternary_train_forward.2}
  #allocation0 [shape = 'u32[]', space=smem, size = 0x4, offset = 0x4, fixed_abs, tag = 'smem constant byte address 0x4 - core index']
  #allocation1 [shape = 'u32[144,128]{1,0:T(1,128)}', space=vmem, size = 0x12000, scoped, tag = 'internal scratch']
  %s0 = inlined_call_operand.vmem [shape: f32[512,256], index: 0, kind: input, shape index: {}]
  %s1 = inlined_call_operand.vmem [shape: f32[512,256], index: 1, kind: input, shape index: {}]
  %s2 = inlined_call_operand.vmem [shape: bf16[512,256], index: 2, kind: output, shape index: {0}]
  %s3 = inlined_call_operand.vmem [shape: bf16[512,256], index: 3, kind: output, shape index: {1}]
  %4 = xla_tuple %s2, %s3
  %s5 = sld [smem:[#allocation0]]
  $region199: #{ternary_train_forward.2} parent=0
    _
  %s7 = ssub.s32 1, %s5
  %s8 = scalar_select 0, %s7, %s5
  $region1: #{ternary_train_forward.2} parent=0
    #allocation2 [shape = 'u8[262144]{0}', space=vmem, size = 0x40000, scoped, tag = 'input window, operand 0']
    #allocation3 [shape = 'u8[262144]{0}', space=vmem, size = 0x40000, scoped, tag = 'input window, operand 1']
    #allocation4 [shape = 'u8[131072]{0}', space=vmem, size = 0x20000, scoped, tag = 'output window, operand 0']
    #allocation5 [shape = 'u8[131072]{0}', space=vmem, size = 0x20000, scoped, tag = 'output window, operand 1']
    loop: start=0, step=1, limit=6
    $region2: #{ternary_train_forward.2} parent=1 // loop_pre_header
      _
    $region3: #{ternary_train_forward.2} parent=1 // loop_header
      %s10 = sphi 0, %s14
      %p11 = scmp.ge.s32.totalorder %s10, 6
      %s17 = sphi 0, %s29
      %s18 = sphi 0, %s25
      %s19 = sphi 0, %s17
      %s20 = sphi 0, %s18
      %s21 = sphi 0, %s19
      %s22 = sphi 0, %s20
      %s34 = sphi 0, %s36
      %s37 = sphi 0, %s34
      %s38 = sphi 0, %s37
      %s54 = sphi 0, %s38
      %s62 = sphi 0, %s64
      %s65 = sphi 0, %s62
      %s66 = sphi 0, %s65
      %s82 = sphi 0, %s66
      %s90 = sphi 0, %s92
      %s93 = sphi 0, %s90
      %s94 = sphi 0, %s93
      %s110 = sphi 0, %s94
      %s118 = sphi 0, %s120
      %s121 = sphi 0, %s118
      %s122 = sphi 0, %s121
      %s138 = sphi 0, %s122
    $region4: #{ternary_train_forward.2} parent=1 // loop_header_branch
      %13 = sbr.rel (%p11) target = $region8
    $region5: #{ternary_train_forward.2} parent=1 // loop_body
      %s15 = ssub.s32 %s10, 1
      %s16 = ssub.s32 %s10, 2
      %s23 = sadd.s32 1, %s18
      %p24 = scmp.ge.s32.totalorder %s23, 2
      %s25 = scalar_select %p24, 0, %s23
      %s26 = sadd.s32 1, %s17
      %s27 = scalar_select %p24, %s26, %s17
      %p28 = scmp.ge.s32.totalorder %s27, 2
      %s29 = scalar_select %p28, 0, %s27
      %s30 = ssub.s32 %s17, %s29
      %s31 = ssub.s32 %s18, %s25
      %s32 = sor.u32 %s30, %s31
      %p33 = scmp.eq.s32.totalorder %s32, 0
      %s35 = sadd.s32 %s34, 1
      %s36 = scalar_select %p33, %s34, %s35
      %p39 = pneg %p33
      %p40 = scmp.eq.s32.totalorder %s10, 3
      %p41 = por %p39, %p40
      %p42 = scmp.ne.s32.totalorder %s34, %s37
      %p43 = scmp.eq.s32.totalorder %s10, 0
      %p44 = por %p42, %p43
      %p45 = scmp.ne.s32.totalorder %s34, %s37
      %p46 = scmp.eq.s32.totalorder %s15, 3
      %p47 = por %p45, %p46
      %p48 = scmp.ne.s32.totalorder %s37, %s38
      %p49 = scmp.eq.s32.totalorder %s15, 0
      %p50 = por %p48, %p49
      %p51 = scmp.ne.s32.totalorder %s37, %s38
      %p52 = scmp.eq.s32.totalorder %s16, 3
      %p53 = por %p51, %p52
      %p55 = scmp.ne.s32.totalorder %s38, %s54
      %p56 = scmp.eq.s32.totalorder %s16, 0
      %p57 = por %p55, %p56
      %s58 = ssub.s32 %s17, %s29
      %s59 = ssub.s32 %s18, %s25
      %s60 = sor.u32 %s58, %s59
      %p61 = scmp.eq.s32.totalorder %s60, 0
      %s63 = sadd.s32 %s62, 1
      %s64 = scalar_select %p61, %s62, %s63
      %p67 = pneg %p61
      %p68 = scmp.eq.s32.totalorder %s10, 3
      %p69 = por %p67, %p68
      %p70 = scmp.ne.s32.totalorder %s62, %s65
      %p71 = scmp.eq.s32.totalorder %s10, 0
      %p72 = por %p70, %p71
      %p73 = scmp.ne.s32.totalorder %s62, %s65
      %p74 = scmp.eq.s32.totalorder %s15, 3
      %p75 = por %p73, %p74
      %p76 = scmp.ne.s32.totalorder %s65, %s66
      %p77 = scmp.eq.s32.totalorder %s15, 0
      %p78 = por %p76, %p77
      %p79 = scmp.ne.s32.totalorder %s65, %s66
      %p80 = scmp.eq.s32.totalorder %s16, 3
      %p81 = por %p79, %p80
      %p83 = scmp.ne.s32.totalorder %s66, %s82
      %p84 = scmp.eq.s32.totalorder %s16, 0
      %p85 = por %p83, %p84
      %s86 = ssub.s32 %s17, %s29
      %s87 = ssub.s32 %s18, %s25
      %s88 = sor.u32 %s86, %s87
      %p89 = scmp.eq.s32.totalorder %s88, 0
      %s91 = sadd.s32 %s90, 1
      %s92 = scalar_select %p89, %s90, %s91
      %p95 = pneg %p89
      %p96 = scmp.eq.s32.totalorder %s10, 3
      %p97 = por %p95, %p96
      %p98 = scmp.ne.s32.totalorder %s90, %s93
      %p99 = scmp.eq.s32.totalorder %s10, 0
      %p100 = por %p98, %p99
      %p101 = scmp.ne.s32.totalorder %s90, %s93
      %p102 = scmp.eq.s32.totalorder %s15, 3
      %p103 = por %p101, %p102
      %p104 = scmp.ne.s32.totalorder %s93, %s94
      %p105 = scmp.eq.s32.totalorder %s15, 0
      %p106 = por %p104, %p105
      %p107 = scmp.ne.s32.totalorder %s93, %s94
      %p108 = scmp.eq.s32.totalorder %s16, 3
      %p109 = por %p107, %p108
      %p111 = scmp.ne.s32.totalorder %s94, %s110
      %p112 = scmp.eq.s32.totalorder %s16, 0
      %p113 = por %p111, %p112
      %s114 = ssub.s32 %s17, %s29
      %s115 = ssub.s32 %s18, %s25
      %s116 = sor.u32 %s114, %s115
      %p117 = scmp.eq.s32.totalorder %s116, 0
      %s119 = sadd.s32 %s118, 1
      %s120 = scalar_select %p117, %s118, %s119
      %p123 = pneg %p117
      %p124 = scmp.eq.s32.totalorder %s10, 3
      %p125 = por %p123, %p124
      %p126 = scmp.ne.s32.totalorder %s118, %s121
      %p127 = scmp.eq.s32.totalorder %s10, 0
      %p128 = por %p126, %p127
      %p129 = scmp.ne.s32.totalorder %s118, %s121
      %p130 = scmp.eq.s32.totalorder %s15, 3
      %p131 = por %p129, %p130
      %p132 = scmp.ne.s32.totalorder %s121, %s122
      %p133 = scmp.eq.s32.totalorder %s15, 0
      %p134 = por %p132, %p133
      %p135 = scmp.ne.s32.totalorder %s121, %s122
      %p136 = scmp.eq.s32.totalorder %s16, 3
      %p137 = por %p135, %p136
      %p139 = scmp.ne.s32.totalorder %s122, %s138
      %p140 = scmp.eq.s32.totalorder %s16, 0
      %p141 = por %p139, %p140
      %p142 = scmp.le.s32.totalorder 1, %s10
      %p143 = scmp.lt.s32.totalorder %s10, 5
      %p144 = pnand %p142, %p143
      %p145 = pneg %p144
      // Predicated region
      $region9: #{ternary_train_forward.2} parent=5 // pred_check
        _
      $region10: #{ternary_train_forward.2} parent=5 // pred_check_branch
        %147 = sbr.rel (%p144) target = $region12
      $region11: #{ternary_train_forward.2} parent=5 // pred_region
        %s148 = ssub.s32 %s10, 1
      $region12: #{ternary_train_forward.2} parent=5 // pred_fallthru
        _
      %p149 = scmp.lt.s32.totalorder %s10, 4
      // Predicated region
      $region13: #{ternary_train_forward.2} parent=5 // pred_check
        %p150 = pneg %p149
      $region14: #{ternary_train_forward.2} parent=5 // pred_check_branch
        %152 = sbr.rel (%p150) target = $region16
      $region15: #{ternary_train_forward.2} parent=5 // pred_region
        // Predicated region
        $region17: #{ternary_train_forward.2} parent=15 // pred_check
          %p153 = pneg %p44
        $region18: #{ternary_train_forward.2} parent=15 // pred_check_branch
          %155 = sbr.rel (%p153) target = $region20
        $region19: #{ternary_train_forward.2} parent=15 // pred_region
          %s156 = sand.u32 %s34, 1
          %s157 = sand.u32 %s34, 1
          %s158 = smul.addr %s157, 256
          %s159 = scalar_lea.vmem [#allocation2], %s158
          %s160 = smul.u32 32, %s17
          %s161 = smul.addr %s160, 2
          %s162 = sadd.s32 %s18, %s161
          %s163 = smul.addr %s162, 8
          %s164 = scalar_lea.vmem %s0, %s163
          // Predicated region
          $region21: #{ternary_train_forward.2} parent=19 // pred_check
            _
          $region22: #{ternary_train_forward.2} parent=19 // pred_check_branch
            %166 = sbr.rel (0) target = $region24
          $region23: #{ternary_train_forward.2} parent=19 // pred_region
            // Predicated region
            $region25: #{ternary_train_forward.2} parent=23 // pred_check
              _
            $region26: #{ternary_train_forward.2} parent=23 // pred_check_branch
              %168 = sbr.rel (0) target = $region28
            $region27: #{ternary_train_forward.2} parent=23 // pred_region
              // Predicated region
              $region40: #{ternary_train_forward.2} parent=27 // pred_check
                _
              $region41: #{ternary_train_forward.2} parent=27 // pred_check_branch
                %245 = sbr.rel (0) target = $region43
              $region42: #{ternary_train_forward.2} parent=27 // pred_region
                loop: start=0, step=1, limit=1
                $region44: #{ternary_train_forward.2} parent=42 // loop_pre_header
                  _
                $region45: #{ternary_train_forward.2} parent=42 // loop_header
                  %s247 = sphi 0, %s251
                  %p248 = scmp.ge.s32.totalorder %s247, 1
                  %s252 = sphi %s164, %s164
                  %s253 = sphi %s159, %s159
                $region46: #{ternary_train_forward.2} parent=42 // loop_header_branch
                  %250 = sbr.rel (%p248) target = $region50
                $region47: #{ternary_train_forward.2} parent=42 // loop_body
                  %v254 = vld [vmem:[%s252] sm:$0xff]
                  %255 = vst [vmem:[%s253] sm:$0xff] %v254
                  %v256 = vld [vmem:[%s252 + $0x10] sm:$0xff]
                  %257 = vst [vmem:[%s253 + $0x8] sm:$0xff] %v256
                  %v258 = vld [vmem:[%s252 + $0x20] sm:$0xff]
                  %259 = vst [vmem:[%s253 + $0x10] sm:$0xff] %v258
                  %v260 = vld [vmem:[%s252 + $0x30] sm:$0xff]
                  %261 = vst [vmem:[%s253 + $0x18] sm:$0xff] %v260
                  %v262 = vld [vmem:[%s252 + $0x40] sm:$0xff]
                  %263 = vst [vmem:[%s253 + $0x20] sm:$0xff] %v262
                  %v264 = vld [vmem:[%s252 + $0x50] sm:$0xff]
                  %265 = vst [vmem:[%s253 + $0x28] sm:$0xff] %v264
                  %v266 = vld [vmem:[%s252 + $0x60] sm:$0xff]
                  %267 = vst [vmem:[%s253 + $0x30] sm:$0xff] %v266
                  %v268 = vld [vmem:[%s252 + $0x70] sm:$0xff]
                  %269 = vst [vmem:[%s253 + $0x38] sm:$0xff] %v268
                  %v270 = vld [vmem:[%s252 + $0x80] sm:$0xff]
                  %271 = vst [vmem:[%s253 + $0x40] sm:$0xff] %v270
                  %v272 = vld [vmem:[%s252 + $0x90] sm:$0xff]
                  %273 = vst [vmem:[%s253 + $0x48] sm:$0xff] %v272
                  %v274 = vld [vmem:[%s252 + $0xa0] sm:$0xff]
                  %275 = vst [vmem:[%s253 + $0x50] sm:$0xff] %v274
                  %v276 = vld [vmem:[%s252 + $0xb0] sm:$0xff]
                  %277 = vst [vmem:[%s253 + $0x58] sm:$0xff] %v276
                  %v278 = vld [vmem:[%s252 + $0xc0] sm:$0xff]
                  %279 = vst [vmem:[%s253 + $0x60] sm:$0xff] %v278
                  %v280 = vld [vmem:[%s252 + $0xd0] sm:$0xff]
                  %281 = vst [vmem:[%s253 + $0x68] sm:$0xff] %v280
                  %v282 = vld [vmem:[%s252 + $0xe0] sm:$0xff]
                  %283 = vst [vmem:[%s253 + $0x70] sm:$0xff] %v282
                  %v284 = vld [vmem:[%s252 + $0xf0] sm:$0xff]
                  %285 = vst [vmem:[%s253 + $0x78] sm:$0xff] %v284
                  %v286 = vld [vmem:[%s252 + $0x100] sm:$0xff]
                  %287 = vst [vmem:[%s253 + $0x80] sm:$0xff] %v286
                  %v288 = vld [vmem:[%s252 + $0x110] sm:$0xff]
                  %289 = vst [vmem:[%s253 + $0x88] sm:$0xff] %v288
                  %v290 = vld [vmem:[%s252 + $0x120] sm:$0xff]
                  %291 = vst [vmem:[%s253 + $0x90] sm:$0xff] %v290
                  %v292 = vld [vmem:[%s252 + $0x130] sm:$0xff]
                  %293 = vst [vmem:[%s253 + $0x98] sm:$0xff] %v292
                  %v294 = vld [vmem:[%s252 + $0x140] sm:$0xff]
                  %295 = vst [vmem:[%s253 + $0xa0] sm:$0xff] %v294
                  %v296 = vld [vmem:[%s252 + $0x150] sm:$0xff]
                  %297 = vst [vmem:[%s253 + $0xa8] sm:$0xff] %v296
                  %v298 = vld [vmem:[%s252 + $0x160] sm:$0xff]
                  %299 = vst [vmem:[%s253 + $0xb0] sm:$0xff] %v298
                  %v300 = vld [vmem:[%s252 + $0x170] sm:$0xff]
                  %301 = vst [vmem:[%s253 + $0xb8] sm:$0xff] %v300
                  %v302 = vld [vmem:[%s252 + $0x180] sm:$0xff]
                  %303 = vst [vmem:[%s253 + $0xc0] sm:$0xff] %v302
                  %v304 = vld [vmem:[%s252 + $0x190] sm:$0xff]
                  %305 = vst [vmem:[%s253 + $0xc8] sm:$0xff] %v304
                  %v306 = vld [vmem:[%s252 + $0x1a0] sm:$0xff]
                  %307 = vst [vmem:[%s253 + $0xd0] sm:$0xff] %v306
                  %v308 = vld [vmem:[%s252 + $0x1b0] sm:$0xff]
                  %309 = vst [vmem:[%s253 + $0xd8] sm:$0xff] %v308
                  %v310 = vld [vmem:[%s252 + $0x1c0] sm:$0xff]
                  %311 = vst [vmem:[%s253 + $0xe0] sm:$0xff] %v310
                  %v312 = vld [vmem:[%s252 + $0x1d0] sm:$0xff]
                  %313 = vst [vmem:[%s253 + $0xe8] sm:$0xff] %v312
                  %v314 = vld [vmem:[%s252 + $0x1e0] sm:$0xff]
                  %315 = vst [vmem:[%s253 + $0xf0] sm:$0xff] %v314
                  %v316 = vld [vmem:[%s252 + $0x1f0] sm:$0xff]
                  %317 = vst [vmem:[%s253 + $0xf8] sm:$0xff] %v316
                $region48: #{ternary_train_forward.2} parent=42 // loop_footer
                  %s251 = sadd.s32 1, %s247
                $region49: #{ternary_train_forward.2} parent=42 // loop_footer_branch
                  %246 = sbr.rel target = $region45
                $region50: #{ternary_train_forward.2} parent=42 // loop_exit
                  _
              $region43: #{ternary_train_forward.2} parent=27 // pred_fallthru
                _
              // Predicated region
              $region51: #{ternary_train_forward.2} parent=27 // pred_check
                _
              $region52: #{ternary_train_forward.2} parent=27 // pred_check_branch
                %319 = sbr.rel target = $region54
              $region53: #{ternary_train_forward.2} parent=27 // pred_region
                _
              $region54: #{ternary_train_forward.2} parent=27 // pred_fallthru
                _
            $region28: #{ternary_train_forward.2} parent=23 // pred_fallthru
              _
            // Predicated region
            $region29: #{ternary_train_forward.2} parent=23 // pred_check
              _
            $region30: #{ternary_train_forward.2} parent=23 // pred_check_branch
              %170 = sbr.rel target = $region32
            $region31: #{ternary_train_forward.2} parent=23 // pred_region
              loop: start=0, step=1, limit=1
              $region33: #{ternary_train_forward.2} parent=31 // loop_pre_header
                _
              $region34: #{ternary_train_forward.2} parent=31 // loop_header
                %s173 = sphi 0, %s177
                %p174 = scmp.ge.s32.totalorder %s173, 1
                %s178 = sphi %s164, %s164
                %s179 = sphi %s159, %s159
              $region35: #{ternary_train_forward.2} parent=31 // loop_header_branch
                %176 = sbr.rel (%p174) target = $region39
              $region36: #{ternary_train_forward.2} parent=31 // loop_body
                %v180 = vld [vmem:[%s178] sm:$0xff]
                %181 = vst [vmem:[%s179] sm:$0xff] %v180
                %v182 = vld [vmem:[%s178 + $0x10] sm:$0xff]
                %183 = vst [vmem:[%s179 + $0x8] sm:$0xff] %v182
                %v184 = vld [vmem:[%s178 + $0x20] sm:$0xff]
                %185 = vst [vmem:[%s179 + $0x10] sm:$0xff] %v184
                %v186 = vld [vmem:[%s178 + $0x30] sm:$0xff]
                %187 = vst [vmem:[%s179 + $0x18] sm:$0xff] %v186
                %v188 = vld [vmem:[%s178 + $0x40] sm:$0xff]
                %189 = vst [vmem:[%s179 + $0x20] sm:$0xff] %v188
                %v190 = vld [vmem:[%s178 + $0x50] sm:$0xff]
                %191 = vst [vmem:[%s179 + $0x28] sm:$0xff] %v190
                %v192 = vld [vmem:[%s178 + $0x60] sm:$0xff]
                %193 = vst [vmem:[%s179 + $0x30] sm:$0xff] %v192
                %v194 = vld [vmem:[%s178 + $0x70] sm:$0xff]
                %195 = vst [vmem:[%s179 + $0x38] sm:$0xff] %v194
                %v196 = vld [vmem:[%s178 + $0x80] sm:$0xff]
                %197 = vst [vmem:[%s179 + $0x40] sm:$0xff] %v196
                %v198 = vld [vmem:[%s178 + $0x90] sm:$0xff]
                %199 = vst [vmem:[%s179 + $0x48] sm:$0xff] %v198
                %v200 = vld [vmem:[%s178 + $0xa0] sm:$0xff]
                %201 = vst [vmem:[%s179 + $0x50] sm:$0xff] %v200
                %v202 = vld [vmem:[%s178 + $0xb0] sm:$0xff]
                %203 = vst [vmem:[%s179 + $0x58] sm:$0xff] %v202
                %v204 = vld [vmem:[%s178 + $0xc0] sm:$0xff]
                %205 = vst [vmem:[%s179 + $0x60] sm:$0xff] %v204
                %v206 = vld [vmem:[%s178 + $0xd0] sm:$0xff]
                %207 = vst [vmem:[%s179 + $0x68] sm:$0xff] %v206
                %v208 = vld [vmem:[%s178 + $0xe0] sm:$0xff]
                %209 = vst [vmem:[%s179 + $0x70] sm:$0xff] %v208
                %v210 = vld [vmem:[%s178 + $0xf0] sm:$0xff]
                %211 = vst [vmem:[%s179 + $0x78] sm:$0xff] %v210
                %v212 = vld [vmem:[%s178 + $0x100] sm:$0xff]
                %213 = vst [vmem:[%s179 + $0x80] sm:$0xff] %v212
                %v214 = vld [vmem:[%s178 + $0x110] sm:$0xff]
                %215 = vst [vmem:[%s179 + $0x88] sm:$0xff] %v214
                %v216 = vld [vmem:[%s178 + $0x120] sm:$0xff]
                %217 = vst [vmem:[%s179 + $0x90] sm:$0xff] %v216
                %v218 = vld [vmem:[%s178 + $0x130] sm:$0xff]
                %219 = vst [vmem:[%s179 + $0x98] sm:$0xff] %v218
                %v220 = vld [vmem:[%s178 + $0x140] sm:$0xff]
                %221 = vst [vmem:[%s179 + $0xa0] sm:$0xff] %v220
                %v222 = vld [vmem:[%s178 + $0x150] sm:$0xff]
                %223 = vst [vmem:[%s179 + $0xa8] sm:$0xff] %v222
                %v224 = vld [vmem:[%s178 + $0x160] sm:$0xff]
                %225 = vst [vmem:[%s179 + $0xb0] sm:$0xff] %v224
                %v226 = vld [vmem:[%s178 + $0x170] sm:$0xff]
                %227 = vst [vmem:[%s179 + $0xb8] sm:$0xff] %v226
                %v228 = vld [vmem:[%s178 + $0x180] sm:$0xff]
                %229 = vst [vmem:[%s179 + $0xc0] sm:$0xff] %v228
                %v230 = vld [vmem:[%s178 + $0x190] sm:$0xff]
                %231 = vst [vmem:[%s179 + $0xc8] sm:$0xff] %v230
                %v232 = vld [vmem:[%s178 + $0x1a0] sm:$0xff]
                %233 = vst [vmem:[%s179 + $0xd0] sm:$0xff] %v232
                %v234 = vld [vmem:[%s178 + $0x1b0] sm:$0xff]
                %235 = vst [vmem:[%s179 + $0xd8] sm:$0xff] %v234
                %v236 = vld [vmem:[%s178 + $0x1c0] sm:$0xff]
                %237 = vst [vmem:[%s179 + $0xe0] sm:$0xff] %v236
                %v238 = vld [vmem:[%s178 + $0x1d0] sm:$0xff]
                %239 = vst [vmem:[%s179 + $0xe8] sm:$0xff] %v238
                %v240 = vld [vmem:[%s178 + $0x1e0] sm:$0xff]
                %241 = vst [vmem:[%s179 + $0xf0] sm:$0xff] %v240
                %v242 = vld [vmem:[%s178 + $0x1f0] sm:$0xff]
                %243 = vst [vmem:[%s179 + $0xf8] sm:$0xff] %v242
              $region37: #{ternary_train_forward.2} parent=31 // loop_footer
                %s177 = sadd.s32 1, %s173
              $region38: #{ternary_train_forward.2} parent=31 // loop_footer_branch
                %172 = sbr.rel target = $region34
              $region39: #{ternary_train_forward.2} parent=31 // loop_exit
                _
            $region32: #{ternary_train_forward.2} parent=23 // pred_fallthru
              _
          $region24: #{ternary_train_forward.2} parent=19 // pred_fallthru
            _
          %320 = vnop
        $region20: #{ternary_train_forward.2} parent=15 // pred_fallthru
          _
        // Predicated region
        $region55: #{ternary_train_forward.2} parent=15 // pred_check
          %p321 = pneg %p72
        $region56: #{ternary_train_forward.2} parent=15 // pred_check_branch
          %323 = sbr.rel (%p321) target = $region58
        $region57: #{ternary_train_forward.2} parent=15 // pred_region
          %s324 = sand.u32 %s62, 1
          %s325 = sand.u32 %s62, 1
          %s326 = smul.addr %s325, 256
          %s327 = scalar_lea.vmem [#allocation3], %s326
          %s328 = smul.u32 32, %s17
          %s329 = smul.addr %s328, 2
          %s330 = sadd.s32 %s18, %s329
          %s331 = smul.addr %s330, 8
          %s332 = scalar_lea.vmem %s1, %s331
          // Predicated region
          $region59: #{ternary_train_forward.2} parent=57 // pred_check
            _
          $region60: #{ternary_train_forward.2} parent=57 // pred_check_branch
            %334 = sbr.rel (0) target = $region62
          $region61: #{ternary_train_forward.2} parent=57 // pred_region
            // Predicated region
            $region63: #{ternary_train_forward.2} parent=61 // pred_check
              _
            $region64: #{ternary_train_forward.2} parent=61 // pred_check_branch
              %336 = sbr.rel (0) target = $region66
            $region65: #{ternary_train_forward.2} parent=61 // pred_region
              // Predicated region
              $region78: #{ternary_train_forward.2} parent=65 // pred_check
                _
              $region79: #{ternary_train_forward.2} parent=65 // pred_check_branch
                %413 = sbr.rel (0) target = $region81
              $region80: #{ternary_train_forward.2} parent=65 // pred_region
                loop: start=0, step=1, limit=1
                $region82: #{ternary_train_forward.2} parent=80 // loop_pre_header
                  _
                $region83: #{ternary_train_forward.2} parent=80 // loop_header
                  %s415 = sphi 0, %s419
                  %p416 = scmp.ge.s32.totalorder %s415, 1
                  %s420 = sphi %s332, %s332
                  %s421 = sphi %s327, %s327
                $region84: #{ternary_train_forward.2} parent=80 // loop_header_branch
                  %418 = sbr.rel (%p416) target = $region88
                $region85: #{ternary_train_forward.2} parent=80 // loop_body
                  %v422 = vld [vmem:[%s420] sm:$0xff]
                  %423 = vst [vmem:[%s421] sm:$0xff] %v422
                  %v424 = vld [vmem:[%s420 + $0x10] sm:$0xff]
                  %425 = vst [vmem:[%s421 + $0x8] sm:$0xff] %v424
                  %v426 = vld [vmem:[%s420 + $0x20] sm:$0xff]
                  %427 = vst [vmem:[%s421 + $0x10] sm:$0xff] %v426
                  %v428 = vld [vmem:[%s420 + $0x30] sm:$0xff]
                  %429 = vst [vmem:[%s421 + $0x18] sm:$0xff] %v428
                  %v430 = vld [vmem:[%s420 + $0x40] sm:$0xff]
                  %431 = vst [vmem:[%s421 + $0x20] sm:$0xff] %v430
                  %v432 = vld [vmem:[%s420 + $0x50] sm:$0xff]
                  %433 = vst [vmem:[%s421 + $0x28] sm:$0xff] %v432
                  %v434 = vld [vmem:[%s420 + $0x60] sm:$0xff]
                  %435 = vst [vmem:[%s421 + $0x30] sm:$0xff] %v434
                  %v436 = vld [vmem:[%s420 + $0x70] sm:$0xff]
                  %437 = vst [vmem:[%s421 + $0x38] sm:$0xff] %v436
                  %v438 = vld [vmem:[%s420 + $0x80] sm:$0xff]
                  %439 = vst [vmem:[%s421 + $0x40] sm:$0xff] %v438
                  %v440 = vld [vmem:[%s420 + $0x90] sm:$0xff]
                  %441 = vst [vmem:[%s421 + $0x48] sm:$0xff] %v440
                  %v442 = vld [vmem:[%s420 + $0xa0] sm:$0xff]
                  %443 = vst [vmem:[%s421 + $0x50] sm:$0xff] %v442
                  %v444 = vld [vmem:[%s420 + $0xb0] sm:$0xff]
                  %445 = vst [vmem:[%s421 + $0x58] sm:$0xff] %v444
                  %v446 = vld [vmem:[%s420 + $0xc0] sm:$0xff]
                  %447 = vst [vmem:[%s421 + $0x60] sm:$0xff] %v446
                  %v448 = vld [vmem:[%s420 + $0xd0] sm:$0xff]
                  %449 = vst [vmem:[%s421 + $0x68] sm:$0xff] %v448
                  %v450 = vld [vmem:[%s420 + $0xe0] sm:$0xff]
                  %451 = vst [vmem:[%s421 + $0x70] sm:$0xff] %v450
                  %v452 = vld [vmem:[%s420 + $0xf0] sm:$0xff]
                  %453 = vst [vmem:[%s421 + $0x78] sm:$0xff] %v452
                  %v454 = vld [vmem:[%s420 + $0x100] sm:$0xff]
                  %455 = vst [vmem:[%s421 + $0x80] sm:$0xff] %v454
                  %v456 = vld [vmem:[%s420 + $0x110] sm:$0xff]
                  %457 = vst [vmem:[%s421 + $0x88] sm:$0xff] %v456
                  %v458 = vld [vmem:[%s420 + $0x120] sm:$0xff]
                  %459 = vst [vmem:[%s421 + $0x90] sm:$0xff] %v458
                  %v460 = vld [vmem:[%s420 + $0x130] sm:$0xff]
                  %461 = vst [vmem:[%s421 + $0x98] sm:$0xff] %v460
                  %v462 = vld [vmem:[%s420 + $0x140] sm:$0xff]
                  %463 = vst [vmem:[%s421 + $0xa0] sm:$0xff] %v462
                  %v464 = vld [vmem:[%s420 + $0x150] sm:$0xff]
                  %465 = vst [vmem:[%s421 + $0xa8] sm:$0xff] %v464
                  %v466 = vld [vmem:[%s420 + $0x160] sm:$0xff]
                  %467 = vst [vmem:[%s421 + $0xb0] sm:$0xff] %v466
                  %v468 = vld [vmem:[%s420 + $0x170] sm:$0xff]
                  %469 = vst [vmem:[%s421 + $0xb8] sm:$0xff] %v468
                  %v470 = vld [vmem:[%s420 + $0x180] sm:$0xff]
                  %471 = vst [vmem:[%s421 + $0xc0] sm:$0xff] %v470
                  %v472 = vld [vmem:[%s420 + $0x190] sm:$0xff]
                  %473 = vst [vmem:[%s421 + $0xc8] sm:$0xff] %v472
                  %v474 = vld [vmem:[%s420 + $0x1a0] sm:$0xff]
                  %475 = vst [vmem:[%s421 + $0xd0] sm:$0xff] %v474
                  %v476 = vld [vmem:[%s420 + $0x1b0] sm:$0xff]
                  %477 = vst [vmem:[%s421 + $0xd8] sm:$0xff] %v476
                  %v478 = vld [vmem:[%s420 + $0x1c0] sm:$0xff]
                  %479 = vst [vmem:[%s421 + $0xe0] sm:$0xff] %v478
                  %v480 = vld [vmem:[%s420 + $0x1d0] sm:$0xff]
                  %481 = vst [vmem:[%s421 + $0xe8] sm:$0xff] %v480
                  %v482 = vld [vmem:[%s420 + $0x1e0] sm:$0xff]
                  %483 = vst [vmem:[%s421 + $0xf0] sm:$0xff] %v482
                  %v484 = vld [vmem:[%s420 + $0x1f0] sm:$0xff]
                  %485 = vst [vmem:[%s421 + $0xf8] sm:$0xff] %v484
                $region86: #{ternary_train_forward.2} parent=80 // loop_footer
                  %s419 = sadd.s32 1, %s415
                $region87: #{ternary_train_forward.2} parent=80 // loop_footer_branch
                  %414 = sbr.rel target = $region83
                $region88: #{ternary_train_forward.2} parent=80 // loop_exit
                  _
              $region81: #{ternary_train_forward.2} parent=65 // pred_fallthru
                _
              // Predicated region
              $region89: #{ternary_train_forward.2} parent=65 // pred_check
                _
              $region90: #{ternary_train_forward.2} parent=65 // pred_check_branch
                %487 = sbr.rel target = $region92
              $region91: #{ternary_train_forward.2} parent=65 // pred_region
                _
              $region92: #{ternary_train_forward.2} parent=65 // pred_fallthru
                _
            $region66: #{ternary_train_forward.2} parent=61 // pred_fallthru
              _
            // Predicated region
            $region67: #{ternary_train_forward.2} parent=61 // pred_check
              _
            $region68: #{ternary_train_forward.2} parent=61 // pred_check_branch
              %338 = sbr.rel target = $region70
            $region69: #{ternary_train_forward.2} parent=61 // pred_region
              loop: start=0, step=1, limit=1
              $region71: #{ternary_train_forward.2} parent=69 // loop_pre_header
                _
              $region72: #{ternary_train_forward.2} parent=69 // loop_header
                %s341 = sphi 0, %s345
                %p342 = scmp.ge.s32.totalorder %s341, 1
                %s346 = sphi %s332, %s332
                %s347 = sphi %s327, %s327
              $region73: #{ternary_train_forward.2} parent=69 // loop_header_branch
                %344 = sbr.rel (%p342) target = $region77
              $region74: #{ternary_train_forward.2} parent=69 // loop_body
                %v348 = vld [vmem:[%s346] sm:$0xff]
                %349 = vst [vmem:[%s347] sm:$0xff] %v348
                %v350 = vld [vmem:[%s346 + $0x10] sm:$0xff]
                %351 = vst [vmem:[%s347 + $0x8] sm:$0xff] %v350
                %v352 = vld [vmem:[%s346 + $0x20] sm:$0xff]
                %353 = vst [vmem:[%s347 + $0x10] sm:$0xff] %v352
                %v354 = vld [vmem:[%s346 + $0x30] sm:$0xff]
                %355 = vst [vmem:[%s347 + $0x18] sm:$0xff] %v354
                %v356 = vld [vmem:[%s346 + $0x40] sm:$0xff]
                %357 = vst [vmem:[%s347 + $0x20] sm:$0xff] %v356
                %v358 = vld [vmem:[%s346 + $0x50] sm:$0xff]
                %359 = vst [vmem:[%s347 + $0x28] sm:$0xff] %v358
                %v360 = vld [vmem:[%s346 + $0x60] sm:$0xff]
                %361 = vst [vmem:[%s347 + $0x30] sm:$0xff] %v360
                %v362 = vld [vmem:[%s346 + $0x70] sm:$0xff]
                %363 = vst [vmem:[%s347 + $0x38] sm:$0xff] %v362
                %v364 = vld [vmem:[%s346 + $0x80] sm:$0xff]
                %365 = vst [vmem:[%s347 + $0x40] sm:$0xff] %v364
                %v366 = vld [vmem:[%s346 + $0x90] sm:$0xff]
                %367 = vst [vmem:[%s347 + $0x48] sm:$0xff] %v366
                %v368 = vld [vmem:[%s346 + $0xa0] sm:$0xff]
                %369 = vst [vmem:[%s347 + $0x50] sm:$0xff] %v368
                %v370 = vld [vmem:[%s346 + $0xb0] sm:$0xff]
                %371 = vst [vmem:[%s347 + $0x58] sm:$0xff] %v370
                %v372 = vld [vmem:[%s346 + $0xc0] sm:$0xff]
                %373 = vst [vmem:[%s347 + $0x60] sm:$0xff] %v372
                %v374 = vld [vmem:[%s346 + $0xd0] sm:$0xff]
                %375 = vst [vmem:[%s347 + $0x68] sm:$0xff] %v374
                %v376 = vld [vmem:[%s346 + $0xe0] sm:$0xff]
                %377 = vst [vmem:[%s347 + $0x70] sm:$0xff] %v376
                %v378 = vld [vmem:[%s346 + $0xf0] sm:$0xff]
                %379 = vst [vmem:[%s347 + $0x78] sm:$0xff] %v378
                %v380 = vld [vmem:[%s346 + $0x100] sm:$0xff]
                %381 = vst [vmem:[%s347 + $0x80] sm:$0xff] %v380
                %v382 = vld [vmem:[%s346 + $0x110] sm:$0xff]
                %383 = vst [vmem:[%s347 + $0x88] sm:$0xff] %v382
                %v384 = vld [vmem:[%s346 + $0x120] sm:$0xff]
                %385 = vst [vmem:[%s347 + $0x90] sm:$0xff] %v384
                %v386 = vld [vmem:[%s346 + $0x130] sm:$0xff]
                %387 = vst [vmem:[%s347 + $0x98] sm:$0xff] %v386
                %v388 = vld [vmem:[%s346 + $0x140] sm:$0xff]
                %389 = vst [vmem:[%s347 + $0xa0] sm:$0xff] %v388
                %v390 = vld [vmem:[%s346 + $0x150] sm:$0xff]
                %391 = vst [vmem:[%s347 + $0xa8] sm:$0xff] %v390
                %v392 = vld [vmem:[%s346 + $0x160] sm:$0xff]
                %393 = vst [vmem:[%s347 + $0xb0] sm:$0xff] %v392
                %v394 = vld [vmem:[%s346 + $0x170] sm:$0xff]
                %395 = vst [vmem:[%s347 + $0xb8] sm:$0xff] %v394
                %v396 = vld [vmem:[%s346 + $0x180] sm:$0xff]
                %397 = vst [vmem:[%s347 + $0xc0] sm:$0xff] %v396
                %v398 = vld [vmem:[%s346 + $0x190] sm:$0xff]
                %399 = vst [vmem:[%s347 + $0xc8] sm:$0xff] %v398
                %v400 = vld [vmem:[%s346 + $0x1a0] sm:$0xff]
                %401 = vst [vmem:[%s347 + $0xd0] sm:$0xff] %v400
                %v402 = vld [vmem:[%s346 + $0x1b0] sm:$0xff]
                %403 = vst [vmem:[%s347 + $0xd8] sm:$0xff] %v402
                %v404 = vld [vmem:[%s346 + $0x1c0] sm:$0xff]
                %405 = vst [vmem:[%s347 + $0xe0] sm:$0xff] %v404
                %v406 = vld [vmem:[%s346 + $0x1d0] sm:$0xff]
                %407 = vst [vmem:[%s347 + $0xe8] sm:$0xff] %v406
                %v408 = vld [vmem:[%s346 + $0x1e0] sm:$0xff]
                %409 = vst [vmem:[%s347 + $0xf0] sm:$0xff] %v408
                %v410 = vld [vmem:[%s346 + $0x1f0] sm:$0xff]
                %411 = vst [vmem:[%s347 + $0xf8] sm:$0xff] %v410
              $region75: #{ternary_train_forward.2} parent=69 // loop_footer
                %s345 = sadd.s32 1, %s341
              $region76: #{ternary_train_forward.2} parent=69 // loop_footer_branch
                %340 = sbr.rel target = $region72
              $region77: #{ternary_train_forward.2} parent=69 // loop_exit
                _
            $region70: #{ternary_train_forward.2} parent=61 // pred_fallthru
              _
          $region62: #{ternary_train_forward.2} parent=57 // pred_fallthru
            _
          %488 = vnop
        $region58: #{ternary_train_forward.2} parent=15 // pred_fallthru
          _
      $region16: #{ternary_train_forward.2} parent=5 // pred_fallthru
        _
      %p489 = scmp.le.s32.totalorder 1, %s10
      %p490 = scmp.lt.s32.totalorder %s10, 5
      %p491 = pnand %p489, %p490
      %p492 = pneg %p491
      // Predicated region
      $region93: #{ternary_train_forward.2} parent=5 // pred_check
        _
      $region94: #{ternary_train_forward.2} parent=5 // pred_check_branch
        %494 = sbr.rel (%p491) target = $region96
      $region95: #{ternary_train_forward.2} parent=5 // pred_region
        %s495 = ssub.s32 %s10, 1
        %s496 = sand.u32 %s37, 1
        %s497 = sand.u32 %s37, 1
        %s498 = smul.addr %s497, 256
        %s499 = scalar_lea.vmem [#allocation2], %s498
        // Predicated region
        $region97: #{ternary_train_forward.2} parent=95 // pred_check
          %p500 = pneg %p50
        $region98: #{ternary_train_forward.2} parent=95 // pred_check_branch
          %502 = sbr.rel (%p500) target = $region100
        $region99: #{ternary_train_forward.2} parent=95 // pred_region
          _
        $region100: #{ternary_train_forward.2} parent=95 // pred_fallthru
          _
        %s503 = sand.u32 %s65, 1
        %s504 = sand.u32 %s65, 1
        %s505 = smul.addr %s504, 256
        %s506 = scalar_lea.vmem [#allocation3], %s505
        // Predicated region
        $region101: #{ternary_train_forward.2} parent=95 // pred_check
          %p507 = pneg %p78
        $region102: #{ternary_train_forward.2} parent=95 // pred_check_branch
          %509 = sbr.rel (%p507) target = $region104
        $region103: #{ternary_train_forward.2} parent=95 // pred_region
          _
        $region104: #{ternary_train_forward.2} parent=95 // pred_fallthru
          _
        %s510 = sand.u32 %s37, 1
        %s511 = sand.u32 %s37, 1
        %s512 = smul.addr %s511, 256
        %s513 = scalar_lea.vmem [#allocation2], %s512
        %p514 = pneg %p50
        %p515 = pneg %p47
        %s516 = sand.u32 %s65, 1
        %s517 = sand.u32 %s65, 1
        %s518 = smul.addr %s517, 256
        %s519 = scalar_lea.vmem [#allocation3], %s518
        %p520 = pneg %p78
        %p521 = pneg %p75
        %p522 = pneg %p106
        %p523 = pneg %p103
        %s524 = sand.u32 %s93, 1
        %s525 = sand.u32 %s93, 1
        %s526 = smul.addr %s525, 128
        %s527 = scalar_lea.vmem [#allocation4], %s526
        %p528 = pneg %p134
        %p529 = pneg %p131
        %s530 = sand.u32 %s121, 1
        %s531 = sand.u32 %s121, 1
        %s532 = smul.addr %s531, 128
        %s533 = scalar_lea.vmem [#allocation5], %s532
        %s534 = smul.u32 32, %s19
        %s535 = smul.u32 32, %s19
        %s536 = smul.u32 32, %s19
        %s537 = smul.u32 32, %s19
        %v538 = vld [vmem:[%s499] sm:$0xff]
        %v539 = vld [vmem:[%s499 + $0x8] sm:$0xff]
        %v540 = vld [vmem:[%s499 + $0x10] sm:$0xff]
        %v541 = vld [vmem:[%s499 + $0x18] sm:$0xff]
        %v542 = vld [vmem:[%s499 + $0x20] sm:$0xff]
        %v543 = vld [vmem:[%s499 + $0x28] sm:$0xff]
        %v544 = vld [vmem:[%s499 + $0x30] sm:$0xff]
        %v545 = vld [vmem:[%s499 + $0x38] sm:$0xff]
        %v546 = vld [vmem:[%s499 + $0x40] sm:$0xff]
        %v547 = vld [vmem:[%s499 + $0x48] sm:$0xff]
        %v548 = vld [vmem:[%s499 + $0x50] sm:$0xff]
        %v549 = vld [vmem:[%s499 + $0x58] sm:$0xff]
        %v550 = vld [vmem:[%s499 + $0x60] sm:$0xff]
        %v551 = vld [vmem:[%s499 + $0x68] sm:$0xff]
        %v552 = vld [vmem:[%s499 + $0x70] sm:$0xff]
        %v553 = vld [vmem:[%s499 + $0x78] sm:$0xff]
        %v554 = vld [vmem:[%s499 + $0x80] sm:$0xff]
        %v555 = vld [vmem:[%s499 + $0x88] sm:$0xff]
        %v556 = vld [vmem:[%s499 + $0x90] sm:$0xff]
        %v557 = vld [vmem:[%s499 + $0x98] sm:$0xff]
        %v558 = vld [vmem:[%s499 + $0xa0] sm:$0xff]
        %v559 = vld [vmem:[%s499 + $0xa8] sm:$0xff]
        %v560 = vld [vmem:[%s499 + $0xb0] sm:$0xff]
        %v561 = vld [vmem:[%s499 + $0xb8] sm:$0xff]
        %v562 = vld [vmem:[%s499 + $0xc0] sm:$0xff]
        %v563 = vld [vmem:[%s499 + $0xc8] sm:$0xff]
        %v564 = vld [vmem:[%s499 + $0xd0] sm:$0xff]
        %v565 = vld [vmem:[%s499 + $0xd8] sm:$0xff]
        %v566 = vld [vmem:[%s499 + $0xe0] sm:$0xff]
        %v567 = vld [vmem:[%s499 + $0xe8] sm:$0xff]
        %v568 = vld [vmem:[%s499 + $0xf0] sm:$0xff]
        %v569 = vld [vmem:[%s499 + $0xf8] sm:$0xff]
        %v570 = vxor.u32 %v538, 2147483648
        %v571 = vxor.u32 %v539, 2147483648
        %v572 = vxor.u32 %v540, 2147483648
        %v573 = vxor.u32 %v541, 2147483648
        %v574 = vxor.u32 %v542, 2147483648
        %v575 = vxor.u32 %v543, 2147483648
        %v576 = vxor.u32 %v544, 2147483648
        %v577 = vxor.u32 %v545, 2147483648
        %v578 = vxor.u32 %v546, 2147483648
        %v579 = vxor.u32 %v547, 2147483648
        %v580 = vxor.u32 %v548, 2147483648
        %v581 = vxor.u32 %v549, 2147483648
        %v582 = vxor.u32 %v550, 2147483648
        %v583 = vxor.u32 %v551, 2147483648
        %v584 = vxor.u32 %v552, 2147483648
        %v585 = vxor.u32 %v553, 2147483648
        %v586 = vxor.u32 %v554, 2147483648
        %v587 = vxor.u32 %v555, 2147483648
        %v588 = vxor.u32 %v556, 2147483648
        %v589 = vxor.u32 %v557, 2147483648
        %v590 = vxor.u32 %v558, 2147483648
        %v591 = vxor.u32 %v559, 2147483648
        %v592 = vxor.u32 %v560, 2147483648
        %v593 = vxor.u32 %v561, 2147483648
        %v594 = vxor.u32 %v562, 2147483648
        %v595 = vxor.u32 %v563, 2147483648
        %v596 = vxor.u32 %v564, 2147483648
        %v597 = vxor.u32 %v565, 2147483648
        %v598 = vxor.u32 %v566, 2147483648
        %v599 = vxor.u32 %v567, 2147483648
        %v600 = vxor.u32 %v568, 2147483648
        %v601 = vxor.u32 %v569, 2147483648
        %v602 = vmul.f32 %v570, 1.442695
        %v603 = vpow.pop %v602
        %v604 = vmul.f32 %v571, 1.442695
        %v605 = vpow.pop %v604
        %v606 = vmul.f32 %v572, 1.442695
        %v607 = vpow.pop %v606
        %v608 = vmul.f32 %v573, 1.442695
        %v609 = vpow.pop %v608
        %v610 = vmul.f32 %v574, 1.442695
        %v611 = vpow.pop %v610
        %v612 = vmul.f32 %v575, 1.442695
        %v613 = vpow.pop %v612
        %v614 = vmul.f32 %v576, 1.442695
        %v615 = vpow.pop %v614
        %v616 = vmul.f32 %v577, 1.442695
        %v617 = vpow.pop %v616
        %v618 = vmul.f32 %v578, 1.442695
        %v619 = vpow.pop %v618
        %v620 = vmul.f32 %v579, 1.442695
        %v621 = vpow.pop %v620
        %v622 = vmul.f32 %v580, 1.442695
        %v623 = vpow.pop %v622
        %v624 = vmul.f32 %v581, 1.442695
        %v625 = vpow.pop %v624
        %v626 = vmul.f32 %v582, 1.442695
        %v627 = vpow.pop %v626
        %v628 = vmul.f32 %v583, 1.442695
        %v629 = vpow.pop %v628
        %v630 = vmul.f32 %v584, 1.442695
        %v631 = vpow.pop %v630
        %v632 = vmul.f32 %v585, 1.442695
        %v633 = vpow.pop %v632
        %v634 = vmul.f32 %v586, 1.442695
        %v635 = vpow.pop %v634
        %v636 = vmul.f32 %v587, 1.442695
        %v637 = vpow.pop %v636
        %v638 = vmul.f32 %v588, 1.442695
        %v639 = vpow.pop %v638
        %v640 = vmul.f32 %v589, 1.442695
        %v641 = vpow.pop %v640
        %v642 = vmul.f32 %v590, 1.442695
        %v643 = vpow.pop %v642
        %v644 = vmul.f32 %v591, 1.442695
        %v645 = vpow.pop %v644
        %v646 = vmul.f32 %v592, 1.442695
        %v647 = vpow.pop %v646
        %v648 = vmul.f32 %v593, 1.442695
        %v649 = vpow.pop %v648
        %v650 = vmul.f32 %v594, 1.442695
        %v651 = vpow.pop %v650
        %v652 = vmul.f32 %v595, 1.442695
        %v653 = vpow.pop %v652
        %v654 = vmul.f32 %v596, 1.442695
        %v655 = vpow.pop %v654
        %v656 = vmul.f32 %v597, 1.442695
        %v657 = vpow.pop %v656
        %v658 = vmul.f32 %v598, 1.442695
        %v659 = vpow.pop %v658
        %v660 = vmul.f32 %v599, 1.442695
        %v661 = vpow.pop %v660
        %v662 = vmul.f32 %v600, 1.442695
        %v663 = vpow.pop %v662
        %v664 = vmul.f32 %v601, 1.442695
        %v665 = vpow.pop %v664
        %v666 = vadd.f32 %v603, 1.0
        %v667 = vadd.f32 %v605, 1.0
        %v668 = vadd.f32 %v607, 1.0
        %v669 = vadd.f32 %v609, 1.0
        %v670 = vadd.f32 %v611, 1.0
        %v671 = vadd.f32 %v613, 1.0
        %v672 = vadd.f32 %v615, 1.0
        %v673 = vadd.f32 %v617, 1.0
        %v674 = vadd.f32 %v619, 1.0
        %v675 = vadd.f32 %v621, 1.0
        %v676 = vadd.f32 %v623, 1.0
        %v677 = vadd.f32 %v625, 1.0
        %v678 = vadd.f32 %v627, 1.0
        %v679 = vadd.f32 %v629, 1.0
        %v680 = vadd.f32 %v631, 1.0
        %v681 = vadd.f32 %v633, 1.0
        %v682 = vadd.f32 %v635, 1.0
        %v683 = vadd.f32 %v637, 1.0
        %v684 = vadd.f32 %v639, 1.0
        %v685 = vadd.f32 %v641, 1.0
        %v686 = vadd.f32 %v643, 1.0
        %v687 = vadd.f32 %v645, 1.0
        %v688 = vadd.f32 %v647, 1.0
        %v689 = vadd.f32 %v649, 1.0
        %v690 = vadd.f32 %v651, 1.0
        %v691 = vadd.f32 %v653, 1.0
        %v692 = vadd.f32 %v655, 1.0
        %v693 = vadd.f32 %v657, 1.0
        %v694 = vadd.f32 %v659, 1.0
        %v695 = vadd.f32 %v661, 1.0
        %v696 = vadd.f32 %v663, 1.0
        %v697 = vadd.f32 %v665, 1.0
        %v698 = vrcp.pop %v666
        %v699 = vmul.f32 1.0, %v698
        %v700 = vrcp.pop %v667
        %v701 = vmul.f32 1.0, %v700
        %v702 = vrcp.pop %v668
        %v703 = vmul.f32 1.0, %v702
        %v704 = vrcp.pop %v669
        %v705 = vmul.f32 1.0, %v704
        %v706 = vrcp.pop %v670
        %v707 = vmul.f32 1.0, %v706
        %v708 = vrcp.pop %v671
        %v709 = vmul.f32 1.0, %v708
        %v710 = vrcp.pop %v672
        %v711 = vmul.f32 1.0, %v710
        %v712 = vrcp.pop %v673
        %v713 = vmul.f32 1.0, %v712
        %v714 = vrcp.pop %v674
        %v715 = vmul.f32 1.0, %v714
        %v716 = vrcp.pop %v675
        %v717 = vmul.f32 1.0, %v716
        %v718 = vrcp.pop %v676
        %v719 = vmul.f32 1.0, %v718
        %v720 = vrcp.pop %v677
        %v721 = vmul.f32 1.0, %v720
        %v722 = vrcp.pop %v678
        %v723 = vmul.f32 1.0, %v722
        %v724 = vrcp.pop %v679
        %v725 = vmul.f32 1.0, %v724
        %v726 = vrcp.pop %v680
        %v727 = vmul.f32 1.0, %v726
        %v728 = vrcp.pop %v681
        %v729 = vmul.f32 1.0, %v728
        %v730 = vrcp.pop %v682
        %v731 = vmul.f32 1.0, %v730
        %v732 = vrcp.pop %v683
        %v733 = vmul.f32 1.0, %v732
        %v734 = vrcp.pop %v684
        %v735 = vmul.f32 1.0, %v734
        %v736 = vrcp.pop %v685
        %v737 = vmul.f32 1.0, %v736
        %v738 = vrcp.pop %v686
        %v739 = vmul.f32 1.0, %v738
        %v740 = vrcp.pop %v687
        %v741 = vmul.f32 1.0, %v740
        %v742 = vrcp.pop %v688
        %v743 = vmul.f32 1.0, %v742
        %v744 = vrcp.pop %v689
        %v745 = vmul.f32 1.0, %v744
        %v746 = vrcp.pop %v690
        %v747 = vmul.f32 1.0, %v746
        %v748 = vrcp.pop %v691
        %v749 = vmul.f32 1.0, %v748
        %v750 = vrcp.pop %v692
        %v751 = vmul.f32 1.0, %v750
        %v752 = vrcp.pop %v693
        %v753 = vmul.f32 1.0, %v752
        %v754 = vrcp.pop %v694
        %v755 = vmul.f32 1.0, %v754
        %v756 = vrcp.pop %v695
        %v757 = vmul.f32 1.0, %v756
        %v758 = vrcp.pop %v696
        %v759 = vmul.f32 1.0, %v758
        %v760 = vrcp.pop %v697
        %v761 = vmul.f32 1.0, %v760
        %v762 = vld [vmem:[%s506] sm:$0xff]
        %v763 = vld [vmem:[%s506 + $0x8] sm:$0xff]
        %v764 = vld [vmem:[%s506 + $0x10] sm:$0xff]
        %v765 = vld [vmem:[%s506 + $0x18] sm:$0xff]
        %v766 = vld [vmem:[%s506 + $0x20] sm:$0xff]
        %v767 = vld [vmem:[%s506 + $0x28] sm:$0xff]
        %v768 = vld [vmem:[%s506 + $0x30] sm:$0xff]
        %v769 = vld [vmem:[%s506 + $0x38] sm:$0xff]
        %v770 = vld [vmem:[%s506 + $0x40] sm:$0xff]
        %v771 = vld [vmem:[%s506 + $0x48] sm:$0xff]
        %v772 = vld [vmem:[%s506 + $0x50] sm:$0xff]
        %v773 = vld [vmem:[%s506 + $0x58] sm:$0xff]
        %v774 = vld [vmem:[%s506 + $0x60] sm:$0xff]
        %v775 = vld [vmem:[%s506 + $0x68] sm:$0xff]
        %v776 = vld [vmem:[%s506 + $0x70] sm:$0xff]
        %v777 = vld [vmem:[%s506 + $0x78] sm:$0xff]
        %v778 = vld [vmem:[%s506 + $0x80] sm:$0xff]
        %v779 = vld [vmem:[%s506 + $0x88] sm:$0xff]
        %v780 = vld [vmem:[%s506 + $0x90] sm:$0xff]
        %v781 = vld [vmem:[%s506 + $0x98] sm:$0xff]
        %v782 = vld [vmem:[%s506 + $0xa0] sm:$0xff]
        %v783 = vld [vmem:[%s506 + $0xa8] sm:$0xff]
        %v784 = vld [vmem:[%s506 + $0xb0] sm:$0xff]
        %v785 = vld [vmem:[%s506 + $0xb8] sm:$0xff]
        %v786 = vld [vmem:[%s506 + $0xc0] sm:$0xff]
        %v787 = vld [vmem:[%s506 + $0xc8] sm:$0xff]
        %v788 = vld [vmem:[%s506 + $0xd0] sm:$0xff]
        %v789 = vld [vmem:[%s506 + $0xd8] sm:$0xff]
        %v790 = vld [vmem:[%s506 + $0xe0] sm:$0xff]
        %v791 = vld [vmem:[%s506 + $0xe8] sm:$0xff]
        %v792 = vld [vmem:[%s506 + $0xf0] sm:$0xff]
        %v793 = vld [vmem:[%s506 + $0xf8] sm:$0xff]
        %v794 = vxor.u32 %v762, 2147483648
        %v795 = vxor.u32 %v763, 2147483648
        %v796 = vxor.u32 %v764, 2147483648
        %v797 = vxor.u32 %v765, 2147483648
        %v798 = vxor.u32 %v766, 2147483648
        %v799 = vxor.u32 %v767, 2147483648
        %v800 = vxor.u32 %v768, 2147483648
        %v801 = vxor.u32 %v769, 2147483648
        %v802 = vxor.u32 %v770, 2147483648
        %v803 = vxor.u32 %v771, 2147483648
        %v804 = vxor.u32 %v772, 2147483648
        %v805 = vxor.u32 %v773, 2147483648
        %v806 = vxor.u32 %v774, 2147483648
        %v807 = vxor.u32 %v775, 2147483648
        %v808 = vxor.u32 %v776, 2147483648
        %v809 = vxor.u32 %v777, 2147483648
        %v810 = vxor.u32 %v778, 2147483648
        %v811 = vxor.u32 %v779, 2147483648
        %v812 = vxor.u32 %v780, 2147483648
        %v813 = vxor.u32 %v781, 2147483648
        %v814 = vxor.u32 %v782, 2147483648
        %v815 = vxor.u32 %v783, 2147483648
        %v816 = vxor.u32 %v784, 2147483648
        %v817 = vxor.u32 %v785, 2147483648
        %v818 = vxor.u32 %v786, 2147483648
        %v819 = vxor.u32 %v787, 2147483648
        %v820 = vxor.u32 %v788, 2147483648
        %v821 = vxor.u32 %v789, 2147483648
        %v822 = vxor.u32 %v790, 2147483648
        %v823 = vxor.u32 %v791, 2147483648
        %v824 = vxor.u32 %v792, 2147483648
        %v825 = vxor.u32 %v793, 2147483648
        %v826 = vmul.f32 %v794, 1.442695
        %v827 = vpow.pop %v826
        %v828 = vmul.f32 %v795, 1.442695
        %v829 = vpow.pop %v828
        %v830 = vmul.f32 %v796, 1.442695
        %v831 = vpow.pop %v830
        %v832 = vmul.f32 %v797, 1.442695
        %v833 = vpow.pop %v832
        %v834 = vmul.f32 %v798, 1.442695
        %v835 = vpow.pop %v834
        %v836 = vmul.f32 %v799, 1.442695
        %v837 = vpow.pop %v836
        %v838 = vmul.f32 %v800, 1.442695
        %v839 = vpow.pop %v838
        %v840 = vmul.f32 %v801, 1.442695
        %v841 = vpow.pop %v840
        %v842 = vmul.f32 %v802, 1.442695
        %v843 = vpow.pop %v842
        %v844 = vmul.f32 %v803, 1.442695
        %v845 = vpow.pop %v844
        %v846 = vmul.f32 %v804, 1.442695
        %v847 = vpow.pop %v846
        %v848 = vmul.f32 %v805, 1.442695
        %v849 = vpow.pop %v848
        %v850 = vmul.f32 %v806, 1.442695
        %v851 = vpow.pop %v850
        %v852 = vmul.f32 %v807, 1.442695
        %v853 = vpow.pop %v852
        %v854 = vmul.f32 %v808, 1.442695
        %v855 = vpow.pop %v854
        %v856 = vmul.f32 %v809, 1.442695
        %v857 = vpow.pop %v856
        %v858 = vmul.f32 %v810, 1.442695
        %v859 = vpow.pop %v858
        %v860 = vmul.f32 %v811, 1.442695
        %v861 = vpow.pop %v860
        %v862 = vmul.f32 %v812, 1.442695
        %v863 = vpow.pop %v862
        %v864 = vmul.f32 %v813, 1.442695
        %v865 = vpow.pop %v864
        %v866 = vmul.f32 %v814, 1.442695
        %v867 = vpow.pop %v866
        %v868 = vmul.f32 %v815, 1.442695
        %v869 = vpow.pop %v868
        %v870 = vmul.f32 %v816, 1.442695
        %v871 = vpow.pop %v870
        %v872 = vmul.f32 %v817, 1.442695
        %v873 = vpow.pop %v872
        %v874 = vmul.f32 %v818, 1.442695
        %v875 = vpow.pop %v874
        %v876 = vmul.f32 %v819, 1.442695
        %v877 = vpow.pop %v876
        %v878 = vmul.f32 %v820, 1.442695
        %v879 = vpow.pop %v878
        %v880 = vmul.f32 %v821, 1.442695
        %v881 = vpow.pop %v880
        %v882 = vmul.f32 %v822, 1.442695
        %v883 = vpow.pop %v882
        %v884 = vmul.f32 %v823, 1.442695
        %v885 = vpow.pop %v884
        %v886 = vmul.f32 %v824, 1.442695
        %v887 = vpow.pop %v886
        %v888 = vmul.f32 %v825, 1.442695
        %v889 = vpow.pop %v888
        %v890 = vadd.f32 %v827, 1.0
        %v891 = vadd.f32 %v829, 1.0
        %v892 = vadd.f32 %v831, 1.0
        %v893 = vadd.f32 %v833, 1.0
        %v894 = vadd.f32 %v835, 1.0
        %v895 = vadd.f32 %v837, 1.0
        %v896 = vadd.f32 %v839, 1.0
        %v897 = vadd.f32 %v841, 1.0
        %v898 = vadd.f32 %v843, 1.0
        %v899 = vadd.f32 %v845, 1.0
        %v900 = vadd.f32 %v847, 1.0
        %v901 = vadd.f32 %v849, 1.0
        %v902 = vadd.f32 %v851, 1.0
        %v903 = vadd.f32 %v853, 1.0
        %v904 = vadd.f32 %v855, 1.0
        %v905 = vadd.f32 %v857, 1.0
        %v906 = vadd.f32 %v859, 1.0
        %v907 = vadd.f32 %v861, 1.0
        %v908 = vadd.f32 %v863, 1.0
        %v909 = vadd.f32 %v865, 1.0
        %v910 = vadd.f32 %v867, 1.0
        %v911 = vadd.f32 %v869, 1.0
        %v912 = vadd.f32 %v871, 1.0
        %v913 = vadd.f32 %v873, 1.0
        %v914 = vadd.f32 %v875, 1.0
        %v915 = vadd.f32 %v877, 1.0
        %v916 = vadd.f32 %v879, 1.0
        %v917 = vadd.f32 %v881, 1.0
        %v918 = vadd.f32 %v883, 1.0
        %v919 = vadd.f32 %v885, 1.0
        %v920 = vadd.f32 %v887, 1.0
        %v921 = vadd.f32 %v889, 1.0
        %v922 = vrcp.pop %v890
        %v923 = vmul.f32 1.0, %v922
        %v924 = vrcp.pop %v891
        %v925 = vmul.f32 1.0, %v924
        %v926 = vrcp.pop %v892
        %v927 = vmul.f32 1.0, %v926
        %v928 = vrcp.pop %v893
        %v929 = vmul.f32 1.0, %v928
        %v930 = vrcp.pop %v894
        %v931 = vmul.f32 1.0, %v930
        %v932 = vrcp.pop %v895
        %v933 = vmul.f32 1.0, %v932
        %v934 = vrcp.pop %v896
        %v935 = vmul.f32 1.0, %v934
        %v936 = vrcp.pop %v897
        %v937 = vmul.f32 1.0, %v936
        %v938 = vrcp.pop %v898
        %v939 = vmul.f32 1.0, %v938
        %v940 = vrcp.pop %v899
        %v941 = vmul.f32 1.0, %v940
        %v942 = vrcp.pop %v900
        %v943 = vmul.f32 1.0, %v942
        %v944 = vrcp.pop %v901
        %v945 = vmul.f32 1.0, %v944
        %v946 = vrcp.pop %v902
        %v947 = vmul.f32 1.0, %v946
        %v948 = vrcp.pop %v903
        %v949 = vmul.f32 1.0, %v948
        %v950 = vrcp.pop %v904
        %v951 = vmul.f32 1.0, %v950
        %v952 = vrcp.pop %v905
        %v953 = vmul.f32 1.0, %v952
        %v954 = vrcp.pop %v906
        %v955 = vmul.f32 1.0, %v954
        %v956 = vrcp.pop %v907
        %v957 = vmul.f32 1.0, %v956
        %v958 = vrcp.pop %v908
        %v959 = vmul.f32 1.0, %v958
        %v960 = vrcp.pop %v909
        %v961 = vmul.f32 1.0, %v960
        %v962 = vrcp.pop %v910
        %v963 = vmul.f32 1.0, %v962
        %v964 = vrcp.pop %v911
        %v965 = vmul.f32 1.0, %v964
        %v966 = vrcp.pop %v912
        %v967 = vmul.f32 1.0, %v966
        %v968 = vrcp.pop %v913
        %v969 = vmul.f32 1.0, %v968
        %v970 = vrcp.pop %v914
        %v971 = vmul.f32 1.0, %v970
        %v972 = vrcp.pop %v915
        %v973 = vmul.f32 1.0, %v972
        %v974 = vrcp.pop %v916
        %v975 = vmul.f32 1.0, %v974
        %v976 = vrcp.pop %v917
        %v977 = vmul.f32 1.0, %v976
        %v978 = vrcp.pop %v918
        %v979 = vmul.f32 1.0, %v978
        %v980 = vrcp.pop %v919
        %v981 = vmul.f32 1.0, %v980
        %v982 = vrcp.pop %v920
        %v983 = vmul.f32 1.0, %v982
        %v984 = vrcp.pop %v921
        %v985 = vmul.f32 1.0, %v984
        %v986 = vmul.f32 %v923, 2.0
        %v987 = vmul.f32 %v925, 2.0
        %v988 = vmul.f32 %v927, 2.0
        %v989 = vmul.f32 %v929, 2.0
        %v990 = vmul.f32 %v931, 2.0
        %v991 = vmul.f32 %v933, 2.0
        %v992 = vmul.f32 %v935, 2.0
        %v993 = vmul.f32 %v937, 2.0
        %v994 = vmul.f32 %v939, 2.0
        %v995 = vmul.f32 %v941, 2.0
        %v996 = vmul.f32 %v943, 2.0
        %v997 = vmul.f32 %v945, 2.0
        %v998 = vmul.f32 %v947, 2.0
        %v999 = vmul.f32 %v949, 2.0
        %v1000 = vmul.f32 %v951, 2.0
        %v1001 = vmul.f32 %v953, 2.0
        %v1002 = vmul.f32 %v955, 2.0
        %v1003 = vmul.f32 %v957, 2.0
        %v1004 = vmul.f32 %v959, 2.0
        %v1005 = vmul.f32 %v961, 2.0
        %v1006 = vmul.f32 %v963, 2.0
        %v1007 = vmul.f32 %v965, 2.0
        %v1008 = vmul.f32 %v967, 2.0
        %v1009 = vmul.f32 %v969, 2.0
        %v1010 = vmul.f32 %v971, 2.0
        %v1011 = vmul.f32 %v973, 2.0
        %v1012 = vmul.f32 %v975, 2.0
        %v1013 = vmul.f32 %v977, 2.0
        %v1014 = vmul.f32 %v979, 2.0
        %v1015 = vmul.f32 %v981, 2.0
        %v1016 = vmul.f32 %v983, 2.0
        %v1017 = vmul.f32 %v985, 2.0
        %v1018 = vsub.f32 %v986, 1.0
        %v1019 = vsub.f32 %v987, 1.0
        %v1020 = vsub.f32 %v988, 1.0
        %v1021 = vsub.f32 %v989, 1.0
        %v1022 = vsub.f32 %v990, 1.0
        %v1023 = vsub.f32 %v991, 1.0
        %v1024 = vsub.f32 %v992, 1.0
        %v1025 = vsub.f32 %v993, 1.0
        %v1026 = vsub.f32 %v994, 1.0
        %v1027 = vsub.f32 %v995, 1.0
        %v1028 = vsub.f32 %v996, 1.0
        %v1029 = vsub.f32 %v997, 1.0
        %v1030 = vsub.f32 %v998, 1.0
        %v1031 = vsub.f32 %v999, 1.0
        %v1032 = vsub.f32 %v1000, 1.0
        %v1033 = vsub.f32 %v1001, 1.0
        %v1034 = vsub.f32 %v1002, 1.0
        %v1035 = vsub.f32 %v1003, 1.0
        %v1036 = vsub.f32 %v1004, 1.0
        %v1037 = vsub.f32 %v1005, 1.0
        %v1038 = vsub.f32 %v1006, 1.0
        %v1039 = vsub.f32 %v1007, 1.0
        %v1040 = vsub.f32 %v1008, 1.0
        %v1041 = vsub.f32 %v1009, 1.0
        %v1042 = vsub.f32 %v1010, 1.0
        %v1043 = vsub.f32 %v1011, 1.0
        %v1044 = vsub.f32 %v1012, 1.0
        %v1045 = vsub.f32 %v1013, 1.0
        %v1046 = vsub.f32 %v1014, 1.0
        %v1047 = vsub.f32 %v1015, 1.0
        %v1048 = vsub.f32 %v1016, 1.0
        %v1049 = vsub.f32 %v1017, 1.0
        %v1050 = vmul.f32 %v699, %v1018
        %v1051 = vmul.f32 %v701, %v1019
        %v1052 = vmul.f32 %v703, %v1020
        %v1053 = vmul.f32 %v705, %v1021
        %v1054 = vmul.f32 %v707, %v1022
        %v1055 = vmul.f32 %v709, %v1023
        %v1056 = vmul.f32 %v711, %v1024
        %v1057 = vmul.f32 %v713, %v1025
        %v1058 = vmul.f32 %v715, %v1026
        %v1059 = vmul.f32 %v717, %v1027
        %v1060 = vmul.f32 %v719, %v1028
        %v1061 = vmul.f32 %v721, %v1029
        %v1062 = vmul.f32 %v723, %v1030
        %v1063 = vmul.f32 %v725, %v1031
        %v1064 = vmul.f32 %v727, %v1032
        %v1065 = vmul.f32 %v729, %v1033
        %v1066 = vmul.f32 %v731, %v1034
        %v1067 = vmul.f32 %v733, %v1035
        %v1068 = vmul.f32 %v735, %v1036
        %v1069 = vmul.f32 %v737, %v1037
        %v1070 = vmul.f32 %v739, %v1038
        %v1071 = vmul.f32 %v741, %v1039
        %v1072 = vmul.f32 %v743, %v1040
        %v1073 = vmul.f32 %v745, %v1041
        %v1074 = vmul.f32 %v747, %v1042
        %v1075 = vmul.f32 %v749, %v1043
        %v1076 = vmul.f32 %v751, %v1044
        %v1077 = vmul.f32 %v753, %v1045
        %v1078 = vmul.f32 %v755, %v1046
        %v1079 = vmul.f32 %v757, %v1047
        %v1080 = vmul.f32 %v759, %v1048
        %v1081 = vmul.f32 %v761, %v1049
        %v1082 = vmul.f32 %v699, %v699
        %v1083 = vmul.f32 %v701, %v701
        %v1084 = vmul.f32 %v703, %v703
        %v1085 = vmul.f32 %v705, %v705
        %v1086 = vmul.f32 %v707, %v707
        %v1087 = vmul.f32 %v709, %v709
        %v1088 = vmul.f32 %v711, %v711
        %v1089 = vmul.f32 %v713, %v713
        %v1090 = vmul.f32 %v715, %v715
        %v1091 = vmul.f32 %v717, %v717
        %v1092 = vmul.f32 %v719, %v719
        %v1093 = vmul.f32 %v721, %v721
        %v1094 = vmul.f32 %v723, %v723
        %v1095 = vmul.f32 %v725, %v725
        %v1096 = vmul.f32 %v727, %v727
        %v1097 = vmul.f32 %v729, %v729
        %v1098 = vmul.f32 %v731, %v731
        %v1099 = vmul.f32 %v733, %v733
        %v1100 = vmul.f32 %v735, %v735
        %v1101 = vmul.f32 %v737, %v737
        %v1102 = vmul.f32 %v739, %v739
        %v1103 = vmul.f32 %v741, %v741
        %v1104 = vmul.f32 %v743, %v743
        %v1105 = vmul.f32 %v745, %v745
        %v1106 = vmul.f32 %v747, %v747
        %v1107 = vmul.f32 %v749, %v749
        %v1108 = vmul.f32 %v751, %v751
        %v1109 = vmul.f32 %v753, %v753
        %v1110 = vmul.f32 %v755, %v755
        %v1111 = vmul.f32 %v757, %v757
        %v1112 = vmul.f32 %v759, %v759
        %v1113 = vmul.f32 %v761, %v761
        %v1114 = vmul.f32 %v1018, %v1018
        %v1115 = vmul.f32 %v1019, %v1019
        %v1116 = vmul.f32 %v1020, %v1020
        %v1117 = vmul.f32 %v1021, %v1021
        %v1118 = vmul.f32 %v1022, %v1022
        %v1119 = vmul.f32 %v1023, %v1023
        %v1120 = vmul.f32 %v1024, %v1024
        %v1121 = vmul.f32 %v1025, %v1025
        %v1122 = vmul.f32 %v1026, %v1026
        %v1123 = vmul.f32 %v1027, %v1027
        %v1124 = vmul.f32 %v1028, %v1028
        %v1125 = vmul.f32 %v1029, %v1029
        %v1126 = vmul.f32 %v1030, %v1030
        %v1127 = vmul.f32 %v1031, %v1031
        %v1128 = vmul.f32 %v1032, %v1032
        %v1129 = vmul.f32 %v1033, %v1033
        %v1130 = vmul.f32 %v1034, %v1034
        %v1131 = vmul.f32 %v1035, %v1035
        %v1132 = vmul.f32 %v1036, %v1036
        %v1133 = vmul.f32 %v1037, %v1037
        %v1134 = vmul.f32 %v1038, %v1038
        %v1135 = vmul.f32 %v1039, %v1039
        %v1136 = vmul.f32 %v1040, %v1040
        %v1137 = vmul.f32 %v1041, %v1041
        %v1138 = vmul.f32 %v1042, %v1042
        %v1139 = vmul.f32 %v1043, %v1043
        %v1140 = vmul.f32 %v1044, %v1044
        %v1141 = vmul.f32 %v1045, %v1045
        %v1142 = vmul.f32 %v1046, %v1046
        %v1143 = vmul.f32 %v1047, %v1047
        %v1144 = vmul.f32 %v1048, %v1048
        %v1145 = vmul.f32 %v1049, %v1049
        %v1146 = vmul.f32 %v1082, %v1114
        %v1147 = vmul.f32 %v1083, %v1115
        %v1148 = vmul.f32 %v1084, %v1116
        %v1149 = vmul.f32 %v1085, %v1117
        %v1150 = vmul.f32 %v1086, %v1118
        %v1151 = vmul.f32 %v1087, %v1119
        %v1152 = vmul.f32 %v1088, %v1120
        %v1153 = vmul.f32 %v1089, %v1121
        %v1154 = vmul.f32 %v1090, %v1122
        %v1155 = vmul.f32 %v1091, %v1123
        %v1156 = vmul.f32 %v1092, %v1124
        %v1157 = vmul.f32 %v1093, %v1125
        %v1158 = vmul.f32 %v1094, %v1126
        %v1159 = vmul.f32 %v1095, %v1127
        %v1160 = vmul.f32 %v1096, %v1128
        %v1161 = vmul.f32 %v1097, %v1129
        %v1162 = vmul.f32 %v1098, %v1130
        %v1163 = vmul.f32 %v1099, %v1131
        %v1164 = vmul.f32 %v1100, %v1132
        %v1165 = vmul.f32 %v1101, %v1133
        %v1166 = vmul.f32 %v1102, %v1134
        %v1167 = vmul.f32 %v1103, %v1135
        %v1168 = vmul.f32 %v1104, %v1136
        %v1169 = vmul.f32 %v1105, %v1137
        %v1170 = vmul.f32 %v1106, %v1138
        %v1171 = vmul.f32 %v1107, %v1139
        %v1172 = vmul.f32 %v1108, %v1140
        %v1173 = vmul.f32 %v1109, %v1141
        %v1174 = vmul.f32 %v1110, %v1142
        %v1175 = vmul.f32 %v1111, %v1143
        %v1176 = vmul.f32 %v1112, %v1144
        %v1177 = vmul.f32 %v1113, %v1145
        %v1178 = vsub.f32 %v699, %v1146
        %v1179 = vsub.f32 %v701, %v1147
        %v1180 = vsub.f32 %v703, %v1148
        %v1181 = vsub.f32 %v705, %v1149
        %v1182 = vsub.f32 %v707, %v1150
        %v1183 = vsub.f32 %v709, %v1151
        %v1184 = vsub.f32 %v711, %v1152
        %v1185 = vsub.f32 %v713, %v1153
        %v1186 = vsub.f32 %v715, %v1154
        %v1187 = vsub.f32 %v717, %v1155
        %v1188 = vsub.f32 %v719, %v1156
        %v1189 = vsub.f32 %v721, %v1157
        %v1190 = vsub.f32 %v723, %v1158
        %v1191 = vsub.f32 %v725, %v1159
        %v1192 = vsub.f32 %v727, %v1160
        %v1193 = vsub.f32 %v729, %v1161
        %v1194 = vsub.f32 %v731, %v1162
        %v1195 = vsub.f32 %v733, %v1163
        %v1196 = vsub.f32 %v735, %v1164
        %v1197 = vsub.f32 %v737, %v1165
        %v1198 = vsub.f32 %v739, %v1166
        %v1199 = vsub.f32 %v741, %v1167
        %v1200 = vsub.f32 %v743, %v1168
        %v1201 = vsub.f32 %v745, %v1169
        %v1202 = vsub.f32 %v747, %v1170
        %v1203 = vsub.f32 %v749, %v1171
        %v1204 = vsub.f32 %v751, %v1172
        %v1205 = vsub.f32 %v753, %v1173
        %v1206 = vsub.f32 %v755, %v1174
        %v1207 = vsub.f32 %v757, %v1175
        %v1208 = vsub.f32 %v759, %v1176
        %v1209 = vsub.f32 %v761, %v1177
        %v1210 = vpack.c.bf16 %v1051, %v1050
        %v1211 = vpack.c.bf16 %v1053, %v1052
        %v1212 = vpack.c.bf16 %v1055, %v1054
        %v1213 = vpack.c.bf16 %v1057, %v1056
        %v1214 = vpack.c.bf16 %v1059, %v1058
        %v1215 = vpack.c.bf16 %v1061, %v1060
        %v1216 = vpack.c.bf16 %v1063, %v1062
        %v1217 = vpack.c.bf16 %v1065, %v1064
        %v1218 = vpack.c.bf16 %v1067, %v1066
        %v1219 = vpack.c.bf16 %v1069, %v1068
        %v1220 = vpack.c.bf16 %v1071, %v1070
        %v1221 = vpack.c.bf16 %v1073, %v1072
        %v1222 = vpack.c.bf16 %v1075, %v1074
        %v1223 = vpack.c.bf16 %v1077, %v1076
        %v1224 = vpack.c.bf16 %v1079, %v1078
        %v1225 = vpack.c.bf16 %v1081, %v1080
        %v1242 = vunpack.c.l.b16 %v1210
        %v1243 = vunpack.c.h.b16 %v1210
        %v1244 = vunpack.c.l.b16 %v1211
        %v1245 = vunpack.c.h.b16 %v1211
        %v1246 = vunpack.c.l.b16 %v1212
        %v1247 = vunpack.c.h.b16 %v1212
        %v1248 = vunpack.c.l.b16 %v1213
        %v1249 = vunpack.c.h.b16 %v1213
        %v1250 = vunpack.c.l.b16 %v1214
        %v1251 = vunpack.c.h.b16 %v1214
        %v1252 = vunpack.c.l.b16 %v1215
        %v1253 = vunpack.c.h.b16 %v1215
        %v1254 = vunpack.c.l.b16 %v1216
        %v1255 = vunpack.c.h.b16 %v1216
        %v1256 = vunpack.c.l.b16 %v1217
        %v1257 = vunpack.c.h.b16 %v1217
        %v1258 = vunpack.c.l.b16 %v1218
        %v1259 = vunpack.c.h.b16 %v1218
        %v1260 = vunpack.c.l.b16 %v1219
        %v1261 = vunpack.c.h.b16 %v1219
        %v1262 = vunpack.c.l.b16 %v1220
        %v1263 = vunpack.c.h.b16 %v1220
        %v1264 = vunpack.c.l.b16 %v1221
        %v1265 = vunpack.c.h.b16 %v1221
        %v1266 = vunpack.c.l.b16 %v1222
        %v1267 = vunpack.c.h.b16 %v1222
        %v1268 = vunpack.c.l.b16 %v1223
        %v1269 = vunpack.c.h.b16 %v1223
        %v1270 = vunpack.c.l.b16 %v1224
        %v1271 = vunpack.c.h.b16 %v1224
        %v1272 = vunpack.c.l.b16 %v1225
        %v1273 = vunpack.c.h.b16 %v1225
        %v1274 = vpack.c.b16 %v1242, %v1242
        %v1275 = vpack.c.b16 %v1243, %v1243
        %v1276 = vpack.c.b16 %v1244, %v1244
        %v1277 = vpack.c.b16 %v1245, %v1245
        %v1278 = vpack.c.b16 %v1246, %v1246
        %v1279 = vpack.c.b16 %v1247, %v1247
        %v1280 = vpack.c.b16 %v1248, %v1248
        %v1281 = vpack.c.b16 %v1249, %v1249
        %v1282 = vpack.c.b16 %v1250, %v1250
        %v1283 = vpack.c.b16 %v1251, %v1251
        %v1284 = vpack.c.b16 %v1252, %v1252
        %v1285 = vpack.c.b16 %v1253, %v1253
        %v1286 = vpack.c.b16 %v1254, %v1254
        %v1287 = vpack.c.b16 %v1255, %v1255
        %v1288 = vpack.c.b16 %v1256, %v1256
        %v1289 = vpack.c.b16 %v1257, %v1257
        %v1290 = vpack.c.b16 %v1258, %v1258
        %v1291 = vpack.c.b16 %v1259, %v1259
        %v1292 = vpack.c.b16 %v1260, %v1260
        %v1293 = vpack.c.b16 %v1261, %v1261
        %v1294 = vpack.c.b16 %v1262, %v1262
        %v1295 = vpack.c.b16 %v1263, %v1263
        %v1296 = vpack.c.b16 %v1264, %v1264
        %v1297 = vpack.c.b16 %v1265, %v1265
        %v1298 = vpack.c.b16 %v1266, %v1266
        %v1299 = vpack.c.b16 %v1267, %v1267
        %v1300 = vpack.c.b16 %v1268, %v1268
        %v1301 = vpack.c.b16 %v1269, %v1269
        %v1302 = vpack.c.b16 %v1270, %v1270
        %v1303 = vpack.c.b16 %v1271, %v1271
        %v1304 = vpack.c.b16 %v1272, %v1272
        %v1305 = vpack.c.b16 %v1273, %v1273
        %1338 = vst [vmem:[%s527] sm:$0xf] %v1274
        %1339 = vst [vmem:[%s527 + $0x4] sm:$0xf] %v1275
        %1340 = vst [vmem:[%s527 + $0x8] sm:$0xf] %v1276
        %1341 = vst [vmem:[%s527 + $0xc] sm:$0xf] %v1277
        %1342 = vst [vmem:[%s527 + $0x10] sm:$0xf] %v1278
        %1343 = vst [vmem:[%s527 + $0x14] sm:$0xf] %v1279
        %1344 = vst [vmem:[%s527 + $0x18] sm:$0xf] %v1280
        %1345 = vst [vmem:[%s527 + $0x1c] sm:$0xf] %v1281
        %1346 = vst [vmem:[%s527 + $0x20] sm:$0xf] %v1282
        %1347 = vst [vmem:[%s527 + $0x24] sm:$0xf] %v1283
        %1348 = vst [vmem:[%s527 + $0x28] sm:$0xf] %v1284
        %1349 = vst [vmem:[%s527 + $0x2c] sm:$0xf] %v1285
        %1350 = vst [vmem:[%s527 + $0x30] sm:$0xf] %v1286
        %1351 = vst [vmem:[%s527 + $0x34] sm:$0xf] %v1287
        %1352 = vst [vmem:[%s527 + $0x38] sm:$0xf] %v1288
        %1353 = vst [vmem:[%s527 + $0x3c] sm:$0xf] %v1289
        %1354 = vst [vmem:[%s527 + $0x40] sm:$0xf] %v1290
        %1355 = vst [vmem:[%s527 + $0x44] sm:$0xf] %v1291
        %1356 = vst [vmem:[%s527 + $0x48] sm:$0xf] %v1292
        %1357 = vst [vmem:[%s527 + $0x4c] sm:$0xf] %v1293
        %1358 = vst [vmem:[%s527 + $0x50] sm:$0xf] %v1294
        %1359 = vst [vmem:[%s527 + $0x54] sm:$0xf] %v1295
        %1360 = vst [vmem:[%s527 + $0x58] sm:$0xf] %v1296
        %1361 = vst [vmem:[%s527 + $0x5c] sm:$0xf] %v1297
        %1362 = vst [vmem:[%s527 + $0x60] sm:$0xf] %v1298
        %1363 = vst [vmem:[%s527 + $0x64] sm:$0xf] %v1299
        %1364 = vst [vmem:[%s527 + $0x68] sm:$0xf] %v1300
        %1365 = vst [vmem:[%s527 + $0x6c] sm:$0xf] %v1301
        %1366 = vst [vmem:[%s527 + $0x70] sm:$0xf] %v1302
        %1367 = vst [vmem:[%s527 + $0x74] sm:$0xf] %v1303
        %1368 = vst [vmem:[%s527 + $0x78] sm:$0xf] %v1304
        %1369 = vst [vmem:[%s527 + $0x7c] sm:$0xf] %v1305
        %v1370 = vpack.c.bf16 %v1179, %v1178
        %v1371 = vpack.c.bf16 %v1181, %v1180
        %v1372 = vpack.c.bf16 %v1183, %v1182
        %v1373 = vpack.c.bf16 %v1185, %v1184
        %v1374 = vpack.c.bf16 %v1187, %v1186
        %v1375 = vpack.c.bf16 %v1189, %v1188
        %v1376 = vpack.c.bf16 %v1191, %v1190
        %v1377 = vpack.c.bf16 %v1193, %v1192
        %v1378 = vpack.c.bf16 %v1195, %v1194
        %v1379 = vpack.c.bf16 %v1197, %v1196
        %v1380 = vpack.c.bf16 %v1199, %v1198
        %v1381 = vpack.c.bf16 %v1201, %v1200
        %v1382 = vpack.c.bf16 %v1203, %v1202
        %v1383 = vpack.c.bf16 %v1205, %v1204
        %v1384 = vpack.c.bf16 %v1207, %v1206
        %v1385 = vpack.c.bf16 %v1209, %v1208
        %v1402 = vunpack.c.l.b16 %v1370
        %v1403 = vunpack.c.h.b16 %v1370
        %v1404 = vunpack.c.l.b16 %v1371
        %v1405 = vunpack.c.h.b16 %v1371
        %v1406 = vunpack.c.l.b16 %v1372
        %v1407 = vunpack.c.h.b16 %v1372
        %v1408 = vunpack.c.l.b16 %v1373
        %v1409 = vunpack.c.h.b16 %v1373
        %v1410 = vunpack.c.l.b16 %v1374
        %v1411 = vunpack.c.h.b16 %v1374
        %v1412 = vunpack.c.l.b16 %v1375
        %v1413 = vunpack.c.h.b16 %v1375
        %v1414 = vunpack.c.l.b16 %v1376
        %v1415 = vunpack.c.h.b16 %v1376
        %v1416 = vunpack.c.l.b16 %v1377
        %v1417 = vunpack.c.h.b16 %v1377
        %v1418 = vunpack.c.l.b16 %v1378
        %v1419 = vunpack.c.h.b16 %v1378
        %v1420 = vunpack.c.l.b16 %v1379
        %v1421 = vunpack.c.h.b16 %v1379
        %v1422 = vunpack.c.l.b16 %v1380
        %v1423 = vunpack.c.h.b16 %v1380
        %v1424 = vunpack.c.l.b16 %v1381
        %v1425 = vunpack.c.h.b16 %v1381
        %v1426 = vunpack.c.l.b16 %v1382
        %v1427 = vunpack.c.h.b16 %v1382
        %v1428 = vunpack.c.l.b16 %v1383
        %v1429 = vunpack.c.h.b16 %v1383
        %v1430 = vunpack.c.l.b16 %v1384
        %v1431 = vunpack.c.h.b16 %v1384
        %v1432 = vunpack.c.l.b16 %v1385
        %v1433 = vunpack.c.h.b16 %v1385
        %v1434 = vpack.c.b16 %v1402, %v1402
        %v1435 = vpack.c.b16 %v1403, %v1403
        %v1436 = vpack.c.b16 %v1404, %v1404
        %v1437 = vpack.c.b16 %v1405, %v1405
        %v1438 = vpack.c.b16 %v1406, %v1406
        %v1439 = vpack.c.b16 %v1407, %v1407
        %v1440 = vpack.c.b16 %v1408, %v1408
        %v1441 = vpack.c.b16 %v1409, %v1409
        %v1442 = vpack.c.b16 %v1410, %v1410
        %v1443 = vpack.c.b16 %v1411, %v1411
        %v1444 = vpack.c.b16 %v1412, %v1412
        %v1445 = vpack.c.b16 %v1413, %v1413
        %v1446 = vpack.c.b16 %v1414, %v1414
        %v1447 = vpack.c.b16 %v1415, %v1415
        %v1448 = vpack.c.b16 %v1416, %v1416
        %v1449 = vpack.c.b16 %v1417, %v1417
        %v1450 = vpack.c.b16 %v1418, %v1418
        %v1451 = vpack.c.b16 %v1419, %v1419
        %v1452 = vpack.c.b16 %v1420, %v1420
        %v1453 = vpack.c.b16 %v1421, %v1421
        %v1454 = vpack.c.b16 %v1422, %v1422
        %v1455 = vpack.c.b16 %v1423, %v1423
        %v1456 = vpack.c.b16 %v1424, %v1424
        %v1457 = vpack.c.b16 %v1425, %v1425
        %v1458 = vpack.c.b16 %v1426, %v1426
        %v1459 = vpack.c.b16 %v1427, %v1427
        %v1460 = vpack.c.b16 %v1428, %v1428
        %v1461 = vpack.c.b16 %v1429, %v1429
        %v1462 = vpack.c.b16 %v1430, %v1430
        %v1463 = vpack.c.b16 %v1431, %v1431
        %v1464 = vpack.c.b16 %v1432, %v1432
        %v1465 = vpack.c.b16 %v1433, %v1433
        %1498 = vst [vmem:[%s533] sm:$0xf] %v1434
        %1499 = vst [vmem:[%s533 + $0x4] sm:$0xf] %v1435
        %1500 = vst [vmem:[%s533 + $0x8] sm:$0xf] %v1436
        %1501 = vst [vmem:[%s533 + $0xc] sm:$0xf] %v1437
        %1502 = vst [vmem:[%s533 + $0x10] sm:$0xf] %v1438
        %1503 = vst [vmem:[%s533 + $0x14] sm:$0xf] %v1439
        %1504 = vst [vmem:[%s533 + $0x18] sm:$0xf] %v1440
        %1505 = vst [vmem:[%s533 + $0x1c] sm:$0xf] %v1441
        %1506 = vst [vmem:[%s533 + $0x20] sm:$0xf] %v1442
        %1507 = vst [vmem:[%s533 + $0x24] sm:$0xf] %v1443
        %1508 = vst [vmem:[%s533 + $0x28] sm:$0xf] %v1444
        %1509 = vst [vmem:[%s533 + $0x2c] sm:$0xf] %v1445
        %1510 = vst [vmem:[%s533 + $0x30] sm:$0xf] %v1446
        %1511 = vst [vmem:[%s533 + $0x34] sm:$0xf] %v1447
        %1512 = vst [vmem:[%s533 + $0x38] sm:$0xf] %v1448
        %1513 = vst [vmem:[%s533 + $0x3c] sm:$0xf] %v1449
        %1514 = vst [vmem:[%s533 + $0x40] sm:$0xf] %v1450
        %1515 = vst [vmem:[%s533 + $0x44] sm:$0xf] %v1451
        %1516 = vst [vmem:[%s533 + $0x48] sm:$0xf] %v1452
        %1517 = vst [vmem:[%s533 + $0x4c] sm:$0xf] %v1453
        %1518 = vst [vmem:[%s533 + $0x50] sm:$0xf] %v1454
        %1519 = vst [vmem:[%s533 + $0x54] sm:$0xf] %v1455
        %1520 = vst [vmem:[%s533 + $0x58] sm:$0xf] %v1456
        %1521 = vst [vmem:[%s533 + $0x5c] sm:$0xf] %v1457
        %1522 = vst [vmem:[%s533 + $0x60] sm:$0xf] %v1458
        %1523 = vst [vmem:[%s533 + $0x64] sm:$0xf] %v1459
        %1524 = vst [vmem:[%s533 + $0x68] sm:$0xf] %v1460
        %1525 = vst [vmem:[%s533 + $0x6c] sm:$0xf] %v1461
        %1526 = vst [vmem:[%s533 + $0x70] sm:$0xf] %v1462
        %1527 = vst [vmem:[%s533 + $0x74] sm:$0xf] %v1463
        %1528 = vst [vmem:[%s533 + $0x78] sm:$0xf] %v1464
        %1529 = vst [vmem:[%s533 + $0x7c] sm:$0xf] %v1465
        %s1530 = sand.u32 %s93, 1
        %s1531 = sand.u32 %s93, 1
        %s1532 = smul.addr %s1531, 128
        %s1533 = scalar_lea.vmem [#allocation4], %s1532
        %s1534 = sand.u32 %s121, 1
        %s1535 = sand.u32 %s121, 1
        %s1536 = smul.addr %s1535, 128
        %s1537 = scalar_lea.vmem [#allocation5], %s1536
        // Predicated region
        $region105: #{ternary_train_forward.2} parent=95 // pred_check
          %p1538 = pneg %p103
        $region106: #{ternary_train_forward.2} parent=95 // pred_check_branch
          %1540 = sbr.rel (%p1538) target = $region108
        $region107: #{ternary_train_forward.2} parent=95 // pred_region
          %s1541 = smul.u32 32, %s19
          %s1542 = smul.addr %s1541, 2
          %s1543 = sadd.s32 %s20, %s1542
          %s1544 = smul.addr %s1543, 4
          %s1545 = scalar_lea.vmem %s2, %s1544
          // Predicated region
          $region109: #{ternary_train_forward.2} parent=107 // pred_check
            _
          $region110: #{ternary_train_forward.2} parent=107 // pred_check_branch
            %1547 = sbr.rel (0) target = $region112
          $region111: #{ternary_train_forward.2} parent=107 // pred_region
            // Predicated region
            $region113: #{ternary_train_forward.2} parent=111 // pred_check
              _
            $region114: #{ternary_train_forward.2} parent=111 // pred_check_branch
              %1549 = sbr.rel target = $region116
            $region115: #{ternary_train_forward.2} parent=111 // pred_region
              // Predicated region
              $region128: #{ternary_train_forward.2} parent=115 // pred_check
                _
              $region129: #{ternary_train_forward.2} parent=115 // pred_check_branch
                %1626 = sbr.rel (0) target = $region131
              $region130: #{ternary_train_forward.2} parent=115 // pred_region
                loop: start=0, step=1, limit=1
                $region132: #{ternary_train_forward.2} parent=130 // loop_pre_header
                  _
                $region133: #{ternary_train_forward.2} parent=130 // loop_header
                  %s1628 = sphi 0, %s1632
                  %p1629 = scmp.ge.s32.totalorder %s1628, 1
                  %s1633 = sphi %s1533, %s1533
                  %s1634 = sphi %s1545, %s1545
                $region134: #{ternary_train_forward.2} parent=130 // loop_header_branch
                  %1631 = sbr.rel (%p1629) target = $region138
                $region135: #{ternary_train_forward.2} parent=130 // loop_body
                  _
                $region136: #{ternary_train_forward.2} parent=130 // loop_footer
                  %s1632 = sadd.s32 1, %s1628
                $region137: #{ternary_train_forward.2} parent=130 // loop_footer_branch
                  %1627 = sbr.rel target = $region133
                $region138: #{ternary_train_forward.2} parent=130 // loop_exit
                  _
                loop: start=0, step=1, limit=1
                $region139: #{ternary_train_forward.2} parent=130 // loop_pre_header
                  _
                $region140: #{ternary_train_forward.2} parent=130 // loop_header
                  %s1637 = sphi 0, %s1641
                  %p1638 = scmp.ge.s32.totalorder %s1637, 1
                  %s1642 = sphi %s1533, %s1533
                  %s1643 = sphi %s1545, %s1545
                $region141: #{ternary_train_forward.2} parent=130 // loop_header_branch
                  %1640 = sbr.rel (%p1638) target = $region145
                $region142: #{ternary_train_forward.2} parent=130 // loop_body
                  %v1644 = vld [vmem:[%s1642] sm:$0xf]
                  %1645 = vst [vmem:[%s1643] sm:$0xf] %v1644
                  %v1646 = vld [vmem:[%s1642 + $0x4] sm:$0xf]
                  %1647 = vst [vmem:[%s1643 + $0x8] sm:$0xf] %v1646
                  %v1648 = vld [vmem:[%s1642 + $0x8] sm:$0xf]
                  %1649 = vst [vmem:[%s1643 + $0x10] sm:$0xf] %v1648
                  %v1650 = vld [vmem:[%s1642 + $0xc] sm:$0xf]
                  %1651 = vst [vmem:[%s1643 + $0x18] sm:$0xf] %v1650
                  %v1652 = vld [vmem:[%s1642 + $0x10] sm:$0xf]
                  %1653 = vst [vmem:[%s1643 + $0x20] sm:$0xf] %v1652
                  %v1654 = vld [vmem:[%s1642 + $0x14] sm:$0xf]
                  %1655 = vst [vmem:[%s1643 + $0x28] sm:$0xf] %v1654
                  %v1656 = vld [vmem:[%s1642 + $0x18] sm:$0xf]
                  %1657 = vst [vmem:[%s1643 + $0x30] sm:$0xf] %v1656
                  %v1658 = vld [vmem:[%s1642 + $0x1c] sm:$0xf]
                  %1659 = vst [vmem:[%s1643 + $0x38] sm:$0xf] %v1658
                  %v1660 = vld [vmem:[%s1642 + $0x20] sm:$0xf]
                  %1661 = vst [vmem:[%s1643 + $0x40] sm:$0xf] %v1660
                  %v1662 = vld [vmem:[%s1642 + $0x24] sm:$0xf]
                  %1663 = vst [vmem:[%s1643 + $0x48] sm:$0xf] %v1662
                  %v1664 = vld [vmem:[%s1642 + $0x28] sm:$0xf]
                  %1665 = vst [vmem:[%s1643 + $0x50] sm:$0xf] %v1664
                  %v1666 = vld [vmem:[%s1642 + $0x2c] sm:$0xf]
                  %1667 = vst [vmem:[%s1643 + $0x58] sm:$0xf] %v1666
                  %v1668 = vld [vmem:[%s1642 + $0x30] sm:$0xf]
                  %1669 = vst [vmem:[%s1643 + $0x60] sm:$0xf] %v1668
                  %v1670 = vld [vmem:[%s1642 + $0x34] sm:$0xf]
                  %1671 = vst [vmem:[%s1643 + $0x68] sm:$0xf] %v1670
                  %v1672 = vld [vmem:[%s1642 + $0x38] sm:$0xf]
                  %1673 = vst [vmem:[%s1643 + $0x70] sm:$0xf] %v1672
                  %v1674 = vld [vmem:[%s1642 + $0x3c] sm:$0xf]
                  %1675 = vst [vmem:[%s1643 + $0x78] sm:$0xf] %v1674
                  %v1676 = vld [vmem:[%s1642 + $0x40] sm:$0xf]
                  %1677 = vst [vmem:[%s1643 + $0x80] sm:$0xf] %v1676
                  %v1678 = vld [vmem:[%s1642 + $0x44] sm:$0xf]
                  %1679 = vst [vmem:[%s1643 + $0x88] sm:$0xf] %v1678
                  %v1680 = vld [vmem:[%s1642 + $0x48] sm:$0xf]
                  %1681 = vst [vmem:[%s1643 + $0x90] sm:$0xf] %v1680
                  %v1682 = vld [vmem:[%s1642 + $0x4c] sm:$0xf]
                  %1683 = vst [vmem:[%s1643 + $0x98] sm:$0xf] %v1682
                  %v1684 = vld [vmem:[%s1642 + $0x50] sm:$0xf]
                  %1685 = vst [vmem:[%s1643 + $0xa0] sm:$0xf] %v1684
                  %v1686 = vld [vmem:[%s1642 + $0x54] sm:$0xf]
                  %1687 = vst [vmem:[%s1643 + $0xa8] sm:$0xf] %v1686
                  %v1688 = vld [vmem:[%s1642 + $0x58] sm:$0xf]
                  %1689 = vst [vmem:[%s1643 + $0xb0] sm:$0xf] %v1688
                  %v1690 = vld [vmem:[%s1642 + $0x5c] sm:$0xf]
                  %1691 = vst [vmem:[%s1643 + $0xb8] sm:$0xf] %v1690
                  %v1692 = vld [vmem:[%s1642 + $0x60] sm:$0xf]
                  %1693 = vst [vmem:[%s1643 + $0xc0] sm:$0xf] %v1692
                  %v1694 = vld [vmem:[%s1642 + $0x64] sm:$0xf]
                  %1695 = vst [vmem:[%s1643 + $0xc8] sm:$0xf] %v1694
                  %v1696 = vld [vmem:[%s1642 + $0x68] sm:$0xf]
                  %1697 = vst [vmem:[%s1643 + $0xd0] sm:$0xf] %v1696
                  %v1698 = vld [vmem:[%s1642 + $0x6c] sm:$0xf]
                  %1699 = vst [vmem:[%s1643 + $0xd8] sm:$0xf] %v1698
                  %v1700 = vld [vmem:[%s1642 + $0x70] sm:$0xf]
                  %1701 = vst [vmem:[%s1643 + $0xe0] sm:$0xf] %v1700
                  %v1702 = vld [vmem:[%s1642 + $0x74] sm:$0xf]
                  %1703 = vst [vmem:[%s1643 + $0xe8] sm:$0xf] %v1702
                  %v1704 = vld [vmem:[%s1642 + $0x78] sm:$0xf]
                  %1705 = vst [vmem:[%s1643 + $0xf0] sm:$0xf] %v1704
                  %v1706 = vld [vmem:[%s1642 + $0x7c] sm:$0xf]
                  %1707 = vst [vmem:[%s1643 + $0xf8] sm:$0xf] %v1706
                $region143: #{ternary_train_forward.2} parent=130 // loop_footer
                  %s1641 = sadd.s32 1, %s1637
                $region144: #{ternary_train_forward.2} parent=130 // loop_footer_branch
                  %1636 = sbr.rel target = $region140
                $region145: #{ternary_train_forward.2} parent=130 // loop_exit
                  _
              $region131: #{ternary_train_forward.2} parent=115 // pred_fallthru
                _
            $region116: #{ternary_train_forward.2} parent=111 // pred_fallthru
              _
            // Predicated region
            $region117: #{ternary_train_forward.2} parent=111 // pred_check
              _
            $region118: #{ternary_train_forward.2} parent=111 // pred_check_branch
              %1551 = sbr.rel (0) target = $region120
            $region119: #{ternary_train_forward.2} parent=111 // pred_region
              loop: start=0, step=1, limit=1
              $region121: #{ternary_train_forward.2} parent=119 // loop_pre_header
                _
              $region122: #{ternary_train_forward.2} parent=119 // loop_header
                %s1554 = sphi 0, %s1558
                %p1555 = scmp.ge.s32.totalorder %s1554, 1
                %s1559 = sphi %s1533, %s1533
                %s1560 = sphi %s1545, %s1545
              $region123: #{ternary_train_forward.2} parent=119 // loop_header_branch
                %1557 = sbr.rel (%p1555) target = $region127
              $region124: #{ternary_train_forward.2} parent=119 // loop_body
                %v1561 = vld [vmem:[%s1559] sm:$0xf]
                %1562 = vst [vmem:[%s1560] sm:$0xf] %v1561
                %v1563 = vld [vmem:[%s1559 + $0x4] sm:$0xf]
                %1564 = vst [vmem:[%s1560 + $0x8] sm:$0xf] %v1563
                %v1565 = vld [vmem:[%s1559 + $0x8] sm:$0xf]
                %1566 = vst [vmem:[%s1560 + $0x10] sm:$0xf] %v1565
                %v1567 = vld [vmem:[%s1559 + $0xc] sm:$0xf]
                %1568 = vst [vmem:[%s1560 + $0x18] sm:$0xf] %v1567
                %v1569 = vld [vmem:[%s1559 + $0x10] sm:$0xf]
                %1570 = vst [vmem:[%s1560 + $0x20] sm:$0xf] %v1569
                %v1571 = vld [vmem:[%s1559 + $0x14] sm:$0xf]
                %1572 = vst [vmem:[%s1560 + $0x28] sm:$0xf] %v1571
                %v1573 = vld [vmem:[%s1559 + $0x18] sm:$0xf]
                %1574 = vst [vmem:[%s1560 + $0x30] sm:$0xf] %v1573
                %v1575 = vld [vmem:[%s1559 + $0x1c] sm:$0xf]
                %1576 = vst [vmem:[%s1560 + $0x38] sm:$0xf] %v1575
                %v1577 = vld [vmem:[%s1559 + $0x20] sm:$0xf]
                %1578 = vst [vmem:[%s1560 + $0x40] sm:$0xf] %v1577
                %v1579 = vld [vmem:[%s1559 + $0x24] sm:$0xf]
                %1580 = vst [vmem:[%s1560 + $0x48] sm:$0xf] %v1579
                %v1581 = vld [vmem:[%s1559 + $0x28] sm:$0xf]
                %1582 = vst [vmem:[%s1560 + $0x50] sm:$0xf] %v1581
                %v1583 = vld [vmem:[%s1559 + $0x2c] sm:$0xf]
                %1584 = vst [vmem:[%s1560 + $0x58] sm:$0xf] %v1583
                %v1585 = vld [vmem:[%s1559 + $0x30] sm:$0xf]
                %1586 = vst [vmem:[%s1560 + $0x60] sm:$0xf] %v1585
                %v1587 = vld [vmem:[%s1559 + $0x34] sm:$0xf]
                %1588 = vst [vmem:[%s1560 + $0x68] sm:$0xf] %v1587
                %v1589 = vld [vmem:[%s1559 + $0x38] sm:$0xf]
                %1590 = vst [vmem:[%s1560 + $0x70] sm:$0xf] %v1589
                %v1591 = vld [vmem:[%s1559 + $0x3c] sm:$0xf]
                %1592 = vst [vmem:[%s1560 + $0x78] sm:$0xf] %v1591
                %v1593 = vld [vmem:[%s1559 + $0x40] sm:$0xf]
                %1594 = vst [vmem:[%s1560 + $0x80] sm:$0xf] %v1593
                %v1595 = vld [vmem:[%s1559 + $0x44] sm:$0xf]
                %1596 = vst [vmem:[%s1560 + $0x88] sm:$0xf] %v1595
                %v1597 = vld [vmem:[%s1559 + $0x48] sm:$0xf]
                %1598 = vst [vmem:[%s1560 + $0x90] sm:$0xf] %v1597
                %v1599 = vld [vmem:[%s1559 + $0x4c] sm:$0xf]
                %1600 = vst [vmem:[%s1560 + $0x98] sm:$0xf] %v1599
                %v1601 = vld [vmem:[%s1559 + $0x50] sm:$0xf]
                %1602 = vst [vmem:[%s1560 + $0xa0] sm:$0xf] %v1601
                %v1603 = vld [vmem:[%s1559 + $0x54] sm:$0xf]
                %1604 = vst [vmem:[%s1560 + $0xa8] sm:$0xf] %v1603
                %v1605 = vld [vmem:[%s1559 + $0x58] sm:$0xf]
                %1606 = vst [vmem:[%s1560 + $0xb0] sm:$0xf] %v1605
                %v1607 = vld [vmem:[%s1559 + $0x5c] sm:$0xf]
                %1608 = vst [vmem:[%s1560 + $0xb8] sm:$0xf] %v1607
                %v1609 = vld [vmem:[%s1559 + $0x60] sm:$0xf]
                %1610 = vst [vmem:[%s1560 + $0xc0] sm:$0xf] %v1609
                %v1611 = vld [vmem:[%s1559 + $0x64] sm:$0xf]
                %1612 = vst [vmem:[%s1560 + $0xc8] sm:$0xf] %v1611
                %v1613 = vld [vmem:[%s1559 + $0x68] sm:$0xf]
                %1614 = vst [vmem:[%s1560 + $0xd0] sm:$0xf] %v1613
                %v1615 = vld [vmem:[%s1559 + $0x6c] sm:$0xf]
                %1616 = vst [vmem:[%s1560 + $0xd8] sm:$0xf] %v1615
                %v1617 = vld [vmem:[%s1559 + $0x70] sm:$0xf]
                %1618 = vst [vmem:[%s1560 + $0xe0] sm:$0xf] %v1617
                %v1619 = vld [vmem:[%s1559 + $0x74] sm:$0xf]
                %1620 = vst [vmem:[%s1560 + $0xe8] sm:$0xf] %v1619
                %v1621 = vld [vmem:[%s1559 + $0x78] sm:$0xf]
                %1622 = vst [vmem:[%s1560 + $0xf0] sm:$0xf] %v1621
                %v1623 = vld [vmem:[%s1559 + $0x7c] sm:$0xf]
                %1624 = vst [vmem:[%s1560 + $0xf8] sm:$0xf] %v1623
              $region125: #{ternary_train_forward.2} parent=119 // loop_footer
                %s1558 = sadd.s32 1, %s1554
              $region126: #{ternary_train_forward.2} parent=119 // loop_footer_branch
                %1553 = sbr.rel target = $region122
              $region127: #{ternary_train_forward.2} parent=119 // loop_exit
                _
            $region120: #{ternary_train_forward.2} parent=111 // pred_fallthru
              _
          $region112: #{ternary_train_forward.2} parent=107 // pred_fallthru
            _
          %1708 = vnop
        $region108: #{ternary_train_forward.2} parent=95 // pred_fallthru
          _
        // Predicated region
        $region146: #{ternary_train_forward.2} parent=95 // pred_check
          %p1709 = pneg %p131
        $region147: #{ternary_train_forward.2} parent=95 // pred_check_branch
          %1711 = sbr.rel (%p1709) target = $region149
        $region148: #{ternary_train_forward.2} parent=95 // pred_region
          %s1712 = smul.u32 32, %s19
          %s1713 = smul.addr %s1712, 2
          %s1714 = sadd.s32 %s20, %s1713
          %s1715 = smul.addr %s1714, 4
          %s1716 = scalar_lea.vmem %s3, %s1715
          // Predicated region
          $region150: #{ternary_train_forward.2} parent=148 // pred_check
            _
          $region151: #{ternary_train_forward.2} parent=148 // pred_check_branch
            %1718 = sbr.rel (0) target = $region153
          $region152: #{ternary_train_forward.2} parent=148 // pred_region
            // Predicated region
            $region154: #{ternary_train_forward.2} parent=152 // pred_check
              _
            $region155: #{ternary_train_forward.2} parent=152 // pred_check_branch
              %1720 = sbr.rel target = $region157
            $region156: #{ternary_train_forward.2} parent=152 // pred_region
              // Predicated region
              $region169: #{ternary_train_forward.2} parent=156 // pred_check
                _
              $region170: #{ternary_train_forward.2} parent=156 // pred_check_branch
                %1797 = sbr.rel (0) target = $region172
              $region171: #{ternary_train_forward.2} parent=156 // pred_region
                loop: start=0, step=1, limit=1
                $region173: #{ternary_train_forward.2} parent=171 // loop_pre_header
                  _
                $region174: #{ternary_train_forward.2} parent=171 // loop_header
                  %s1799 = sphi 0, %s1803
                  %p1800 = scmp.ge.s32.totalorder %s1799, 1
                  %s1804 = sphi %s1537, %s1537
                  %s1805 = sphi %s1716, %s1716
                $region175: #{ternary_train_forward.2} parent=171 // loop_header_branch
                  %1802 = sbr.rel (%p1800) target = $region179
                $region176: #{ternary_train_forward.2} parent=171 // loop_body
                  _
                $region177: #{ternary_train_forward.2} parent=171 // loop_footer
                  %s1803 = sadd.s32 1, %s1799
                $region178: #{ternary_train_forward.2} parent=171 // loop_footer_branch
                  %1798 = sbr.rel target = $region174
                $region179: #{ternary_train_forward.2} parent=171 // loop_exit
                  _
                loop: start=0, step=1, limit=1
                $region180: #{ternary_train_forward.2} parent=171 // loop_pre_header
                  _
                $region181: #{ternary_train_forward.2} parent=171 // loop_header
                  %s1808 = sphi 0, %s1812
                  %p1809 = scmp.ge.s32.totalorder %s1808, 1
                  %s1813 = sphi %s1537, %s1537
                  %s1814 = sphi %s1716, %s1716
                $region182: #{ternary_train_forward.2} parent=171 // loop_header_branch
                  %1811 = sbr.rel (%p1809) target = $region186
                $region183: #{ternary_train_forward.2} parent=171 // loop_body
                  %v1815 = vld [vmem:[%s1813] sm:$0xf]
                  %1816 = vst [vmem:[%s1814] sm:$0xf] %v1815
                  %v1817 = vld [vmem:[%s1813 + $0x4] sm:$0xf]
                  %1818 = vst [vmem:[%s1814 + $0x8] sm:$0xf] %v1817
                  %v1819 = vld [vmem:[%s1813 + $0x8] sm:$0xf]
                  %1820 = vst [vmem:[%s1814 + $0x10] sm:$0xf] %v1819
                  %v1821 = vld [vmem:[%s1813 + $0xc] sm:$0xf]
                  %1822 = vst [vmem:[%s1814 + $0x18] sm:$0xf] %v1821
                  %v1823 = vld [vmem:[%s1813 + $0x10] sm:$0xf]
                  %1824 = vst [vmem:[%s1814 + $0x20] sm:$0xf] %v1823
                  %v1825 = vld [vmem:[%s1813 + $0x14] sm:$0xf]
                  %1826 = vst [vmem:[%s1814 + $0x28] sm:$0xf] %v1825
                  %v1827 = vld [vmem:[%s1813 + $0x18] sm:$0xf]
                  %1828 = vst [vmem:[%s1814 + $0x30] sm:$0xf] %v1827
                  %v1829 = vld [vmem:[%s1813 + $0x1c] sm:$0xf]
                  %1830 = vst [vmem:[%s1814 + $0x38] sm:$0xf] %v1829
                  %v1831 = vld [vmem:[%s1813 + $0x20] sm:$0xf]
                  %1832 = vst [vmem:[%s1814 + $0x40] sm:$0xf] %v1831
                  %v1833 = vld [vmem:[%s1813 + $0x24] sm:$0xf]
                  %1834 = vst [vmem:[%s1814 + $0x48] sm:$0xf] %v1833
                  %v1835 = vld [vmem:[%s1813 + $0x28] sm:$0xf]
                  %1836 = vst [vmem:[%s1814 + $0x50] sm:$0xf] %v1835
                  %v1837 = vld [vmem:[%s1813 + $0x2c] sm:$0xf]
                  %1838 = vst [vmem:[%s1814 + $0x58] sm:$0xf] %v1837
                  %v1839 = vld [vmem:[%s1813 + $0x30] sm:$0xf]
                  %1840 = vst [vmem:[%s1814 + $0x60] sm:$0xf] %v1839
                  %v1841 = vld [vmem:[%s1813 + $0x34] sm:$0xf]
                  %1842 = vst [vmem:[%s1814 + $0x68] sm:$0xf] %v1841
                  %v1843 = vld [vmem:[%s1813 + $0x38] sm:$0xf]
                  %1844 = vst [vmem:[%s1814 + $0x70] sm:$0xf] %v1843
                  %v1845 = vld [vmem:[%s1813 + $0x3c] sm:$0xf]
                  %1846 = vst [vmem:[%s1814 + $0x78] sm:$0xf] %v1845
                  %v1847 = vld [vmem:[%s1813 + $0x40] sm:$0xf]
                  %1848 = vst [vmem:[%s1814 + $0x80] sm:$0xf] %v1847
                  %v1849 = vld [vmem:[%s1813 + $0x44] sm:$0xf]
                  %1850 = vst [vmem:[%s1814 + $0x88] sm:$0xf] %v1849
                  %v1851 = vld [vmem:[%s1813 + $0x48] sm:$0xf]
                  %1852 = vst [vmem:[%s1814 + $0x90] sm:$0xf] %v1851
                  %v1853 = vld [vmem:[%s1813 + $0x4c] sm:$0xf]
                  %1854 = vst [vmem:[%s1814 + $0x98] sm:$0xf] %v1853
                  %v1855 = vld [vmem:[%s1813 + $0x50] sm:$0xf]
                  %1856 = vst [vmem:[%s1814 + $0xa0] sm:$0xf] %v1855
                  %v1857 = vld [vmem:[%s1813 + $0x54] sm:$0xf]
                  %1858 = vst [vmem:[%s1814 + $0xa8] sm:$0xf] %v1857
                  %v1859 = vld [vmem:[%s1813 + $0x58] sm:$0xf]
                  %1860 = vst [vmem:[%s1814 + $0xb0] sm:$0xf] %v1859
                  %v1861 = vld [vmem:[%s1813 + $0x5c] sm:$0xf]
                  %1862 = vst [vmem:[%s1814 + $0xb8] sm:$0xf] %v1861
                  %v1863 = vld [vmem:[%s1813 + $0x60] sm:$0xf]
                  %1864 = vst [vmem:[%s1814 + $0xc0] sm:$0xf] %v1863
                  %v1865 = vld [vmem:[%s1813 + $0x64] sm:$0xf]
                  %1866 = vst [vmem:[%s1814 + $0xc8] sm:$0xf] %v1865
                  %v1867 = vld [vmem:[%s1813 + $0x68] sm:$0xf]
                  %1868 = vst [vmem:[%s1814 + $0xd0] sm:$0xf] %v1867
                  %v1869 = vld [vmem:[%s1813 + $0x6c] sm:$0xf]
                  %1870 = vst [vmem:[%s1814 + $0xd8] sm:$0xf] %v1869
                  %v1871 = vld [vmem:[%s1813 + $0x70] sm:$0xf]
                  %1872 = vst [vmem:[%s1814 + $0xe0] sm:$0xf] %v1871
                  %v1873 = vld [vmem:[%s1813 + $0x74] sm:$0xf]
                  %1874 = vst [vmem:[%s1814 + $0xe8] sm:$0xf] %v1873
                  %v1875 = vld [vmem:[%s1813 + $0x78] sm:$0xf]
                  %1876 = vst [vmem:[%s1814 + $0xf0] sm:$0xf] %v1875
                  %v1877 = vld [vmem:[%s1813 + $0x7c] sm:$0xf]
                  %1878 = vst [vmem:[%s1814 + $0xf8] sm:$0xf] %v1877
                $region184: #{ternary_train_forward.2} parent=171 // loop_footer
                  %s1812 = sadd.s32 1, %s1808
                $region185: #{ternary_train_forward.2} parent=171 // loop_footer_branch
                  %1807 = sbr.rel target = $region181
                $region186: #{ternary_train_forward.2} parent=171 // loop_exit
                  _
              $region172: #{ternary_train_forward.2} parent=156 // pred_fallthru
                _
            $region157: #{ternary_train_forward.2} parent=152 // pred_fallthru
              _
            // Predicated region
            $region158: #{ternary_train_forward.2} parent=152 // pred_check
              _
            $region159: #{ternary_train_forward.2} parent=152 // pred_check_branch
              %1722 = sbr.rel (0) target = $region161
            $region160: #{ternary_train_forward.2} parent=152 // pred_region
              loop: start=0, step=1, limit=1
              $region162: #{ternary_train_forward.2} parent=160 // loop_pre_header
                _
              $region163: #{ternary_train_forward.2} parent=160 // loop_header
                %s1725 = sphi 0, %s1729
                %p1726 = scmp.ge.s32.totalorder %s1725, 1
                %s1730 = sphi %s1537, %s1537
                %s1731 = sphi %s1716, %s1716
              $region164: #{ternary_train_forward.2} parent=160 // loop_header_branch
                %1728 = sbr.rel (%p1726) target = $region168
              $region165: #{ternary_train_forward.2} parent=160 // loop_body
                %v1732 = vld [vmem:[%s1730] sm:$0xf]
                %1733 = vst [vmem:[%s1731] sm:$0xf] %v1732
                %v1734 = vld [vmem:[%s1730 + $0x4] sm:$0xf]
                %1735 = vst [vmem:[%s1731 + $0x8] sm:$0xf] %v1734
                %v1736 = vld [vmem:[%s1730 + $0x8] sm:$0xf]
                %1737 = vst [vmem:[%s1731 + $0x10] sm:$0xf] %v1736
                %v1738 = vld [vmem:[%s1730 + $0xc] sm:$0xf]
                %1739 = vst [vmem:[%s1731 + $0x18] sm:$0xf] %v1738
                %v1740 = vld [vmem:[%s1730 + $0x10] sm:$0xf]
                %1741 = vst [vmem:[%s1731 + $0x20] sm:$0xf] %v1740
                %v1742 = vld [vmem:[%s1730 + $0x14] sm:$0xf]
                %1743 = vst [vmem:[%s1731 + $0x28] sm:$0xf] %v1742
                %v1744 = vld [vmem:[%s1730 + $0x18] sm:$0xf]
                %1745 = vst [vmem:[%s1731 + $0x30] sm:$0xf] %v1744
                %v1746 = vld [vmem:[%s1730 + $0x1c] sm:$0xf]
                %1747 = vst [vmem:[%s1731 + $0x38] sm:$0xf] %v1746
                %v1748 = vld [vmem:[%s1730 + $0x20] sm:$0xf]
                %1749 = vst [vmem:[%s1731 + $0x40] sm:$0xf] %v1748
                %v1750 = vld [vmem:[%s1730 + $0x24] sm:$0xf]
                %1751 = vst [vmem:[%s1731 + $0x48] sm:$0xf] %v1750
                %v1752 = vld [vmem:[%s1730 + $0x28] sm:$0xf]
                %1753 = vst [vmem:[%s1731 + $0x50] sm:$0xf] %v1752
                %v1754 = vld [vmem:[%s1730 + $0x2c] sm:$0xf]
                %1755 = vst [vmem:[%s1731 + $0x58] sm:$0xf] %v1754
                %v1756 = vld [vmem:[%s1730 + $0x30] sm:$0xf]
                %1757 = vst [vmem:[%s1731 + $0x60] sm:$0xf] %v1756
                %v1758 = vld [vmem:[%s1730 + $0x34] sm:$0xf]
                %1759 = vst [vmem:[%s1731 + $0x68] sm:$0xf] %v1758
                %v1760 = vld [vmem:[%s1730 + $0x38] sm:$0xf]
                %1761 = vst [vmem:[%s1731 + $0x70] sm:$0xf] %v1760
                %v1762 = vld [vmem:[%s1730 + $0x3c] sm:$0xf]
                %1763 = vst [vmem:[%s1731 + $0x78] sm:$0xf] %v1762
                %v1764 = vld [vmem:[%s1730 + $0x40] sm:$0xf]
                %1765 = vst [vmem:[%s1731 + $0x80] sm:$0xf] %v1764
                %v1766 = vld [vmem:[%s1730 + $0x44] sm:$0xf]
                %1767 = vst [vmem:[%s1731 + $0x88] sm:$0xf] %v1766
                %v1768 = vld [vmem:[%s1730 + $0x48] sm:$0xf]
                %1769 = vst [vmem:[%s1731 + $0x90] sm:$0xf] %v1768
                %v1770 = vld [vmem:[%s1730 + $0x4c] sm:$0xf]
                %1771 = vst [vmem:[%s1731 + $0x98] sm:$0xf] %v1770
                %v1772 = vld [vmem:[%s1730 + $0x50] sm:$0xf]
                %1773 = vst [vmem:[%s1731 + $0xa0] sm:$0xf] %v1772
                %v1774 = vld [vmem:[%s1730 + $0x54] sm:$0xf]
                %1775 = vst [vmem:[%s1731 + $0xa8] sm:$0xf] %v1774
                %v1776 = vld [vmem:[%s1730 + $0x58] sm:$0xf]
                %1777 = vst [vmem:[%s1731 + $0xb0] sm:$0xf] %v1776
                %v1778 = vld [vmem:[%s1730 + $0x5c] sm:$0xf]
                %1779 = vst [vmem:[%s1731 + $0xb8] sm:$0xf] %v1778
                %v1780 = vld [vmem:[%s1730 + $0x60] sm:$0xf]
                %1781 = vst [vmem:[%s1731 + $0xc0] sm:$0xf] %v1780
                %v1782 = vld [vmem:[%s1730 + $0x64] sm:$0xf]
                %1783 = vst [vmem:[%s1731 + $0xc8] sm:$0xf] %v1782
                %v1784 = vld [vmem:[%s1730 + $0x68] sm:$0xf]
                %1785 = vst [vmem:[%s1731 + $0xd0] sm:$0xf] %v1784
                %v1786 = vld [vmem:[%s1730 + $0x6c] sm:$0xf]
                %1787 = vst [vmem:[%s1731 + $0xd8] sm:$0xf] %v1786
                %v1788 = vld [vmem:[%s1730 + $0x70] sm:$0xf]
                %1789 = vst [vmem:[%s1731 + $0xe0] sm:$0xf] %v1788
                %v1790 = vld [vmem:[%s1730 + $0x74] sm:$0xf]
                %1791 = vst [vmem:[%s1731 + $0xe8] sm:$0xf] %v1790
                %v1792 = vld [vmem:[%s1730 + $0x78] sm:$0xf]
                %1793 = vst [vmem:[%s1731 + $0xf0] sm:$0xf] %v1792
                %v1794 = vld [vmem:[%s1730 + $0x7c] sm:$0xf]
                %1795 = vst [vmem:[%s1731 + $0xf8] sm:$0xf] %v1794
              $region166: #{ternary_train_forward.2} parent=160 // loop_footer
                %s1729 = sadd.s32 1, %s1725
              $region167: #{ternary_train_forward.2} parent=160 // loop_footer_branch
                %1724 = sbr.rel target = $region163
              $region168: #{ternary_train_forward.2} parent=160 // loop_exit
                _
            $region161: #{ternary_train_forward.2} parent=152 // pred_fallthru
              _
          $region153: #{ternary_train_forward.2} parent=148 // pred_fallthru
            _
          %1879 = vnop
        $region149: #{ternary_train_forward.2} parent=95 // pred_fallthru
          _
      $region96: #{ternary_train_forward.2} parent=5 // pred_fallthru
        _
      %p1880 = scmp.le.s32.totalorder 2, %s10
      // Predicated region
      $region187: #{ternary_train_forward.2} parent=5 // pred_check
        %p1881 = pneg %p1880
      $region188: #{ternary_train_forward.2} parent=5 // pred_check_branch
        %1883 = sbr.rel (%p1881) target = $region190
      $region189: #{ternary_train_forward.2} parent=5 // pred_region
        %s1884 = ssub.s32 %s10, 2
        // Predicated region
        $region191: #{ternary_train_forward.2} parent=189 // pred_check
          %p1885 = pneg %p109
        $region192: #{ternary_train_forward.2} parent=189 // pred_check_branch
          %1887 = sbr.rel (%p1885) target = $region194
        $region193: #{ternary_train_forward.2} parent=189 // pred_region
          %s1888 = sand.u32 %s94, 1
          %s1889 = sand.u32 %s94, 1
          %s1890 = smul.addr %s1889, 128
          %s1891 = scalar_lea.vmem [#allocation4], %s1890
        $region194: #{ternary_train_forward.2} parent=189 // pred_fallthru
          _
        // Predicated region
        $region195: #{ternary_train_forward.2} parent=189 // pred_check
          %p1892 = pneg %p137
        $region196: #{ternary_train_forward.2} parent=189 // pred_check_branch
          %1894 = sbr.rel (%p1892) target = $region198
        $region197: #{ternary_train_forward.2} parent=189 // pred_region
          %s1895 = sand.u32 %s122, 1
          %s1896 = sand.u32 %s122, 1
          %s1897 = smul.addr %s1896, 128
          %s1898 = scalar_lea.vmem [#allocation5], %s1897
        $region198: #{ternary_train_forward.2} parent=189 // pred_fallthru
          _
      $region190: #{ternary_train_forward.2} parent=5 // pred_fallthru
        _
    $region6: #{ternary_train_forward.2} parent=1 // loop_footer
      %s14 = sadd.s32 1, %s10
    $region7: #{ternary_train_forward.2} parent=1 // loop_footer_branch
      %9 = sbr.rel target = $region3
    $region8: #{ternary_train_forward.2} parent=1 // loop_exit
      _

// kernel: ternary_train_forward.3
$region0: #{ternary_train_forward.3}
  #allocation0 [shape = 'u32[]', space=smem, size = 0x4, offset = 0x4, fixed_abs, tag = 'smem constant byte address 0x4 - core index']
  #allocation1 [shape = 'u32[144,128]{1,0:T(1,128)}', space=vmem, size = 0x12000, scoped, tag = 'internal scratch']
  #allocation2 [shape = 'f32[128,128]{1,0:T(8,128)}', space=vmem, size = 0x10000, scoped, tag = 'scratch operand']
  #allocation3 [shape = 'f32[128,128]{1,0:T(8,128)}', space=vmem, size = 0x10000, scoped, tag = 'scratch operand']
  %s0 = inlined_call_operand.vmem [shape: bf16[256,512], index: 0, kind: input, shape index: {}]
  %s1 = inlined_call_operand.vmem [shape: bf16[512,256], index: 1, kind: input, shape index: {}]
  %s2 = inlined_call_operand.vmem [shape: bf16[512,256], index: 2, kind: input, shape index: {}]
  %s3 = inlined_call_operand.vmem [shape: f32[1,256], index: 3, kind: input, shape index: {}]
  %s4 = inlined_call_operand.vmem [shape: f32[1,256], index: 4, kind: input, shape index: {}]
  %s5 = inlined_call_operand.vmem [shape: f32[256,256], index: 5, kind: input, shape index: {}]
  %s6 = inlined_call_operand.hbm [shape: f32[256,256], index: 6, kind: output, shape index: {}]
  %s7 = sld [smem:[#allocation0]]
  $region223: #{ternary_train_forward.3} parent=0
    _
  %s9 = ssub.s32 1, %s7
  %s10 = scalar_select 0, %s9, %s7
  $region1: #{ternary_train_forward.3} parent=0
    #allocation4 [shape = 'u8[131072]{0}', space=vmem, size = 0x20000, scoped, tag = 'input window, operand 0']
    #allocation5 [shape = 'u8[131072]{0}', space=vmem, size = 0x20000, scoped, tag = 'input window, operand 1']
    #allocation6 [shape = 'u8[131072]{0}', space=vmem, size = 0x20000, scoped, tag = 'input window, operand 2']
    #allocation7 [shape = 'u8[131072]{0}', space=vmem, size = 0x20000, scoped, tag = 'input window, operand 5']
    #allocation8 [shape = 'u8[131072]{0}', space=vmem, size = 0x20000, scoped, tag = 'output window, operand 0']
    #allocation9 [shape = 's32[2]{0}', space=sflag, size = 0x8, scoped, tag = 'scoped memory for ternary_train_forward.3']
    %11 = vsyncpa [#allocation9], 0
    %s12 = scalar_lea.sflag [#allocation9], 1
    %13 = vsyncpa %s12, 0
    loop: start=0, step=1, limit=10
    $region2: #{ternary_train_forward.3} parent=1 // loop_pre_header
      _
    $region3: #{ternary_train_forward.3} parent=1 // loop_header
      %s15 = sphi 0, %s19
      %p16 = scmp.ge.s32.totalorder %s15, 10
      %s22 = sphi 0, %s41
      %s23 = sphi 0, %s37
      %s24 = sphi 0, %s33
      %s25 = sphi 0, %s22
      %s26 = sphi 0, %s23
      %s27 = sphi 0, %s24
      %s28 = sphi 0, %s25
      %s29 = sphi 0, %s26
      %s30 = sphi 0, %s27
      %s46 = sphi 0, %s48
      %s49 = sphi 0, %s46
      %s50 = sphi 0, %s49
      %s66 = sphi 0, %s50
      %s74 = sphi 0, %s76
      %s77 = sphi 0, %s74
      %s78 = sphi 0, %s77
      %s94 = sphi 0, %s78
      %s102 = sphi 0, %s104
      %s105 = sphi 0, %s102
      %s106 = sphi 0, %s105
      %s122 = sphi 0, %s106
      %s128 = sphi 0, %s130
      %s131 = sphi 0, %s128
      %s132 = sphi 0, %s131
      %s148 = sphi 0, %s132
      %s154 = sphi 0, %s156
      %s157 = sphi 0, %s154
      %s158 = sphi 0, %s157
      %s174 = sphi 0, %s158
      %s182 = sphi 0, %s184
      %s185 = sphi 0, %s182
      %s186 = sphi 0, %s185
      %s202 = sphi 0, %s186
      %s210 = sphi 0, %s212
      %s213 = sphi 0, %s210
      %s214 = sphi 0, %s213
      %s230 = sphi 0, %s214
    $region4: #{ternary_train_forward.3} parent=1 // loop_header_branch
      %18 = sbr.rel (%p16) target = $region8
    $region5: #{ternary_train_forward.3} parent=1 // loop_body
      %s20 = ssub.s32 %s15, 1
      %s21 = ssub.s32 %s15, 2
      %s31 = sadd.s32 1, %s24
      %p32 = scmp.ge.s32.totalorder %s31, 2
      %s33 = scalar_select %p32, 0, %s31
      %s34 = sadd.s32 1, %s23
      %s35 = scalar_select %p32, %s34, %s23
      %p36 = scmp.ge.s32.totalorder %s35, 2
      %s37 = scalar_select %p36, 0, %s35
      %s38 = sadd.s32 1, %s22
      %s39 = scalar_select %p36, %s38, %s22
      %p40 = scmp.ge.s32.totalorder %s39, 2
      %s41 = scalar_select %p40, 0, %s39
      %s42 = ssub.s32 %s22, %s41
      %s43 = ssub.s32 %s24, %s33
      %s44 = sor.u32 %s42, %s43
      %p45 = scmp.eq.s32.totalorder %s44, 0
      %s47 = sadd.s32 %s46, 1
      %s48 = scalar_select %p45, %s46, %s47
      %p51 = pneg %p45
      %p52 = scmp.eq.s32.totalorder %s15, 7
      %p53 = por %p51, %p52
      %p54 = scmp.ne.s32.totalorder %s46, %s49
      %p55 = scmp.eq.s32.totalorder %s15, 0
      %p56 = por %p54, %p55
      %p57 = scmp.ne.s32.totalorder %s46, %s49
      %p58 = scmp.eq.s32.totalorder %s20, 7
      %p59 = por %p57, %p58
      %p60 = scmp.ne.s32.totalorder %s49, %s50
      %p61 = scmp.eq.s32.totalorder %s20, 0
      %p62 = por %p60, %p61
      %p63 = scmp.ne.s32.totalorder %s49, %s50
      %p64 = scmp.eq.s32.totalorder %s21, 7
      %p65 = por %p63, %p64
      %p67 = scmp.ne.s32.totalorder %s50, %s66
      %p68 = scmp.eq.s32.totalorder %s21, 0
      %p69 = por %p67, %p68
      %s70 = ssub.s32 %s24, %s33
      %s71 = ssub.s32 %s23, %s37
      %s72 = sor.u32 %s70, %s71
      %p73 = scmp.eq.s32.totalorder %s72, 0
      %s75 = sadd.s32 %s74, 1
      %s76 = scalar_select %p73, %s74, %s75
      %p79 = pneg %p73
      %p80 = scmp.eq.s32.totalorder %s15, 7
      %p81 = por %p79, %p80
      %p82 = scmp.ne.s32.totalorder %s74, %s77
      %p83 = scmp.eq.s32.totalorder %s15, 0
      %p84 = por %p82, %p83
      %p85 = scmp.ne.s32.totalorder %s74, %s77
      %p86 = scmp.eq.s32.totalorder %s20, 7
      %p87 = por %p85, %p86
      %p88 = scmp.ne.s32.totalorder %s77, %s78
      %p89 = scmp.eq.s32.totalorder %s20, 0
      %p90 = por %p88, %p89
      %p91 = scmp.ne.s32.totalorder %s77, %s78
      %p92 = scmp.eq.s32.totalorder %s21, 7
      %p93 = por %p91, %p92
      %p95 = scmp.ne.s32.totalorder %s78, %s94
      %p96 = scmp.eq.s32.totalorder %s21, 0
      %p97 = por %p95, %p96
      %s98 = ssub.s32 %s24, %s33
      %s99 = ssub.s32 %s23, %s37
      %s100 = sor.u32 %s98, %s99
      %p101 = scmp.eq.s32.totalorder %s100, 0
      %s103 = sadd.s32 %s102, 1
      %s104 = scalar_select %p101, %s102, %s103
      %p107 = pneg %p101
      %p108 = scmp.eq.s32.totalorder %s15, 7
      %p109 = por %p107, %p108
      %p110 = scmp.ne.s32.totalorder %s102, %s105
      %p111 = scmp.eq.s32.totalorder %s15, 0
      %p112 = por %p110, %p111
      %p113 = scmp.ne.s32.totalorder %s102, %s105
      %p114 = scmp.eq.s32.totalorder %s20, 7
      %p115 = por %p113, %p114
      %p116 = scmp.ne.s32.totalorder %s105, %s106
      %p117 = scmp.eq.s32.totalorder %s20, 0
      %p118 = por %p116, %p117
      %p119 = scmp.ne.s32.totalorder %s105, %s106
      %p120 = scmp.eq.s32.totalorder %s21, 7
      %p121 = por %p119, %p120
      %p123 = scmp.ne.s32.totalorder %s106, %s122
      %p124 = scmp.eq.s32.totalorder %s21, 0
      %p125 = por %p123, %p124
      %s126 = ssub.s32 %s23, %s37
      %p127 = scmp.eq.s32.totalorder %s126, 0
      %s129 = sadd.s32 %s128, 1
      %s130 = scalar_select %p127, %s128, %s129
      %p133 = pneg %p127
      %p134 = scmp.eq.s32.totalorder %s15, 7
      %p135 = por %p133, %p134
      %p136 = scmp.ne.s32.totalorder %s128, %s131
      %p137 = scmp.eq.s32.totalorder %s15, 0
      %p138 = por %p136, %p137
      %p139 = scmp.ne.s32.totalorder %s128, %s131
      %p140 = scmp.eq.s32.totalorder %s20, 7
      %p141 = por %p139, %p140
      %p142 = scmp.ne.s32.totalorder %s131, %s132
      %p143 = scmp.eq.s32.totalorder %s20, 0
      %p144 = por %p142, %p143
      %p145 = scmp.ne.s32.totalorder %s131, %s132
      %p146 = scmp.eq.s32.totalorder %s21, 7
      %p147 = por %p145, %p146
      %p149 = scmp.ne.s32.totalorder %s132, %s148
      %p150 = scmp.eq.s32.totalorder %s21, 0
      %p151 = por %p149, %p150
      %s152 = ssub.s32 %s23, %s37
      %p153 = scmp.eq.s32.totalorder %s152, 0
      %s155 = sadd.s32 %s154, 1
      %s156 = scalar_select %p153, %s154, %s155
      %p159 = pneg %p153
      %p160 = scmp.eq.s32.totalorder %s15, 7
      %p161 = por %p159, %p160
      %p162 = scmp.ne.s32.totalorder %s154, %s157
      %p163 = scmp.eq.s32.totalorder %s15, 0
      %p164 = por %p162, %p163
      %p165 = scmp.ne.s32.totalorder %s154, %s157
      %p166 = scmp.eq.s32.totalorder %s20, 7
      %p167 = por %p165, %p166
      %p168 = scmp.ne.s32.totalorder %s157, %s158
      %p169 = scmp.eq.s32.totalorder %s20, 0
      %p170 = por %p168, %p169
      %p171 = scmp.ne.s32.totalorder %s157, %s158
      %p172 = scmp.eq.s32.totalorder %s21, 7
      %p173 = por %p171, %p172
      %p175 = scmp.ne.s32.totalorder %s158, %s174
      %p176 = scmp.eq.s32.totalorder %s21, 0
      %p177 = por %p175, %p176
      %s178 = ssub.s32 %s22, %s41
      %s179 = ssub.s32 %s23, %s37
      %s180 = sor.u32 %s178, %s179
      %p181 = scmp.eq.s32.totalorder %s180, 0
      %s183 = sadd.s32 %s182, 1
      %s184 = scalar_select %p181, %s182, %s183
      %p187 = pneg %p181
      %p188 = scmp.eq.s32.totalorder %s15, 7
      %p189 = por %p187, %p188
      %p190 = scmp.ne.s32.totalorder %s182, %s185
      %p191 = scmp.eq.s32.totalorder %s15, 0
      %p192 = por %p190, %p191
      %p193 = scmp.ne.s32.totalorder %s182, %s185
      %p194 = scmp.eq.s32.totalorder %s20, 7
      %p195 = por %p193, %p194
      %p196 = scmp.ne.s32.totalorder %s185, %s186
      %p197 = scmp.eq.s32.totalorder %s20, 0
      %p198 = por %p196, %p197
      %p199 = scmp.ne.s32.totalorder %s185, %s186
      %p200 = scmp.eq.s32.totalorder %s21, 7
      %p201 = por %p199, %p200
      %p203 = scmp.ne.s32.totalorder %s186, %s202
      %p204 = scmp.eq.s32.totalorder %s21, 0
      %p205 = por %p203, %p204
      %s206 = ssub.s32 %s22, %s41
      %s207 = ssub.s32 %s23, %s37
      %s208 = sor.u32 %s206, %s207
      %p209 = scmp.eq.s32.totalorder %s208, 0
      %s211 = sadd.s32 %s210, 1
      %s212 = scalar_select %p209, %s210, %s211
      %p215 = pneg %p209
      %p216 = scmp.eq.s32.totalorder %s15, 7
      %p217 = por %p215, %p216
      %p218 = scmp.ne.s32.totalorder %s210, %s213
      %p219 = scmp.eq.s32.totalorder %s15, 0
      %p220 = por %p218, %p219
      %p221 = scmp.ne.s32.totalorder %s210, %s213
      %p222 = scmp.eq.s32.totalorder %s20, 7
      %p223 = por %p221, %p222
      %p224 = scmp.ne.s32.totalorder %s213, %s214
      %p225 = scmp.eq.s32.totalorder %s20, 0
      %p226 = por %p224, %p225
      %p227 = scmp.ne.s32.totalorder %s213, %s214
      %p228 = scmp.eq.s32.totalorder %s21, 7
      %p229 = por %p227, %p228
      %p231 = scmp.ne.s32.totalorder %s214, %s230
      %p232 = scmp.eq.s32.totalorder %s21, 0
      %p233 = por %p231, %p232
      %p234 = scmp.le.s32.totalorder 1, %s15
      %p235 = scmp.lt.s32.totalorder %s15, 9
      %p236 = pnand %p234, %p235
      %p237 = pneg %p236
      // Predicated region
      $region9: #{ternary_train_forward.3} parent=5 // pred_check
        _
      $region10: #{ternary_train_forward.3} parent=5 // pred_check_branch
        %239 = sbr.rel (%p236) target = $region12
      $region11: #{ternary_train_forward.3} parent=5 // pred_region
        %s240 = ssub.s32 %s15, 1
      $region12: #{ternary_train_forward.3} parent=5 // pred_fallthru
        _
      %p241 = scmp.lt.s32.totalorder %s15, 8
      // Predicated region
      $region13: #{ternary_train_forward.3} parent=5 // pred_check
        %p242 = pneg %p241
      $region14: #{ternary_train_forward.3} parent=5 // pred_check_branch
        %244 = sbr.rel (%p242) target = $region16
      $region15: #{ternary_train_forward.3} parent=5 // pred_region
        // Predicated region
        $region17: #{ternary_train_forward.3} parent=15 // pred_check
          %p245 = pneg %p56
        $region18: #{ternary_train_forward.3} parent=15 // pred_check_branch
          %247 = sbr.rel (%p245) target = $region20
        $region19: #{ternary_train_forward.3} parent=15 // pred_region
          %s248 = sand.u32 %s46, 1
          %s249 = sand.u32 %s46, 1
          %s250 = smul.addr %s249, 128
          %s251 = scalar_lea.vmem [#allocation4], %s250
          %s252 = smul.u32 16, %s22
          %s253 = smul.u32 2, %s24
          %s254 = smul.addr %s252, 4
          %s255 = sadd.s32 %s253, %s254
          %s256 = smul.addr %s255, 4
          %s257 = scalar_lea.vmem %s0, %s256
          // Predicated region
          $region21: #{ternary_train_forward.3} parent=19 // pred_check
            _
          $region22: #{ternary_train_forward.3} parent=19 // pred_check_branch
            %259 = sbr.rel (0) target = $region24
          $region23: #{ternary_train_forward.3} parent=19 // pred_region
            // Predicated region
            $region25: #{ternary_train_forward.3} parent=23 // pred_check
              _
            $region26: #{ternary_train_forward.3} parent=23 // pred_check_branch
              %261 = sbr.rel (0) target = $region28
            $region27: #{ternary_train_forward.3} parent=23 // pred_region
              // Predicated region
              $region40: #{ternary_train_forward.3} parent=27 // pred_check
                _
              $region41: #{ternary_train_forward.3} parent=27 // pred_check_branch
                %306 = sbr.rel (0) target = $region43
              $region42: #{ternary_train_forward.3} parent=27 // pred_region
                loop: start=0, step=1, limit=1
                $region44: #{ternary_train_forward.3} parent=42 // loop_pre_header
                  _
                $region45: #{ternary_train_forward.3} parent=42 // loop_header
                  %s308 = sphi 0, %s312
                  %p309 = scmp.ge.s32.totalorder %s308, 1
                  %s313 = sphi %s257, %s257
                  %s314 = sphi %s251, %s251
                $region46: #{ternary_train_forward.3} parent=42 // loop_header_branch
                  %311 = sbr.rel (%p309) target = $region50
                $region47: #{ternary_train_forward.3} parent=42 // loop_body
                  %v315 = vld [vmem:[%s313] sm:$0xff]
                  %316 = vst [vmem:[%s314] sm:$0xff] %v315
                  %v317 = vld [vmem:[%s313 + $0x10] sm:$0xff]
                  %318 = vst [vmem:[%s314 + $0x8] sm:$0xff] %v317
                  %v319 = vld [vmem:[%s313 + $0x20] sm:$0xff]
                  %320 = vst [vmem:[%s314 + $0x10] sm:$0xff] %v319
                  %v321 = vld [vmem:[%s313 + $0x30] sm:$0xff]
                  %322 = vst [vmem:[%s314 + $0x18] sm:$0xff] %v321
                  %v323 = vld [vmem:[%s313 + $0x40] sm:$0xff]
                  %324 = vst [vmem:[%s314 + $0x20] sm:$0xff] %v323
                  %v325 = vld [vmem:[%s313 + $0x50] sm:$0xff]
                  %326 = vst [vmem:[%s314 + $0x28] sm:$0xff] %v325
                  %v327 = vld [vmem:[%s313 + $0x60] sm:$0xff]
                  %328 = vst [vmem:[%s314 + $0x30] sm:$0xff] %v327
                  %v329 = vld [vmem:[%s313 + $0x70] sm:$0xff]
                  %330 = vst [vmem:[%s314 + $0x38] sm:$0xff] %v329
                  %v331 = vld [vmem:[%s313 + $0x80] sm:$0xff]
                  %332 = vst [vmem:[%s314 + $0x40] sm:$0xff] %v331
                  %v333 = vld [vmem:[%s313 + $0x90] sm:$0xff]
                  %334 = vst [vmem:[%s314 + $0x48] sm:$0xff] %v333
                  %v335 = vld [vmem:[%s313 + $0xa0] sm:$0xff]
                  %336 = vst [vmem:[%s314 + $0x50] sm:$0xff] %v335
                  %v337 = vld [vmem:[%s313 + $0xb0] sm:$0xff]
                  %338 = vst [vmem:[%s314 + $0x58] sm:$0xff] %v337
                  %v339 = vld [vmem:[%s313 + $0xc0] sm:$0xff]
                  %340 = vst [vmem:[%s314 + $0x60] sm:$0xff] %v339
                  %v341 = vld [vmem:[%s313 + $0xd0] sm:$0xff]
                  %342 = vst [vmem:[%s314 + $0x68] sm:$0xff] %v341
                  %v343 = vld [vmem:[%s313 + $0xe0] sm:$0xff]
                  %344 = vst [vmem:[%s314 + $0x70] sm:$0xff] %v343
                  %v345 = vld [vmem:[%s313 + $0xf0] sm:$0xff]
                  %346 = vst [vmem:[%s314 + $0x78] sm:$0xff] %v345
                $region48: #{ternary_train_forward.3} parent=42 // loop_footer
                  %s312 = sadd.s32 1, %s308
                $region49: #{ternary_train_forward.3} parent=42 // loop_footer_branch
                  %307 = sbr.rel target = $region45
                $region50: #{ternary_train_forward.3} parent=42 // loop_exit
                  _
              $region43: #{ternary_train_forward.3} parent=27 // pred_fallthru
                _
              // Predicated region
              $region51: #{ternary_train_forward.3} parent=27 // pred_check
                _
              $region52: #{ternary_train_forward.3} parent=27 // pred_check_branch
                %348 = sbr.rel target = $region54
              $region53: #{ternary_train_forward.3} parent=27 // pred_region
                _
              $region54: #{ternary_train_forward.3} parent=27 // pred_fallthru
                _
            $region28: #{ternary_train_forward.3} parent=23 // pred_fallthru
              _
            // Predicated region
            $region29: #{ternary_train_forward.3} parent=23 // pred_check
              _
            $region30: #{ternary_train_forward.3} parent=23 // pred_check_branch
              %263 = sbr.rel target = $region32
            $region31: #{ternary_train_forward.3} parent=23 // pred_region
              loop: start=0, step=1, limit=1
              $region33: #{ternary_train_forward.3} parent=31 // loop_pre_header
                _
              $region34: #{ternary_train_forward.3} parent=31 // loop_header
                %s266 = sphi 0, %s270
                %p267 = scmp.ge.s32.totalorder %s266, 1
                %s271 = sphi %s257, %s257
                %s272 = sphi %s251, %s251
              $region35: #{ternary_train_forward.3} parent=31 // loop_header_branch
                %269 = sbr.rel (%p267) target = $region39
              $region36: #{ternary_train_forward.3} parent=31 // loop_body
                %v273 = vld [vmem:[%s271] sm:$0xff]
                %274 = vst [vmem:[%s272] sm:$0xff] %v273
                %v275 = vld [vmem:[%s271 + $0x10] sm:$0xff]
                %276 = vst [vmem:[%s272 + $0x8] sm:$0xff] %v275
                %v277 = vld [vmem:[%s271 + $0x20] sm:$0xff]
                %278 = vst [vmem:[%s272 + $0x10] sm:$0xff] %v277
                %v279 = vld [vmem:[%s271 + $0x30] sm:$0xff]
                %280 = vst [vmem:[%s272 + $0x18] sm:$0xff] %v279
                %v281 = vld [vmem:[%s271 + $0x40] sm:$0xff]
                %282 = vst [vmem:[%s272 + $0x20] sm:$0xff] %v281
                %v283 = vld [vmem:[%s271 + $0x50] sm:$0xff]
                %284 = vst [vmem:[%s272 + $0x28] sm:$0xff] %v283
                %v285 = vld [vmem:[%s271 + $0x60] sm:$0xff]
                %286 = vst [vmem:[%s272 + $0x30] sm:$0xff] %v285
                %v287 = vld [vmem:[%s271 + $0x70] sm:$0xff]
                %288 = vst [vmem:[%s272 + $0x38] sm:$0xff] %v287
                %v289 = vld [vmem:[%s271 + $0x80] sm:$0xff]
                %290 = vst [vmem:[%s272 + $0x40] sm:$0xff] %v289
                %v291 = vld [vmem:[%s271 + $0x90] sm:$0xff]
                %292 = vst [vmem:[%s272 + $0x48] sm:$0xff] %v291
                %v293 = vld [vmem:[%s271 + $0xa0] sm:$0xff]
                %294 = vst [vmem:[%s272 + $0x50] sm:$0xff] %v293
                %v295 = vld [vmem:[%s271 + $0xb0] sm:$0xff]
                %296 = vst [vmem:[%s272 + $0x58] sm:$0xff] %v295
                %v297 = vld [vmem:[%s271 + $0xc0] sm:$0xff]
                %298 = vst [vmem:[%s272 + $0x60] sm:$0xff] %v297
                %v299 = vld [vmem:[%s271 + $0xd0] sm:$0xff]
                %300 = vst [vmem:[%s272 + $0x68] sm:$0xff] %v299
                %v301 = vld [vmem:[%s271 + $0xe0] sm:$0xff]
                %302 = vst [vmem:[%s272 + $0x70] sm:$0xff] %v301
                %v303 = vld [vmem:[%s271 + $0xf0] sm:$0xff]
                %304 = vst [vmem:[%s272 + $0x78] sm:$0xff] %v303
              $region37: #{ternary_train_forward.3} parent=31 // loop_footer
                %s270 = sadd.s32 1, %s266
              $region38: #{ternary_train_forward.3} parent=31 // loop_footer_branch
                %265 = sbr.rel target = $region34
              $region39: #{ternary_train_forward.3} parent=31 // loop_exit
                _
            $region32: #{ternary_train_forward.3} parent=23 // pred_fallthru
              _
          $region24: #{ternary_train_forward.3} parent=19 // pred_fallthru
            _
          %349 = vnop
        $region20: #{ternary_train_forward.3} parent=15 // pred_fallthru
          _
        // Predicated region
        $region55: #{ternary_train_forward.3} parent=15 // pred_check
          %p350 = pneg %p84
        $region56: #{ternary_train_forward.3} parent=15 // pred_check_branch
          %352 = sbr.rel (%p350) target = $region58
        $region57: #{ternary_train_forward.3} parent=15 // pred_region
          %s353 = sand.u32 %s74, 1
          %s354 = sand.u32 %s74, 1
          %s355 = smul.addr %s354, 128
          %s356 = scalar_lea.vmem [#allocation5], %s355
          %s357 = smul.u32 32, %s24
          %s358 = smul.addr %s357, 2
          %s359 = sadd.s32 %s23, %s358
          %s360 = smul.addr %s359, 4
          %s361 = scalar_lea.vmem %s1, %s360
          // Predicated region
          $region59: #{ternary_train_forward.3} parent=57 // pred_check
            _
          $region60: #{ternary_train_forward.3} parent=57 // pred_check_branch
            %363 = sbr.rel (0) target = $region62
          $region61: #{ternary_train_forward.3} parent=57 // pred_region
            // Predicated region
            $region63: #{ternary_train_forward.3} parent=61 // pred_check
              _
            $region64: #{ternary_train_forward.3} parent=61 // pred_check_branch
              %365 = sbr.rel target = $region66
            $region65: #{ternary_train_forward.3} parent=61 // pred_region
              // Predicated region
              $region78: #{ternary_train_forward.3} parent=65 // pred_check
                _
              $region79: #{ternary_train_forward.3} parent=65 // pred_check_branch
                %442 = sbr.rel (0) target = $region81
              $region80: #{ternary_train_forward.3} parent=65 // pred_region
                loop: start=0, step=1, limit=1
                $region82: #{ternary_train_forward.3} parent=80 // loop_pre_header
                  _
                $region83: #{ternary_train_forward.3} parent=80 // loop_header
                  %s444 = sphi 0, %s448
                  %p445 = scmp.ge.s32.totalorder %s444, 1
                  %s449 = sphi %s361, %s361
                  %s450 = sphi %s356, %s356
                $region84: #{ternary_train_forward.3} parent=80 // loop_header_branch
                  %447 = sbr.rel (%p445) target = $region88
                $region85: #{ternary_train_forward.3} parent=80 // loop_body
                  _
                $region86: #{ternary_train_forward.3} parent=80 // loop_footer
                  %s448 = sadd.s32 1, %s444
                $region87: #{ternary_train_forward.3} parent=80 // loop_footer_branch
                  %443 = sbr.rel target = $region83
                $region88: #{ternary_train_forward.3} parent=80 // loop_exit
                  _
                loop: start=0, step=1, limit=1
                $region89: #{ternary_train_forward.3} parent=80 // loop_pre_header
                  _
                $region90: #{ternary_train_forward.3} parent=80 // loop_header
                  %s453 = sphi 0, %s457
                  %p454 = scmp.ge.s32.totalorder %s453, 1
                  %s458 = sphi %s361, %s361
                  %s459 = sphi %s356, %s356
                $region91: #{ternary_train_forward.3} parent=80 // loop_header_branch
                  %456 = sbr.rel (%p454) target = $region95
                $region92: #{ternary_train_forward.3} parent=80 // loop_body
                  %v460 = vld [vmem:[%s458] sm:$0xf]
                  %461 = vst [vmem:[%s459] sm:$0xf] %v460
                  %v462 = vld [vmem:[%s458 + $0x8] sm:$0xf]
                  %463 = vst [vmem:[%s459 + $0x4] sm:$0xf] %v462
                  %v464 = vld [vmem:[%s458 + $0x10] sm:$0xf]
                  %465 = vst [vmem:[%s459 + $0x8] sm:$0xf] %v464
                  %v466 = vld [vmem:[%s458 + $0x18] sm:$0xf]
                  %467 = vst [vmem:[%s459 + $0xc] sm:$0xf] %v466
                  %v468 = vld [vmem:[%s458 + $0x20] sm:$0xf]
                  %469 = vst [vmem:[%s459 + $0x10] sm:$0xf] %v468
                  %v470 = vld [vmem:[%s458 + $0x28] sm:$0xf]
                  %471 = vst [vmem:[%s459 + $0x14] sm:$0xf] %v470
                  %v472 = vld [vmem:[%s458 + $0x30] sm:$0xf]
                  %473 = vst [vmem:[%s459 + $0x18] sm:$0xf] %v472
                  %v474 = vld [vmem:[%s458 + $0x38] sm:$0xf]
                  %475 = vst [vmem:[%s459 + $0x1c] sm:$0xf] %v474
                  %v476 = vld [vmem:[%s458 + $0x40] sm:$0xf]
                  %477 = vst [vmem:[%s459 + $0x20] sm:$0xf] %v476
                  %v478 = vld [vmem:[%s458 + $0x48] sm:$0xf]
                  %479 = vst [vmem:[%s459 + $0x24] sm:$0xf] %v478
                  %v480 = vld [vmem:[%s458 + $0x50] sm:$0xf]
                  %481 = vst [vmem:[%s459 + $0x28] sm:$0xf] %v480
                  %v482 = vld [vmem:[%s458 + $0x58] sm:$0xf]
                  %483 = vst [vmem:[%s459 + $0x2c] sm:$0xf] %v482
                  %v484 = vld [vmem:[%s458 + $0x60] sm:$0xf]
                  %485 = vst [vmem:[%s459 + $0x30] sm:$0xf] %v484
                  %v486 = vld [vmem:[%s458 + $0x68] sm:$0xf]
                  %487 = vst [vmem:[%s459 + $0x34] sm:$0xf] %v486
                  %v488 = vld [vmem:[%s458 + $0x70] sm:$0xf]
                  %489 = vst [vmem:[%s459 + $0x38] sm:$0xf] %v488
                  %v490 = vld [vmem:[%s458 + $0x78] sm:$0xf]
                  %491 = vst [vmem:[%s459 + $0x3c] sm:$0xf] %v490
                  %v492 = vld [vmem:[%s458 + $0x80] sm:$0xf]
                  %493 = vst [vmem:[%s459 + $0x40] sm:$0xf] %v492
                  %v494 = vld [vmem:[%s458 + $0x88] sm:$0xf]
                  %495 = vst [vmem:[%s459 + $0x44] sm:$0xf] %v494
                  %v496 = vld [vmem:[%s458 + $0x90] sm:$0xf]
                  %497 = vst [vmem:[%s459 + $0x48] sm:$0xf] %v496
                  %v498 = vld [vmem:[%s458 + $0x98] sm:$0xf]
                  %499 = vst [vmem:[%s459 + $0x4c] sm:$0xf] %v498
                  %v500 = vld [vmem:[%s458 + $0xa0] sm:$0xf]
                  %501 = vst [vmem:[%s459 + $0x50] sm:$0xf] %v500
                  %v502 = vld [vmem:[%s458 + $0xa8] sm:$0xf]
                  %503 = vst [vmem:[%s459 + $0x54] sm:$0xf] %v502
                  %v504 = vld [vmem:[%s458 + $0xb0] sm:$0xf]
                  %505 = vst [vmem:[%s459 + $0x58] sm:$0xf] %v504
                  %v506 = vld [vmem:[%s458 + $0xb8] sm:$0xf]
                  %507 = vst [vmem:[%s459 + $0x5c] sm:$0xf] %v506
                  %v508 = vld [vmem:[%s458 + $0xc0] sm:$0xf]
                  %509 = vst [vmem:[%s459 + $0x60] sm:$0xf] %v508
                  %v510 = vld [vmem:[%s458 + $0xc8] sm:$0xf]
                  %511 = vst [vmem:[%s459 + $0x64] sm:$0xf] %v510
                  %v512 = vld [vmem:[%s458 + $0xd0] sm:$0xf]
                  %513 = vst [vmem:[%s459 + $0x68] sm:$0xf] %v512
                  %v514 = vld [vmem:[%s458 + $0xd8] sm:$0xf]
                  %515 = vst [vmem:[%s459 + $0x6c] sm:$0xf] %v514
                  %v516 = vld [vmem:[%s458 + $0xe0] sm:$0xf]
                  %517 = vst [vmem:[%s459 + $0x70] sm:$0xf] %v516
                  %v518 = vld [vmem:[%s458 + $0xe8] sm:$0xf]
                  %519 = vst [vmem:[%s459 + $0x74] sm:$0xf] %v518
                  %v520 = vld [vmem:[%s458 + $0xf0] sm:$0xf]
                  %521 = vst [vmem:[%s459 + $0x78] sm:$0xf] %v520
                  %v522 = vld [vmem:[%s458 + $0xf8] sm:$0xf]
                  %523 = vst [vmem:[%s459 + $0x7c] sm:$0xf] %v522
                $region93: #{ternary_train_forward.3} parent=80 // loop_footer
                  %s457 = sadd.s32 1, %s453
                $region94: #{ternary_train_forward.3} parent=80 // loop_footer_branch
                  %452 = sbr.rel target = $region90
                $region95: #{ternary_train_forward.3} parent=80 // loop_exit
                  _
              $region81: #{ternary_train_forward.3} parent=65 // pred_fallthru
                _
            $region66: #{ternary_train_forward.3} parent=61 // pred_fallthru
              _
            // Predicated region
            $region67: #{ternary_train_forward.3} parent=61 // pred_check
              _
            $region68: #{ternary_train_forward.3} parent=61 // pred_check_branch
              %367 = sbr.rel (0) target = $region70
            $region69: #{ternary_train_forward.3} parent=61 // pred_region
              loop: start=0, step=1, limit=1
              $region71: #{ternary_train_forward.3} parent=69 // loop_pre_header
                _
              $region72: #{ternary_train_forward.3} parent=69 // loop_header
                %s370 = sphi 0, %s374
                %p371 = scmp.ge.s32.totalorder %s370, 1
                %s375 = sphi %s361, %s361
                %s376 = sphi %s356, %s356
              $region73: #{ternary_train_forward.3} parent=69 // loop_header_branch
                %373 = sbr.rel (%p371) target = $region77
              $region74: #{ternary_train_forward.3} parent=69 // loop_body
                %v377 = vld [vmem:[%s375] sm:$0xf]
                %378 = vst [vmem:[%s376] sm:$0xf] %v377
                %v379 = vld [vmem:[%s375 + $0x8] sm:$0xf]
                %380 = vst [vmem:[%s376 + $0x4] sm:$0xf] %v379
                %v381 = vld [vmem:[%s375 + $0x10] sm:$0xf]
                %382 = vst [vmem:[%s376 + $0x8] sm:$0xf] %v381
                %v383 = vld [vmem:[%s375 + $0x18] sm:$0xf]
                %384 = vst [vmem:[%s376 + $0xc] sm:$0xf] %v383
                %v385 = vld [vmem:[%s375 + $0x20] sm:$0xf]
                %386 = vst [vmem:[%s376 + $0x10] sm:$0xf] %v385
                %v387 = vld [vmem:[%s375 + $0x28] sm:$0xf]
                %388 = vst [vmem:[%s376 + $0x14] sm:$0xf] %v387
                %v389 = vld [vmem:[%s375 + $0x30] sm:$0xf]
                %390 = vst [vmem:[%s376 + $0x18] sm:$0xf] %v389
                %v391 = vld [vmem:[%s375 + $0x38] sm:$0xf]
                %392 = vst [vmem:[%s376 + $0x1c] sm:$0xf] %v391
                %v393 = vld [vmem:[%s375 + $0x40] sm:$0xf]
                %394 = vst [vmem:[%s376 + $0x20] sm:$0xf] %v393
                %v395 = vld [vmem:[%s375 + $0x48] sm:$0xf]
                %396 = vst [vmem:[%s376 + $0x24] sm:$0xf] %v395
                %v397 = vld [vmem:[%s375 + $0x50] sm:$0xf]
                %398 = vst [vmem:[%s376 + $0x28] sm:$0xf] %v397
                %v399 = vld [vmem:[%s375 + $0x58] sm:$0xf]
                %400 = vst [vmem:[%s376 + $0x2c] sm:$0xf] %v399
                %v401 = vld [vmem:[%s375 + $0x60] sm:$0xf]
                %402 = vst [vmem:[%s376 + $0x30] sm:$0xf] %v401
                %v403 = vld [vmem:[%s375 + $0x68] sm:$0xf]
                %404 = vst [vmem:[%s376 + $0x34] sm:$0xf] %v403
                %v405 = vld [vmem:[%s375 + $0x70] sm:$0xf]
                %406 = vst [vmem:[%s376 + $0x38] sm:$0xf] %v405
                %v407 = vld [vmem:[%s375 + $0x78] sm:$0xf]
                %408 = vst [vmem:[%s376 + $0x3c] sm:$0xf] %v407
                %v409 = vld [vmem:[%s375 + $0x80] sm:$0xf]
                %410 = vst [vmem:[%s376 + $0x40] sm:$0xf] %v409
                %v411 = vld [vmem:[%s375 + $0x88] sm:$0xf]
                %412 = vst [vmem:[%s376 + $0x44] sm:$0xf] %v411
                %v413 = vld [vmem:[%s375 + $0x90] sm:$0xf]
                %414 = vst [vmem:[%s376 + $0x48] sm:$0xf] %v413
                %v415 = vld [vmem:[%s375 + $0x98] sm:$0xf]
                %416 = vst [vmem:[%s376 + $0x4c] sm:$0xf] %v415
                %v417 = vld [vmem:[%s375 + $0xa0] sm:$0xf]
                %418 = vst [vmem:[%s376 + $0x50] sm:$0xf] %v417
                %v419 = vld [vmem:[%s375 + $0xa8] sm:$0xf]
                %420 = vst [vmem:[%s376 + $0x54] sm:$0xf] %v419
                %v421 = vld [vmem:[%s375 + $0xb0] sm:$0xf]
                %422 = vst [vmem:[%s376 + $0x58] sm:$0xf] %v421
                %v423 = vld [vmem:[%s375 + $0xb8] sm:$0xf]
                %424 = vst [vmem:[%s376 + $0x5c] sm:$0xf] %v423
                %v425 = vld [vmem:[%s375 + $0xc0] sm:$0xf]
                %426 = vst [vmem:[%s376 + $0x60] sm:$0xf] %v425
                %v427 = vld [vmem:[%s375 + $0xc8] sm:$0xf]
                %428 = vst [vmem:[%s376 + $0x64] sm:$0xf] %v427
                %v429 = vld [vmem:[%s375 + $0xd0] sm:$0xf]
                %430 = vst [vmem:[%s376 + $0x68] sm:$0xf] %v429
                %v431 = vld [vmem:[%s375 + $0xd8] sm:$0xf]
                %432 = vst [vmem:[%s376 + $0x6c] sm:$0xf] %v431
                %v433 = vld [vmem:[%s375 + $0xe0] sm:$0xf]
                %434 = vst [vmem:[%s376 + $0x70] sm:$0xf] %v433
                %v435 = vld [vmem:[%s375 + $0xe8] sm:$0xf]
                %436 = vst [vmem:[%s376 + $0x74] sm:$0xf] %v435
                %v437 = vld [vmem:[%s375 + $0xf0] sm:$0xf]
                %438 = vst [vmem:[%s376 + $0x78] sm:$0xf] %v437
                %v439 = vld [vmem:[%s375 + $0xf8] sm:$0xf]
                %440 = vst [vmem:[%s376 + $0x7c] sm:$0xf] %v439
              $region75: #{ternary_train_forward.3} parent=69 // loop_footer
                %s374 = sadd.s32 1, %s370
              $region76: #{ternary_train_forward.3} parent=69 // loop_footer_branch
                %369 = sbr.rel target = $region72
              $region77: #{ternary_train_forward.3} parent=69 // loop_exit
                _
            $region70: #{ternary_train_forward.3} parent=61 // pred_fallthru
              _
          $region62: #{ternary_train_forward.3} parent=57 // pred_fallthru
            _
          %524 = vnop
        $region58: #{ternary_train_forward.3} parent=15 // pred_fallthru
          _
        // Predicated region
        $region96: #{ternary_train_forward.3} parent=15 // pred_check
          %p525 = pneg %p112
        $region97: #{ternary_train_forward.3} parent=15 // pred_check_branch
          %527 = sbr.rel (%p525) target = $region99
        $region98: #{ternary_train_forward.3} parent=15 // pred_region
          %s528 = sand.u32 %s102, 1
          %s529 = sand.u32 %s102, 1
          %s530 = smul.addr %s529, 128
          %s531 = scalar_lea.vmem [#allocation6], %s530
          %s532 = smul.u32 32, %s24
          %s533 = smul.addr %s532, 2
          %s534 = sadd.s32 %s23, %s533
          %s535 = smul.addr %s534, 4
          %s536 = scalar_lea.vmem %s2, %s535
          // Predicated region
          $region100: #{ternary_train_forward.3} parent=98 // pred_check
            _
          $region101: #{ternary_train_forward.3} parent=98 // pred_check_branch
            %538 = sbr.rel (0) target = $region103
          $region102: #{ternary_train_forward.3} parent=98 // pred_region
            // Predicated region
            $region104: #{ternary_train_forward.3} parent=102 // pred_check
              _
            $region105: #{ternary_train_forward.3} parent=102 // pred_check_branch
              %540 = sbr.rel target = $region107
            $region106: #{ternary_train_forward.3} parent=102 // pred_region
              // Predicated region
              $region119: #{ternary_train_forward.3} parent=106 // pred_check
                _
              $region120: #{ternary_train_forward.3} parent=106 // pred_check_branch
                %617 = sbr.rel (0) target = $region122
              $region121: #{ternary_train_forward.3} parent=106 // pred_region
                loop: start=0, step=1, limit=1
                $region123: #{ternary_train_forward.3} parent=121 // loop_pre_header
                  _
                $region124: #{ternary_train_forward.3} parent=121 // loop_header
                  %s619 = sphi 0, %s623
                  %p620 = scmp.ge.s32.totalorder %s619, 1
                  %s624 = sphi %s536, %s536
                  %s625 = sphi %s531, %s531
                $region125: #{ternary_train_forward.3} parent=121 // loop_header_branch
                  %622 = sbr.rel (%p620) target = $region129
                $region126: #{ternary_train_forward.3} parent=121 // loop_body
                  _
                $region127: #{ternary_train_forward.3} parent=121 // loop_footer
                  %s623 = sadd.s32 1, %s619
                $region128: #{ternary_train_forward.3} parent=121 // loop_footer_branch
                  %618 = sbr.rel target = $region124
                $region129: #{ternary_train_forward.3} parent=121 // loop_exit
                  _
                loop: start=0, step=1, limit=1
                $region130: #{ternary_train_forward.3} parent=121 // loop_pre_header
                  _
                $region131: #{ternary_train_forward.3} parent=121 // loop_header
                  %s628 = sphi 0, %s632
                  %p629 = scmp.ge.s32.totalorder %s628, 1
                  %s633 = sphi %s536, %s536
                  %s634 = sphi %s531, %s531
                $region132: #{ternary_train_forward.3} parent=121 // loop_header_branch
                  %631 = sbr.rel (%p629) target = $region136
                $region133: #{ternary_train_forward.3} parent=121 // loop_body
                  %v635 = vld [vmem:[%s633] sm:$0xf]
                  %636 = vst [vmem:[%s634] sm:$0xf] %v635
                  %v637 = vld [vmem:[%s633 + $0x8] sm:$0xf]
                  %638 = vst [vmem:[%s634 + $0x4] sm:$0xf] %v637
                  %v639 = vld [vmem:[%s633 + $0x10] sm:$0xf]
                  %640 = vst [vmem:[%s634 + $0x8] sm:$0xf] %v639
                  %v641 = vld [vmem:[%s633 + $0x18] sm:$0xf]
                  %642 = vst [vmem:[%s634 + $0xc] sm:$0xf] %v641
                  %v643 = vld [vmem:[%s633 + $0x20] sm:$0xf]
                  %644 = vst [vmem:[%s634 + $0x10] sm:$0xf] %v643
                  %v645 = vld [vmem:[%s633 + $0x28] sm:$0xf]
                  %646 = vst [vmem:[%s634 + $0x14] sm:$0xf] %v645
                  %v647 = vld [vmem:[%s633 + $0x30] sm:$0xf]
                  %648 = vst [vmem:[%s634 + $0x18] sm:$0xf] %v647
                  %v649 = vld [vmem:[%s633 + $0x38] sm:$0xf]
                  %650 = vst [vmem:[%s634 + $0x1c] sm:$0xf] %v649
                  %v651 = vld [vmem:[%s633 + $0x40] sm:$0xf]
                  %652 = vst [vmem:[%s634 + $0x20] sm:$0xf] %v651
                  %v653 = vld [vmem:[%s633 + $0x48] sm:$0xf]
                  %654 = vst [vmem:[%s634 + $0x24] sm:$0xf] %v653
                  %v655 = vld [vmem:[%s633 + $0x50] sm:$0xf]
                  %656 = vst [vmem:[%s634 + $0x28] sm:$0xf] %v655
                  %v657 = vld [vmem:[%s633 + $0x58] sm:$0xf]
                  %658 = vst [vmem:[%s634 + $0x2c] sm:$0xf] %v657
                  %v659 = vld [vmem:[%s633 + $0x60] sm:$0xf]
                  %660 = vst [vmem:[%s634 + $0x30] sm:$0xf] %v659
                  %v661 = vld [vmem:[%s633 + $0x68] sm:$0xf]
                  %662 = vst [vmem:[%s634 + $0x34] sm:$0xf] %v661
                  %v663 = vld [vmem:[%s633 + $0x70] sm:$0xf]
                  %664 = vst [vmem:[%s634 + $0x38] sm:$0xf] %v663
                  %v665 = vld [vmem:[%s633 + $0x78] sm:$0xf]
                  %666 = vst [vmem:[%s634 + $0x3c] sm:$0xf] %v665
                  %v667 = vld [vmem:[%s633 + $0x80] sm:$0xf]
                  %668 = vst [vmem:[%s634 + $0x40] sm:$0xf] %v667
                  %v669 = vld [vmem:[%s633 + $0x88] sm:$0xf]
                  %670 = vst [vmem:[%s634 + $0x44] sm:$0xf] %v669
                  %v671 = vld [vmem:[%s633 + $0x90] sm:$0xf]
                  %672 = vst [vmem:[%s634 + $0x48] sm:$0xf] %v671
                  %v673 = vld [vmem:[%s633 + $0x98] sm:$0xf]
                  %674 = vst [vmem:[%s634 + $0x4c] sm:$0xf] %v673
                  %v675 = vld [vmem:[%s633 + $0xa0] sm:$0xf]
                  %676 = vst [vmem:[%s634 + $0x50] sm:$0xf] %v675
                  %v677 = vld [vmem:[%s633 + $0xa8] sm:$0xf]
                  %678 = vst [vmem:[%s634 + $0x54] sm:$0xf] %v677
                  %v679 = vld [vmem:[%s633 + $0xb0] sm:$0xf]
                  %680 = vst [vmem:[%s634 + $0x58] sm:$0xf] %v679
                  %v681 = vld [vmem:[%s633 + $0xb8] sm:$0xf]
                  %682 = vst [vmem:[%s634 + $0x5c] sm:$0xf] %v681
                  %v683 = vld [vmem:[%s633 + $0xc0] sm:$0xf]
                  %684 = vst [vmem:[%s634 + $0x60] sm:$0xf] %v683
                  %v685 = vld [vmem:[%s633 + $0xc8] sm:$0xf]
                  %686 = vst [vmem:[%s634 + $0x64] sm:$0xf] %v685
                  %v687 = vld [vmem:[%s633 + $0xd0] sm:$0xf]
                  %688 = vst [vmem:[%s634 + $0x68] sm:$0xf] %v687
                  %v689 = vld [vmem:[%s633 + $0xd8] sm:$0xf]
                  %690 = vst [vmem:[%s634 + $0x6c] sm:$0xf] %v689
                  %v691 = vld [vmem:[%s633 + $0xe0] sm:$0xf]
                  %692 = vst [vmem:[%s634 + $0x70] sm:$0xf] %v691
                  %v693 = vld [vmem:[%s633 + $0xe8] sm:$0xf]
                  %694 = vst [vmem:[%s634 + $0x74] sm:$0xf] %v693
                  %v695 = vld [vmem:[%s633 + $0xf0] sm:$0xf]
                  %696 = vst [vmem:[%s634 + $0x78] sm:$0xf] %v695
                  %v697 = vld [vmem:[%s633 + $0xf8] sm:$0xf]
                  %698 = vst [vmem:[%s634 + $0x7c] sm:$0xf] %v697
                $region134: #{ternary_train_forward.3} parent=121 // loop_footer
                  %s632 = sadd.s32 1, %s628
                $region135: #{ternary_train_forward.3} parent=121 // loop_footer_branch
                  %627 = sbr.rel target = $region131
                $region136: #{ternary_train_forward.3} parent=121 // loop_exit
                  _
              $region122: #{ternary_train_forward.3} parent=106 // pred_fallthru
                _
            $region107: #{ternary_train_forward.3} parent=102 // pred_fallthru
              _
            // Predicated region
            $region108: #{ternary_train_forward.3} parent=102 // pred_check
              _
            $region109: #{ternary_train_forward.3} parent=102 // pred_check_branch
              %542 = sbr.rel (0) target = $region111
            $region110: #{ternary_train_forward.3} parent=102 // pred_region
              loop: start=0, step=1, limit=1
              $region112: #{ternary_train_forward.3} parent=110 // loop_pre_header
                _
              $region113: #{ternary_train_forward.3} parent=110 // loop_header
                %s545 = sphi 0, %s549
                %p546 = scmp.ge.s32.totalorder %s545, 1
                %s550 = sphi %s536, %s536
                %s551 = sphi %s531, %s531
              $region114: #{ternary_train_forward.3} parent=110 // loop_header_branch
                %548 = sbr.rel (%p546) target = $region118
              $region115: #{ternary_train_forward.3} parent=110 // loop_body
                %v552 = vld [vmem:[%s550] sm:$0xf]
                %553 = vst [vmem:[%s551] sm:$0xf] %v552
                %v554 = vld [vmem:[%s550 + $0x8] sm:$0xf]
                %555 = vst [vmem:[%s551 + $0x4] sm:$0xf] %v554
                %v556 = vld [vmem:[%s550 + $0x10] sm:$0xf]
                %557 = vst [vmem:[%s551 + $0x8] sm:$0xf] %v556
                %v558 = vld [vmem:[%s550 + $0x18] sm:$0xf]
                %559 = vst [vmem:[%s551 + $0xc] sm:$0xf] %v558
                %v560 = vld [vmem:[%s550 + $0x20] sm:$0xf]
                %561 = vst [vmem:[%s551 + $0x10] sm:$0xf] %v560
                %v562 = vld [vmem:[%s550 + $0x28] sm:$0xf]
                %563 = vst [vmem:[%s551 + $0x14] sm:$0xf] %v562
                %v564 = vld [vmem:[%s550 + $0x30] sm:$0xf]
                %565 = vst [vmem:[%s551 + $0x18] sm:$0xf] %v564
                %v566 = vld [vmem:[%s550 + $0x38] sm:$0xf]
                %567 = vst [vmem:[%s551 + $0x1c] sm:$0xf] %v566
                %v568 = vld [vmem:[%s550 + $0x40] sm:$0xf]
                %569 = vst [vmem:[%s551 + $0x20] sm:$0xf] %v568
                %v570 = vld [vmem:[%s550 + $0x48] sm:$0xf]
                %571 = vst [vmem:[%s551 + $0x24] sm:$0xf] %v570
                %v572 = vld [vmem:[%s550 + $0x50] sm:$0xf]
                %573 = vst [vmem:[%s551 + $0x28] sm:$0xf] %v572
                %v574 = vld [vmem:[%s550 + $0x58] sm:$0xf]
                %575 = vst [vmem:[%s551 + $0x2c] sm:$0xf] %v574
                %v576 = vld [vmem:[%s550 + $0x60] sm:$0xf]
                %577 = vst [vmem:[%s551 + $0x30] sm:$0xf] %v576
                %v578 = vld [vmem:[%s550 + $0x68] sm:$0xf]
                %579 = vst [vmem:[%s551 + $0x34] sm:$0xf] %v578
                %v580 = vld [vmem:[%s550 + $0x70] sm:$0xf]
                %581 = vst [vmem:[%s551 + $0x38] sm:$0xf] %v580
                %v582 = vld [vmem:[%s550 + $0x78] sm:$0xf]
                %583 = vst [vmem:[%s551 + $0x3c] sm:$0xf] %v582
                %v584 = vld [vmem:[%s550 + $0x80] sm:$0xf]
                %585 = vst [vmem:[%s551 + $0x40] sm:$0xf] %v584
                %v586 = vld [vmem:[%s550 + $0x88] sm:$0xf]
                %587 = vst [vmem:[%s551 + $0x44] sm:$0xf] %v586
                %v588 = vld [vmem:[%s550 + $0x90] sm:$0xf]
                %589 = vst [vmem:[%s551 + $0x48] sm:$0xf] %v588
                %v590 = vld [vmem:[%s550 + $0x98] sm:$0xf]
                %591 = vst [vmem:[%s551 + $0x4c] sm:$0xf] %v590
                %v592 = vld [vmem:[%s550 + $0xa0] sm:$0xf]
                %593 = vst [vmem:[%s551 + $0x50] sm:$0xf] %v592
                %v594 = vld [vmem:[%s550 + $0xa8] sm:$0xf]
                %595 = vst [vmem:[%s551 + $0x54] sm:$0xf] %v594
                %v596 = vld [vmem:[%s550 + $0xb0] sm:$0xf]
                %597 = vst [vmem:[%s551 + $0x58] sm:$0xf] %v596
                %v598 = vld [vmem:[%s550 + $0xb8] sm:$0xf]
                %599 = vst [vmem:[%s551 + $0x5c] sm:$0xf] %v598
                %v600 = vld [vmem:[%s550 + $0xc0] sm:$0xf]
                %601 = vst [vmem:[%s551 + $0x60] sm:$0xf] %v600
                %v602 = vld [vmem:[%s550 + $0xc8] sm:$0xf]
                %603 = vst [vmem:[%s551 + $0x64] sm:$0xf] %v602
                %v604 = vld [vmem:[%s550 + $0xd0] sm:$0xf]
                %605 = vst [vmem:[%s551 + $0x68] sm:$0xf] %v604
                %v606 = vld [vmem:[%s550 + $0xd8] sm:$0xf]
                %607 = vst [vmem:[%s551 + $0x6c] sm:$0xf] %v606
                %v608 = vld [vmem:[%s550 + $0xe0] sm:$0xf]
                %609 = vst [vmem:[%s551 + $0x70] sm:$0xf] %v608
                %v610 = vld [vmem:[%s550 + $0xe8] sm:$0xf]
                %611 = vst [vmem:[%s551 + $0x74] sm:$0xf] %v610
                %v612 = vld [vmem:[%s550 + $0xf0] sm:$0xf]
                %613 = vst [vmem:[%s551 + $0x78] sm:$0xf] %v612
                %v614 = vld [vmem:[%s550 + $0xf8] sm:$0xf]
                %615 = vst [vmem:[%s551 + $0x7c] sm:$0xf] %v614
              $region116: #{ternary_train_forward.3} parent=110 // loop_footer
                %s549 = sadd.s32 1, %s545
              $region117: #{ternary_train_forward.3} parent=110 // loop_footer_branch
                %544 = sbr.rel target = $region113
              $region118: #{ternary_train_forward.3} parent=110 // loop_exit
                _
            $region111: #{ternary_train_forward.3} parent=102 // pred_fallthru
              _
          $region103: #{ternary_train_forward.3} parent=98 // pred_fallthru
            _
          %699 = vnop
        $region99: #{ternary_train_forward.3} parent=15 // pred_fallthru
          _
        // Predicated region
        $region137: #{ternary_train_forward.3} parent=15 // pred_check
          %p700 = pneg %p138
        $region138: #{ternary_train_forward.3} parent=15 // pred_check_branch
          %702 = sbr.rel (%p700) target = $region140
        $region139: #{ternary_train_forward.3} parent=15 // pred_region
          %p703 = scmp.lt.s32.totalorder %s23, 1
          %s704 = scalar_select %p703, %s23, 1
          %s705 = scalar_lea.vmem %s3, %s704
        $region140: #{ternary_train_forward.3} parent=15 // pred_fallthru
          _
        // Predicated region
        $region141: #{ternary_train_forward.3} parent=15 // pred_check
          %p706 = pneg %p164
        $region142: #{ternary_train_forward.3} parent=15 // pred_check_branch
          %708 = sbr.rel (%p706) target = $region144
        $region143: #{ternary_train_forward.3} parent=15 // pred_region
          %p709 = scmp.lt.s32.totalorder %s23, 1
          %s710 = scalar_select %p709, %s23, 1
          %s711 = scalar_lea.vmem %s4, %s710
        $region144: #{ternary_train_forward.3} parent=15 // pred_fallthru
          _
        // Predicated region
        $region145: #{ternary_train_forward.3} parent=15 // pred_check
          %p712 = pneg %p192
        $region146: #{ternary_train_forward.3} parent=15 // pred_check_branch
          %714 = sbr.rel (%p712) target = $region148
        $region147: #{ternary_train_forward.3} parent=15 // pred_region
          %s715 = sand.u32 %s182, 1
          %s716 = sand.u32 %s182, 1
          %s717 = smul.addr %s716, 128
          %s718 = scalar_lea.vmem [#allocation7], %s717
          %s719 = smul.u32 16, %s22
          %s720 = smul.addr %s719, 2
          %s721 = sadd.s32 %s23, %s720
          %s722 = smul.addr %s721, 8
          %s723 = scalar_lea.vmem %s5, %s722
          // Predicated region
          $region149: #{ternary_train_forward.3} parent=147 // pred_check
            _
          $region150: #{ternary_train_forward.3} parent=147 // pred_check_branch
            %725 = sbr.rel (0) target = $region152
          $region151: #{ternary_train_forward.3} parent=147 // pred_region
            // Predicated region
            $region153: #{ternary_train_forward.3} parent=151 // pred_check
              _
            $region154: #{ternary_train_forward.3} parent=151 // pred_check_branch
              %727 = sbr.rel (0) target = $region156
            $region155: #{ternary_train_forward.3} parent=151 // pred_region
              // Predicated region
              $region168: #{ternary_train_forward.3} parent=155 // pred_check
                _
              $region169: #{ternary_train_forward.3} parent=155 // pred_check_branch
                %772 = sbr.rel (0) target = $region171
              $region170: #{ternary_train_forward.3} parent=155 // pred_region
                loop: start=0, step=1, limit=1
                $region172: #{ternary_train_forward.3} parent=170 // loop_pre_header
                  _
                $region173: #{ternary_train_forward.3} parent=170 // loop_header
                  %s774 = sphi 0, %s778
                  %p775 = scmp.ge.s32.totalorder %s774, 1
                  %s779 = sphi %s723, %s723
                  %s780 = sphi %s718, %s718
                $region174: #{ternary_train_forward.3} parent=170 // loop_header_branch
                  %777 = sbr.rel (%p775) target = $region178
                $region175: #{ternary_train_forward.3} parent=170 // loop_body
                  %v781 = vld [vmem:[%s779] sm:$0xff]
                  %782 = vst [vmem:[%s780] sm:$0xff] %v781
                  %v783 = vld [vmem:[%s779 + $0x10] sm:$0xff]
                  %784 = vst [vmem:[%s780 + $0x8] sm:$0xff] %v783
                  %v785 = vld [vmem:[%s779 + $0x20] sm:$0xff]
                  %786 = vst [vmem:[%s780 + $0x10] sm:$0xff] %v785
                  %v787 = vld [vmem:[%s779 + $0x30] sm:$0xff]
                  %788 = vst [vmem:[%s780 + $0x18] sm:$0xff] %v787
                  %v789 = vld [vmem:[%s779 + $0x40] sm:$0xff]
                  %790 = vst [vmem:[%s780 + $0x20] sm:$0xff] %v789
                  %v791 = vld [vmem:[%s779 + $0x50] sm:$0xff]
                  %792 = vst [vmem:[%s780 + $0x28] sm:$0xff] %v791
                  %v793 = vld [vmem:[%s779 + $0x60] sm:$0xff]
                  %794 = vst [vmem:[%s780 + $0x30] sm:$0xff] %v793
                  %v795 = vld [vmem:[%s779 + $0x70] sm:$0xff]
                  %796 = vst [vmem:[%s780 + $0x38] sm:$0xff] %v795
                  %v797 = vld [vmem:[%s779 + $0x80] sm:$0xff]
                  %798 = vst [vmem:[%s780 + $0x40] sm:$0xff] %v797
                  %v799 = vld [vmem:[%s779 + $0x90] sm:$0xff]
                  %800 = vst [vmem:[%s780 + $0x48] sm:$0xff] %v799
                  %v801 = vld [vmem:[%s779 + $0xa0] sm:$0xff]
                  %802 = vst [vmem:[%s780 + $0x50] sm:$0xff] %v801
                  %v803 = vld [vmem:[%s779 + $0xb0] sm:$0xff]
                  %804 = vst [vmem:[%s780 + $0x58] sm:$0xff] %v803
                  %v805 = vld [vmem:[%s779 + $0xc0] sm:$0xff]
                  %806 = vst [vmem:[%s780 + $0x60] sm:$0xff] %v805
                  %v807 = vld [vmem:[%s779 + $0xd0] sm:$0xff]
                  %808 = vst [vmem:[%s780 + $0x68] sm:$0xff] %v807
                  %v809 = vld [vmem:[%s779 + $0xe0] sm:$0xff]
                  %810 = vst [vmem:[%s780 + $0x70] sm:$0xff] %v809
                  %v811 = vld [vmem:[%s779 + $0xf0] sm:$0xff]
                  %812 = vst [vmem:[%s780 + $0x78] sm:$0xff] %v811
                $region176: #{ternary_train_forward.3} parent=170 // loop_footer
                  %s778 = sadd.s32 1, %s774
                $region177: #{ternary_train_forward.3} parent=170 // loop_footer_branch
                  %773 = sbr.rel target = $region173
                $region178: #{ternary_train_forward.3} parent=170 // loop_exit
                  _
              $region171: #{ternary_train_forward.3} parent=155 // pred_fallthru
                _
              // Predicated region
              $region179: #{ternary_train_forward.3} parent=155 // pred_check
                _
              $region180: #{ternary_train_forward.3} parent=155 // pred_check_branch
                %814 = sbr.rel target = $region182
              $region181: #{ternary_train_forward.3} parent=155 // pred_region
                _
              $region182: #{ternary_train_forward.3} parent=155 // pred_fallthru
                _
            $region156: #{ternary_train_forward.3} parent=151 // pred_fallthru
              _
            // Predicated region
            $region157: #{ternary_train_forward.3} parent=151 // pred_check
              _
            $region158: #{ternary_train_forward.3} parent=151 // pred_check_branch
              %729 = sbr.rel target = $region160
            $region159: #{ternary_train_forward.3} parent=151 // pred_region
              loop: start=0, step=1, limit=1
              $region161: #{ternary_train_forward.3} parent=159 // loop_pre_header
                _
              $region162: #{ternary_train_forward.3} parent=159 // loop_header
                %s732 = sphi 0, %s736
                %p733 = scmp.ge.s32.totalorder %s732, 1
                %s737 = sphi %s723, %s723
                %s738 = sphi %s718, %s718
              $region163: #{ternary_train_forward.3} parent=159 // loop_header_branch
                %735 = sbr.rel (%p733) target = $region167
              $region164: #{ternary_train_forward.3} parent=159 // loop_body
                %v739 = vld [vmem:[%s737] sm:$0xff]
                %740 = vst [vmem:[%s738] sm:$0xff] %v739
                %v741 = vld [vmem:[%s737 + $0x10] sm:$0xff]
                %742 = vst [vmem:[%s738 + $0x8] sm:$0xff] %v741
                %v743 = vld [vmem:[%s737 + $0x20] sm:$0xff]
                %744 = vst [vmem:[%s738 + $0x10] sm:$0xff] %v743
                %v745 = vld [vmem:[%s737 + $0x30] sm:$0xff]
                %746 = vst [vmem:[%s738 + $0x18] sm:$0xff] %v745
                %v747 = vld [vmem:[%s737 + $0x40] sm:$0xff]
                %748 = vst [vmem:[%s738 + $0x20] sm:$0xff] %v747
                %v749 = vld [vmem:[%s737 + $0x50] sm:$0xff]
                %750 = vst [vmem:[%s738 + $0x28] sm:$0xff] %v749
                %v751 = vld [vmem:[%s737 + $0x60] sm:$0xff]
                %752 = vst [vmem:[%s738 + $0x30] sm:$0xff] %v751
                %v753 = vld [vmem:[%s737 + $0x70] sm:$0xff]
                %754 = vst [vmem:[%s738 + $0x38] sm:$0xff] %v753
                %v755 = vld [vmem:[%s737 + $0x80] sm:$0xff]
                %756 = vst [vmem:[%s738 + $0x40] sm:$0xff] %v755
                %v757 = vld [vmem:[%s737 + $0x90] sm:$0xff]
                %758 = vst [vmem:[%s738 + $0x48] sm:$0xff] %v757
                %v759 = vld [vmem:[%s737 + $0xa0] sm:$0xff]
                %760 = vst [vmem:[%s738 + $0x50] sm:$0xff] %v759
                %v761 = vld [vmem:[%s737 + $0xb0] sm:$0xff]
                %762 = vst [vmem:[%s738 + $0x58] sm:$0xff] %v761
                %v763 = vld [vmem:[%s737 + $0xc0] sm:$0xff]
                %764 = vst [vmem:[%s738 + $0x60] sm:$0xff] %v763
                %v765 = vld [vmem:[%s737 + $0xd0] sm:$0xff]
                %766 = vst [vmem:[%s738 + $0x68] sm:$0xff] %v765
                %v767 = vld [vmem:[%s737 + $0xe0] sm:$0xff]
                %768 = vst [vmem:[%s738 + $0x70] sm:$0xff] %v767
                %v769 = vld [vmem:[%s737 + $0xf0] sm:$0xff]
                %770 = vst [vmem:[%s738 + $0x78] sm:$0xff] %v769
              $region165: #{ternary_train_forward.3} parent=159 // loop_footer
                %s736 = sadd.s32 1, %s732
              $region166: #{ternary_train_forward.3} parent=159 // loop_footer_branch
                %731 = sbr.rel target = $region162
              $region167: #{ternary_train_forward.3} parent=159 // loop_exit
                _
            $region160: #{ternary_train_forward.3} parent=151 // pred_fallthru
              _
          $region152: #{ternary_train_forward.3} parent=147 // pred_fallthru
            _
          %815 = vnop
        $region148: #{ternary_train_forward.3} parent=15 // pred_fallthru
          _
      $region16: #{ternary_train_forward.3} parent=5 // pred_fallthru
        _
      %p816 = scmp.le.s32.totalorder 1, %s15
      %p817 = scmp.lt.s32.totalorder %s15, 9
      %p818 = pnand %p816, %p817
      %p819 = pneg %p818
      // Predicated region
      $region183: #{ternary_train_forward.3} parent=5 // pred_check
        _
      $region184: #{ternary_train_forward.3} parent=5 // pred_check_branch
        %821 = sbr.rel (%p818) target = $region186
      $region185: #{ternary_train_forward.3} parent=5 // pred_region
        %s822 = ssub.s32 %s15, 1
        %s823 = sand.u32 %s49, 1
        %s824 = sand.u32 %s49, 1
        %s825 = smul.addr %s824, 128
        %s826 = scalar_lea.vmem [#allocation4], %s825
        // Predicated region
        $region187: #{ternary_train_forward.3} parent=185 // pred_check
          %p827 = pneg %p62
        $region188: #{ternary_train_forward.3} parent=185 // pred_check_branch
          %829 = sbr.rel (%p827) target = $region190
        $region189: #{ternary_train_forward.3} parent=185 // pred_region
          _
        $region190: #{ternary_train_forward.3} parent=185 // pred_fallthru
          _
        %s830 = sand.u32 %s77, 1
        %s831 = sand.u32 %s77, 1
        %s832 = smul.addr %s831, 128
        %s833 = scalar_lea.vmem [#allocation5], %s832
        // Predicated region
        $region191: #{ternary_train_forward.3} parent=185 // pred_check
          %p834 = pneg %p90
        $region192: #{ternary_train_forward.3} parent=185 // pred_check_branch
          %836 = sbr.rel (%p834) target = $region194
        $region193: #{ternary_train_forward.3} parent=185 // pred_region
          _
        $region194: #{ternary_train_forward.3} parent=185 // pred_fallthru
          _
        %s837 = sand.u32 %s105, 1
        %s838 = sand.u32 %s105, 1
        %s839 = smul.addr %s838, 128
        %s840 = scalar_lea.vmem [#allocation6], %s839
        // Predicated region
        $region195: #{ternary_train_forward.3} parent=185 // pred_check
          %p841 = pneg %p118
        $region196: #{ternary_train_forward.3} parent=185 // pred_check_branch
          %843 = sbr.rel (%p841) target = $region198
        $region197: #{ternary_train_forward.3} parent=185 // pred_region
          _
        $region198: #{ternary_train_forward.3} parent=185 // pred_fallthru
          _
        %s844 = sand.u32 %s185, 1
        %s845 = sand.u32 %s185, 1
        %s846 = smul.addr %s845, 128
        %s847 = scalar_lea.vmem [#allocation7], %s846
        // Predicated region
        $region199: #{ternary_train_forward.3} parent=185 // pred_check
          %p848 = pneg %p198
        $region200: #{ternary_train_forward.3} parent=185 // pred_check_branch
          %850 = sbr.rel (%p848) target = $region202
        $region201: #{ternary_train_forward.3} parent=185 // pred_region
          _
        $region202: #{ternary_train_forward.3} parent=185 // pred_fallthru
          _
        %s851 = sand.u32 %s49, 1
        %s852 = sand.u32 %s49, 1
        %s853 = smul.addr %s852, 128
        %s854 = scalar_lea.vmem [#allocation4], %s853
        %p855 = pneg %p62
        %p856 = pneg %p59
        %s857 = sand.u32 %s77, 1
        %s858 = sand.u32 %s77, 1
        %s859 = smul.addr %s858, 128
        %s860 = scalar_lea.vmem [#allocation5], %s859
        %p861 = pneg %p90
        %p862 = pneg %p87
        %s863 = sand.u32 %s105, 1
        %s864 = sand.u32 %s105, 1
        %s865 = smul.addr %s864, 128
        %s866 = scalar_lea.vmem [#allocation6], %s865
        %p867 = pneg %p118
        %p868 = pneg %p115
        %p869 = scmp.lt.s32.totalorder %s26, 1
        %s870 = scalar_select %p869, %s26, 1
        %s871 = scalar_lea.vmem %s3, %s870
        %p872 = pneg %p144
        %p873 = pneg %p141
        %p874 = scmp.lt.s32.totalorder %s26, 1
        %s875 = scalar_select %p874, %s26, 1
        %s876 = scalar_lea.vmem %s4, %s875
        %p877 = pneg %p170
        %p878 = pneg %p167
        %s879 = sand.u32 %s185, 1
        %s880 = sand.u32 %s185, 1
        %s881 = smul.addr %s880, 128
        %s882 = scalar_lea.vmem [#allocation7], %s881
        %p883 = pneg %p198
        %p884 = pneg %p195
        %p885 = pneg %p226
        %p886 = pneg %p223
        %s887 = sand.u32 %s213, 1
        %s888 = scalar_lea.sflag [#allocation9], %s887
        %s889 = sand.u32 %s213, 1
        %s890 = smul.addr %s889, 128
        %s891 = scalar_lea.vmem [#allocation8], %s890
        %s892 = smul.u32 16, %s25
        %s893 = smul.u32 2, %s27
        %s894 = smul.u32 32, %s27
        %s895 = smul.u32 32, %s27
        %p896 = scmp.lt.s32.totalorder %s26, 1
        %s897 = scalar_select %p896, %s26, 1
        %s898 = scalar_lea.vmem %s3, %s897
        %p899 = scmp.lt.s32.totalorder %s26, 1
        %s900 = scalar_select %p899, %s26, 1
        %s901 = scalar_lea.vmem %s4, %s900
        %s902 = smul.u32 16, %s25
        %s903 = smul.u32 16, %s25
        %p905 = scmp.eq.s32.totalorder %s27, 0
        // Predicated region
        $region203: #{ternary_train_forward.3} parent=185 // pred_check
          %p906 = pneg %p905
        $region204: #{ternary_train_forward.3} parent=185 // pred_check_branch
          %908 = sbr.rel (%p906) target = $region206
        $region205: #{ternary_train_forward.3} parent=185 // pred_region
          %909 = vst [vmem:[#allocation2] sm:$0xff] 0.0
          %910 = vst [vmem:[#allocation2 + $0x8] sm:$0xff] 0.0
          %911 = vst [vmem:[#allocation2 + $0x10] sm:$0xff] 0.0
          %912 = vst [vmem:[#allocation2 + $0x18] sm:$0xff] 0.0
          %913 = vst [vmem:[#allocation2 + $0x20] sm:$0xff] 0.0
          %914 = vst [vmem:[#allocation2 + $0x28] sm:$0xff] 0.0
          %915 = vst [vmem:[#allocation2 + $0x30] sm:$0xff] 0.0
          %916 = vst [vmem:[#allocation2 + $0x38] sm:$0xff] 0.0
          %917 = vst [vmem:[#allocation2 + $0x40] sm:$0xff] 0.0
          %918 = vst [vmem:[#allocation2 + $0x48] sm:$0xff] 0.0
          %919 = vst [vmem:[#allocation2 + $0x50] sm:$0xff] 0.0
          %920 = vst [vmem:[#allocation2 + $0x58] sm:$0xff] 0.0
          %921 = vst [vmem:[#allocation2 + $0x60] sm:$0xff] 0.0
          %922 = vst [vmem:[#allocation2 + $0x68] sm:$0xff] 0.0
          %923 = vst [vmem:[#allocation2 + $0x70] sm:$0xff] 0.0
          %924 = vst [vmem:[#allocation2 + $0x78] sm:$0xff] 0.0
          %925 = vst [vmem:[#allocation3] sm:$0xff] 0.0
          %926 = vst [vmem:[#allocation3 + $0x8] sm:$0xff] 0.0
          %927 = vst [vmem:[#allocation3 + $0x10] sm:$0xff] 0.0
          %928 = vst [vmem:[#allocation3 + $0x18] sm:$0xff] 0.0
          %929 = vst [vmem:[#allocation3 + $0x20] sm:$0xff] 0.0
          %930 = vst [vmem:[#allocation3 + $0x28] sm:$0xff] 0.0
          %931 = vst [vmem:[#allocation3 + $0x30] sm:$0xff] 0.0
          %932 = vst [vmem:[#allocation3 + $0x38] sm:$0xff] 0.0
          %933 = vst [vmem:[#allocation3 + $0x40] sm:$0xff] 0.0
          %934 = vst [vmem:[#allocation3 + $0x48] sm:$0xff] 0.0
          %935 = vst [vmem:[#allocation3 + $0x50] sm:$0xff] 0.0
          %936 = vst [vmem:[#allocation3 + $0x58] sm:$0xff] 0.0
          %937 = vst [vmem:[#allocation3 + $0x60] sm:$0xff] 0.0
          %938 = vst [vmem:[#allocation3 + $0x68] sm:$0xff] 0.0
          %939 = vst [vmem:[#allocation3 + $0x70] sm:$0xff] 0.0
          %940 = vst [vmem:[#allocation3 + $0x78] sm:$0xff] 0.0
        $region206: #{ternary_train_forward.3} parent=185 // pred_fallthru
          _
        %v941 = vld [vmem:[%s826] sm:$0xff]
        %v942 = vld [vmem:[%s826 + $0x8] sm:$0xff]
        %v943 = vld [vmem:[%s826 + $0x10] sm:$0xff]
        %v944 = vld [vmem:[%s826 + $0x18] sm:$0xff]
        %v945 = vld [vmem:[%s826 + $0x20] sm:$0xff]
        %v946 = vld [vmem:[%s826 + $0x28] sm:$0xff]
        %v947 = vld [vmem:[%s826 + $0x30] sm:$0xff]
        %v948 = vld [vmem:[%s826 + $0x38] sm:$0xff]
        %v949 = vld [vmem:[%s826 + $0x40] sm:$0xff]
        %v950 = vld [vmem:[%s826 + $0x48] sm:$0xff]
        %v951 = vld [vmem:[%s826 + $0x50] sm:$0xff]
        %v952 = vld [vmem:[%s826 + $0x58] sm:$0xff]
        %v953 = vld [vmem:[%s826 + $0x60] sm:$0xff]
        %v954 = vld [vmem:[%s826 + $0x68] sm:$0xff]
        %v955 = vld [vmem:[%s826 + $0x70] sm:$0xff]
        %v956 = vld [vmem:[%s826 + $0x78] sm:$0xff]
        %v957 = vld [vmem:[#allocation2] sm:$0xff]
        %v958 = vld [vmem:[#allocation2 + $0x8] sm:$0xff]
        %v959 = vld [vmem:[#allocation2 + $0x10] sm:$0xff]
        %v960 = vld [vmem:[#allocation2 + $0x18] sm:$0xff]
        %v961 = vld [vmem:[#allocation2 + $0x20] sm:$0xff]
        %v962 = vld [vmem:[#allocation2 + $0x28] sm:$0xff]
        %v963 = vld [vmem:[#allocation2 + $0x30] sm:$0xff]
        %v964 = vld [vmem:[#allocation2 + $0x38] sm:$0xff]
        %v965 = vld [vmem:[#allocation2 + $0x40] sm:$0xff]
        %v966 = vld [vmem:[#allocation2 + $0x48] sm:$0xff]
        %v967 = vld [vmem:[#allocation2 + $0x50] sm:$0xff]
        %v968 = vld [vmem:[#allocation2 + $0x58] sm:$0xff]
        %v969 = vld [vmem:[#allocation2 + $0x60] sm:$0xff]
        %v970 = vld [vmem:[#allocation2 + $0x68] sm:$0xff]
        %v971 = vld [vmem:[#allocation2 + $0x70] sm:$0xff]
        %v972 = vld [vmem:[#allocation2 + $0x78] sm:$0xff]
        %v973 = vld [vmem:[%s833] sm:$0xf]
        %v974 = vld [vmem:[%s833 + $0x4] sm:$0xf]
        %v975 = vld [vmem:[%s833 + $0x8] sm:$0xf]
        %v976 = vld [vmem:[%s833 + $0xc] sm:$0xf]
        %v977 = vld [vmem:[%s833 + $0x10] sm:$0xf]
        %v978 = vld [vmem:[%s833 + $0x14] sm:$0xf]
        %v979 = vld [vmem:[%s833 + $0x18] sm:$0xf]
        %v980 = vld [vmem:[%s833 + $0x1c] sm:$0xf]
        %v981 = vld [vmem:[%s833 + $0x20] sm:$0xf]
        %v982 = vld [vmem:[%s833 + $0x24] sm:$0xf]
        %v983 = vld [vmem:[%s833 + $0x28] sm:$0xf]
        %v984 = vld [vmem:[%s833 + $0x2c] sm:$0xf]
        %v985 = vld [vmem:[%s833 + $0x30] sm:$0xf]
        %v986 = vld [vmem:[%s833 + $0x34] sm:$0xf]
        %v987 = vld [vmem:[%s833 + $0x38] sm:$0xf]
        %v988 = vld [vmem:[%s833 + $0x3c] sm:$0xf]
        %v989 = vld [vmem:[%s833 + $0x40] sm:$0xf]
        %v990 = vld [vmem:[%s833 + $0x44] sm:$0xf]
        %v991 = vld [vmem:[%s833 + $0x48] sm:$0xf]
        %v992 = vld [vmem:[%s833 + $0x4c] sm:$0xf]
        %v993 = vld [vmem:[%s833 + $0x50] sm:$0xf]
        %v994 = vld [vmem:[%s833 + $0x54] sm:$0xf]
        %v995 = vld [vmem:[%s833 + $0x58] sm:$0xf]
        %v996 = vld [vmem:[%s833 + $0x5c] sm:$0xf]
        %v997 = vld [vmem:[%s833 + $0x60] sm:$0xf]
        %v998 = vld [vmem:[%s833 + $0x64] sm:$0xf]
        %v999 = vld [vmem:[%s833 + $0x68] sm:$0xf]
        %v1000 = vld [vmem:[%s833 + $0x6c] sm:$0xf]
        %v1001 = vld [vmem:[%s833 + $0x70] sm:$0xf]
        %v1002 = vld [vmem:[%s833 + $0x74] sm:$0xf]
        %v1003 = vld [vmem:[%s833 + $0x78] sm:$0xf]
        %v1004 = vld [vmem:[%s833 + $0x7c] sm:$0xf]
        %v1021 = vunpack.c.l.b16 %v941
        %v1022 = vunpack.c.h.b16 %v941
        %v1023 = vunpack.c.l.b16 %v942
        %v1024 = vunpack.c.h.b16 %v942
        %v1025 = vunpack.c.l.b16 %v943
        %v1026 = vunpack.c.h.b16 %v943
        %v1027 = vunpack.c.l.b16 %v944
        %v1028 = vunpack.c.h.b16 %v944
        %v1029 = vunpack.c.l.b16 %v945
        %v1030 = vunpack.c.h.b16 %v945
        %v1031 = vunpack.c.l.b16 %v946
        %v1032 = vunpack.c.h.b16 %v946
        %v1033 = vunpack.c.l.b16 %v947
        %v1034 = vunpack.c.h.b16 %v947
        %v1035 = vunpack.c.l.b16 %v948
        %v1036 = vunpack.c.h.b16 %v948
        %v1037 = vunpack.c.l.b16 %v949
        %v1038 = vunpack.c.h.b16 %v949
        %v1039 = vunpack.c.l.b16 %v950
        %v1040 = vunpack.c.h.b16 %v950
        %v1041 = vunpack.c.l.b16 %v951
        %v1042 = vunpack.c.h.b16 %v951
        %v1043 = vunpack.c.l.b16 %v952
        %v1044 = vunpack.c.h.b16 %v952
        %v1045 = vunpack.c.l.b16 %v953
        %v1046 = vunpack.c.h.b16 %v953
        %v1047 = vunpack.c.l.b16 %v954
        %v1048 = vunpack.c.h.b16 %v954
        %v1049 = vunpack.c.l.b16 %v955
        %v1050 = vunpack.c.h.b16 %v955
        %v1051 = vunpack.c.l.b16 %v956
        %v1052 = vunpack.c.h.b16 %v956
        %v1053 = vpack.c.b16 %v1023, %v1021
        %v1054 = vpack.c.b16 %v1024, %v1022
        %v1055 = vpack.c.b16 %v1027, %v1025
        %v1056 = vpack.c.b16 %v1028, %v1026
        %v1057 = vpack.c.b16 %v1031, %v1029
        %v1058 = vpack.c.b16 %v1032, %v1030
        %v1059 = vpack.c.b16 %v1035, %v1033
        %v1060 = vpack.c.b16 %v1036, %v1034
        %v1061 = vpack.c.b16 %v1039, %v1037
        %v1062 = vpack.c.b16 %v1040, %v1038
        %v1063 = vpack.c.b16 %v1043, %v1041
        %v1064 = vpack.c.b16 %v1044, %v1042
        %v1065 = vpack.c.b16 %v1047, %v1045
        %v1066 = vpack.c.b16 %v1048, %v1046
        %v1067 = vpack.c.b16 %v1051, %v1049
        %v1068 = vpack.c.b16 %v1052, %v1050
        %v1117 = vunpack.c.l.b16 %v973
        %v1118 = vunpack.c.l.b16 %v974
        %v1119 = vunpack.c.l.b16 %v975
        %v1120 = vunpack.c.l.b16 %v976
        %v1121 = vunpack.c.l.b16 %v977
        %v1122 = vunpack.c.l.b16 %v978
        %v1123 = vunpack.c.l.b16 %v979
        %v1124 = vunpack.c.l.b16 %v980
        %v1125 = vunpack.c.l.b16 %v981
        %v1126 = vunpack.c.l.b16 %v982
        %v1127 = vunpack.c.l.b16 %v983
        %v1128 = vunpack.c.l.b16 %v984
        %v1129 = vunpack.c.l.b16 %v985
        %v1130 = vunpack.c.l.b16 %v986
        %v1131 = vunpack.c.l.b16 %v987
        %v1132 = vunpack.c.l.b16 %v988
        %v1133 = vunpack.c.l.b16 %v989
        %v1134 = vunpack.c.l.b16 %v990
        %v1135 = vunpack.c.l.b16 %v991
        %v1136 = vunpack.c.l.b16 %v992
        %v1137 = vunpack.c.l.b16 %v993
        %v1138 = vunpack.c.l.b16 %v994
        %v1139 = vunpack.c.l.b16 %v995
        %v1140 = vunpack.c.l.b16 %v996
        %v1141 = vunpack.c.l.b16 %v997
        %v1142 = vunpack.c.l.b16 %v998
        %v1143 = vunpack.c.l.b16 %v999
        %v1144 = vunpack.c.l.b16 %v1000
        %v1145 = vunpack.c.l.b16 %v1001
        %v1146 = vunpack.c.l.b16 %v1002
        %v1147 = vunpack.c.l.b16 %v1003
        %v1148 = vunpack.c.l.b16 %v1004
        %v1149 = vpack.c.b16 %v1118, %v1117
        %v1150 = vpack.c.b16 %v1120, %v1119
        %v1151 = vpack.c.b16 %v1122, %v1121
        %v1152 = vpack.c.b16 %v1124, %v1123
        %v1153 = vpack.c.b16 %v1126, %v1125
        %v1154 = vpack.c.b16 %v1128, %v1127
        %v1155 = vpack.c.b16 %v1130, %v1129
        %v1156 = vpack.c.b16 %v1132, %v1131
        %v1157 = vpack.c.b16 %v1134, %v1133
        %v1158 = vpack.c.b16 %v1136, %v1135
        %v1159 = vpack.c.b16 %v1138, %v1137
        %v1160 = vpack.c.b16 %v1140, %v1139
        %v1161 = vpack.c.b16 %v1142, %v1141
        %v1162 = vpack.c.b16 %v1144, %v1143
        %v1163 = vpack.c.b16 %v1146, %v1145
        %v1164 = vpack.c.b16 %v1148, %v1147
        %1181 = vmatprep.subr.bf16.mxu0 0
        %1182 = vmatpush1.bf16.msra.mxu0 %v1149
        %1183 = vmatprep.subr.bf16.mxu0 0
        %1184 = vmatpush1.bf16.msra.mxu0 %v1150
        %1185 = vmatprep.subr.bf16.mxu0 0
        %1186 = vmatpush1.bf16.msra.mxu0 %v1151
        %1187 = vmatprep.subr.bf16.mxu0 0
        %1188 = vmatpush1.bf16.msra.mxu0 %v1152
        %1189 = vmatprep.subr.bf16.mxu0 0
        %1190 = vmatpush1.bf16.msra.mxu0 %v1153
        %1191 = vmatprep.subr.bf16.mxu0 0
        %1192 = vmatpush1.bf16.msra.mxu0 %v1154
        %1193 = vmatprep.subr.bf16.mxu0 0
        %1194 = vmatpush1.bf16.msra.mxu0 %v1155
        %1195 = vmatprep.subr.bf16.mxu0 0
        %1196 = vmatpush1.bf16.msra.mxu0 %v1156
        %1197 = vmatprep.subr.bf16.mxu0 0
        %1198 = vmatpush1.bf16.msra.mxu0 %v1157
        %1199 = vmatprep.subr.bf16.mxu0 0
        %1200 = vmatpush1.bf16.msra.mxu0 %v1158
        %1201 = vmatprep.subr.bf16.mxu0 0
        %1202 = vmatpush1.bf16.msra.mxu0 %v1159
        %1203 = vmatprep.subr.bf16.mxu0 0
        %1204 = vmatpush1.bf16.msra.mxu0 %v1160
        %1205 = vmatprep.subr.bf16.mxu0 0
        %1206 = vmatpush1.bf16.msra.mxu0 %v1161
        %1207 = vmatprep.subr.bf16.mxu0 0
        %1208 = vmatpush1.bf16.msra.mxu0 %v1162
        %1209 = vmatprep.subr.bf16.mxu0 0
        %1210 = vmatpush1.bf16.msra.mxu0 %v1163
        %1211 = vmatprep.subr.bf16.mxu0 0
        %1212 = vmatpush1.bf16.msra.mxu0 %v1164
        %1213 = vmatprep.mubr.bf16.mxu0 %v1054
        %1214 = vmatmul.mubr.bf16.gmra.mrb[0].mxu0 %v1053
        %v1215 = vpop.f32.mrb[0].mxu0
        %v1216 = vadd.f32 0.0, %v1215
        %v1217 = vpop.f32.mrb[0].mxu0
        %v1218 = vpop.f32.mrb[0].mxu0
        %v1219 = vadd.f32 0.0, %v1218
        %v1220 = vpop.f32.mrb[0].mxu0
        %1221 = vmatprep.mubr.bf16.mxu0 %v1056
        %1222 = vmatmul.mubr.bf16.gmra.mrb[0].mxu0 %v1055
        %v1223 = vpop.f32.mrb[0].mxu0
        %v1224 = vadd.f32 0.0, %v1223
        %v1225 = vpop.f32.mrb[0].mxu0
        %v1226 = vpop.f32.mrb[0].mxu0
        %v1227 = vadd.f32 0.0, %v1226
        %v1228 = vpop.f32.mrb[0].mxu0
        %1229 = vmatprep.mubr.bf16.mxu0 %v1058
        %1230 = vmatmul.mubr.bf16.gmra.mrb[0].mxu0 %v1057
        %v1231 = vpop.f32.mrb[0].mxu0
        %v1232 = vadd.f32 0.0, %v1231
        %v1233 = vpop.f32.mrb[0].mxu0
        %v1234 = vpop.f32.mrb[0].mxu0
        %v1235 = vadd.f32 0.0, %v1234
        %v1236 = vpop.f32.mrb[0].mxu0
        %1237 = vmatprep.mubr.bf16.mxu0 %v1060
        %1238 = vmatmul.mubr.bf16.gmra.mrb[0].mxu0 %v1059
        %v1239 = vpop.f32.mrb[0].mxu0
        %v1240 = vadd.f32 0.0, %v1239
        %v1241 = vpop.f32.mrb[0].mxu0
        %v1242 = vpop.f32.mrb[0].mxu0
        %v1243 = vadd.f32 0.0, %v1242
        %v1244 = vpop.f32.mrb[0].mxu0
        %1245 = vmatprep.mubr.bf16.mxu0 %v1062
        %1246 = vmatmul.mubr.bf16.gmra.mrb[0].mxu0 %v1061
        %v1247 = vpop.f32.mrb[0].mxu0
        %v1248 = vadd.f32 0.0, %v1247
        %v1249 = vpop.f32.mrb[0].mxu0
        %v1250 = vpop.f32.mrb[0].mxu0
        %v1251 = vadd.f32 0.0, %v1250
        %v1252 = vpop.f32.mrb[0].mxu0
        %1253 = vmatprep.mubr.bf16.mxu0 %v1064
        %1254 = vmatmul.mubr.bf16.gmra.mrb[0].mxu0 %v1063
        %v1255 = vpop.f32.mrb[0].mxu0
        %v1256 = vadd.f32 0.0, %v1255
        %v1257 = vpop.f32.mrb[0].mxu0
        %v1258 = vpop.f32.mrb[0].mxu0
        %v1259 = vadd.f32 0.0, %v1258
        %v1260 = vpop.f32.mrb[0].mxu0
        %1261 = vmatprep.mubr.bf16.mxu0 %v1066
        %1262 = vmatmul.mubr.bf16.gmra.mrb[0].mxu0 %v1065
        %v1263 = vpop.f32.mrb[0].mxu0
        %v1264 = vadd.f32 0.0, %v1263
        %v1265 = vpop.f32.mrb[0].mxu0
        %v1266 = vpop.f32.mrb[0].mxu0
        %v1267 = vadd.f32 0.0, %v1266
        %v1268 = vpop.f32.mrb[0].mxu0
        %1269 = vmatprep.mubr.bf16.mxu0 %v1068
        %1270 = vmatmul.mubr.bf16.gmra.mrb[0].mxu0 %v1067
        %v1271 = vpop.f32.mrb[0].mxu0
        %v1272 = vadd.f32 0.0, %v1271
        %v1273 = vpop.f32.mrb[0].mxu0
        %v1274 = vpop.f32.mrb[0].mxu0
        %v1275 = vadd.f32 0.0, %v1274
        %v1276 = vpop.f32.mrb[0].mxu0
        %1277 = vdwg.mxu0
        %v1278 = vadd.f32 %v957, %v1216
        %v1279 = vadd.f32 %v958, %v1219
        %v1280 = vadd.f32 %v959, %v1224
        %v1281 = vadd.f32 %v960, %v1227
        %v1282 = vadd.f32 %v961, %v1232
        %v1283 = vadd.f32 %v962, %v1235
        %v1284 = vadd.f32 %v963, %v1240
        %v1285 = vadd.f32 %v964, %v1243
        %v1286 = vadd.f32 %v965, %v1248
        %v1287 = vadd.f32 %v966, %v1251
        %v1288 = vadd.f32 %v967, %v1256
        %v1289 = vadd.f32 %v968, %v1259
        %v1290 = vadd.f32 %v969, %v1264
        %v1291 = vadd.f32 %v970, %v1267
        %v1292 = vadd.f32 %v971, %v1272
        %v1293 = vadd.f32 %v972, %v1275
        %1294 = vst [vmem:[#allocation2] sm:$0xff] %v1278
        %1295 = vst [vmem:[#allocation2 + $0x8] sm:$0xff] %v1279
        %1296 = vst [vmem:[#allocation2 + $0x10] sm:$0xff] %v1280
        %1297 = vst [vmem:[#allocation2 + $0x18] sm:$0xff] %v1281
        %1298 = vst [vmem:[#allocation2 + $0x20] sm:$0xff] %v1282
        %1299 = vst [vmem:[#allocation2 + $0x28] sm:$0xff] %v1283
        %1300 = vst [vmem:[#allocation2 + $0x30] sm:$0xff] %v1284
        %1301 = vst [vmem:[#allocation2 + $0x38] sm:$0xff] %v1285
        %1302 = vst [vmem:[#allocation2 + $0x40] sm:$0xff] %v1286
        %1303 = vst [vmem:[#allocation2 + $0x48] sm:$0xff] %v1287
        %1304 = vst [vmem:[#allocation2 + $0x50] sm:$0xff] %v1288
        %1305 = vst [vmem:[#allocation2 + $0x58] sm:$0xff] %v1289
        %1306 = vst [vmem:[#allocation2 + $0x60] sm:$0xff] %v1290
        %1307 = vst [vmem:[#allocation2 + $0x68] sm:$0xff] %v1291
        %1308 = vst [vmem:[#allocation2 + $0x70] sm:$0xff] %v1292
        %1309 = vst [vmem:[#allocation2 + $0x78] sm:$0xff] %v1293
        %v1310 = vld [vmem:[#allocation3] sm:$0xff]
        %v1311 = vld [vmem:[#allocation3 + $0x8] sm:$0xff]
        %v1312 = vld [vmem:[#allocation3 + $0x10] sm:$0xff]
        %v1313 = vld [vmem:[#allocation3 + $0x18] sm:$0xff]
        %v1314 = vld [vmem:[#allocation3 + $0x20] sm:$0xff]
        %v1315 = vld [vmem:[#allocation3 + $0x28] sm:$0xff]
        %v1316 = vld [vmem:[#allocation3 + $0x30] sm:$0xff]
        %v1317 = vld [vmem:[#allocation3 + $0x38] sm:$0xff]
        %v1318 = vld [vmem:[#allocation3 + $0x40] sm:$0xff]
        %v1319 = vld [vmem:[#allocation3 + $0x48] sm:$0xff]
        %v1320 = vld [vmem:[#allocation3 + $0x50] sm:$0xff]
        %v1321 = vld [vmem:[#allocation3 + $0x58] sm:$0xff]
        %v1322 = vld [vmem:[#allocation3 + $0x60] sm:$0xff]
        %v1323 = vld [vmem:[#allocation3 + $0x68] sm:$0xff]
        %v1324 = vld [vmem:[#allocation3 + $0x70] sm:$0xff]
        %v1325 = vld [vmem:[#allocation3 + $0x78] sm:$0xff]
        %v1326 = vmul.bf16 %v941, %v941
        %v1327 = vmul.bf16 %v942, %v942
        %v1328 = vmul.bf16 %v943, %v943
        %v1329 = vmul.bf16 %v944, %v944
        %v1330 = vmul.bf16 %v945, %v945
        %v1331 = vmul.bf16 %v946, %v946
        %v1332 = vmul.bf16 %v947, %v947
        %v1333 = vmul.bf16 %v948, %v948
        %v1334 = vmul.bf16 %v949, %v949
        %v1335 = vmul.bf16 %v950, %v950
        %v1336 = vmul.bf16 %v951, %v951
        %v1337 = vmul.bf16 %v952, %v952
        %v1338 = vmul.bf16 %v953, %v953
        %v1339 = vmul.bf16 %v954, %v954
        %v1340 = vmul.bf16 %v955, %v955
        %v1341 = vmul.bf16 %v956, %v956
        %v1342 = vld [vmem:[%s840] sm:$0xf]
        %v1343 = vld [vmem:[%s840 + $0x4] sm:$0xf]
        %v1344 = vld [vmem:[%s840 + $0x8] sm:$0xf]
        %v1345 = vld [vmem:[%s840 + $0xc] sm:$0xf]
        %v1346 = vld [vmem:[%s840 + $0x10] sm:$0xf]
        %v1347 = vld [vmem:[%s840 + $0x14] sm:$0xf]
        %v1348 = vld [vmem:[%s840 + $0x18] sm:$0xf]
        %v1349 = vld [vmem:[%s840 + $0x1c] sm:$0xf]
        %v1350 = vld [vmem:[%s840 + $0x20] sm:$0xf]
        %v1351 = vld [vmem:[%s840 + $0x24] sm:$0xf]
        %v1352 = vld [vmem:[%s840 + $0x28] sm:$0xf]
        %v1353 = vld [vmem:[%s840 + $0x2c] sm:$0xf]
        %v1354 = vld [vmem:[%s840 + $0x30] sm:$0xf]
        %v1355 = vld [vmem:[%s840 + $0x34] sm:$0xf]
        %v1356 = vld [vmem:[%s840 + $0x38] sm:$0xf]
        %v1357 = vld [vmem:[%s840 + $0x3c] sm:$0xf]
        %v1358 = vld [vmem:[%s840 + $0x40] sm:$0xf]
        %v1359 = vld [vmem:[%s840 + $0x44] sm:$0xf]
        %v1360 = vld [vmem:[%s840 + $0x48] sm:$0xf]
        %v1361 = vld [vmem:[%s840 + $0x4c] sm:$0xf]
        %v1362 = vld [vmem:[%s840 + $0x50] sm:$0xf]
        %v1363 = vld [vmem:[%s840 + $0x54] sm:$0xf]
        %v1364 = vld [vmem:[%s840 + $0x58] sm:$0xf]
        %v1365 = vld [vmem:[%s840 + $0x5c] sm:$0xf]
        %v1366 = vld [vmem:[%s840 + $0x60] sm:$0xf]
        %v1367 = vld [vmem:[%s840 + $0x64] sm:$0xf]
        %v1368 = vld [vmem:[%s840 + $0x68] sm:$0xf]
        %v1369 = vld [vmem:[%s840 + $0x6c] sm:$0xf]
        %v1370 = vld [vmem:[%s840 + $0x70] sm:$0xf]
        %v1371 = vld [vmem:[%s840 + $0x74] sm:$0xf]
        %v1372 = vld [vmem:[%s840 + $0x78] sm:$0xf]
        %v1373 = vld [vmem:[%s840 + $0x7c] sm:$0xf]
        %v1390 = vunpack.c.l.b16 %v1326
        %v1391 = vunpack.c.h.b16 %v1326
        %v1392 = vunpack.c.l.b16 %v1327
        %v1393 = vunpack.c.h.b16 %v1327
        %v1394 = vunpack.c.l.b16 %v1328
        %v1395 = vunpack.c.h.b16 %v1328
        %v1396 = vunpack.c.l.b16 %v1329
        %v1397 = vunpack.c.h.b16 %v1329
        %v1398 = vunpack.c.l.b16 %v1330
        %v1399 = vunpack.c.h.b16 %v1330
        %v1400 = vunpack.c.l.b16 %v1331
        %v1401 = vunpack.c.h.b16 %v1331
        %v1402 = vunpack.c.l.b16 %v1332
        %v1403 = vunpack.c.h.b16 %v1332
        %v1404 = vunpack.c.l.b16 %v1333
        %v1405 = vunpack.c.h.b16 %v1333
        %v1406 = vunpack.c.l.b16 %v1334
        %v1407 = vunpack.c.h.b16 %v1334
        %v1408 = vunpack.c.l.b16 %v1335
        %v1409 = vunpack.c.h.b16 %v1335
        %v1410 = vunpack.c.l.b16 %v1336
        %v1411 = vunpack.c.h.b16 %v1336
        %v1412 = vunpack.c.l.b16 %v1337
        %v1413 = vunpack.c.h.b16 %v1337
        %v1414 = vunpack.c.l.b16 %v1338
        %v1415 = vunpack.c.h.b16 %v1338
        %v1416 = vunpack.c.l.b16 %v1339
        %v1417 = vunpack.c.h.b16 %v1339
        %v1418 = vunpack.c.l.b16 %v1340
        %v1419 = vunpack.c.h.b16 %v1340
        %v1420 = vunpack.c.l.b16 %v1341
        %v1421 = vunpack.c.h.b16 %v1341
        %v1422 = vpack.c.b16 %v1392, %v1390
        %v1423 = vpack.c.b16 %v1393, %v1391
        %v1424 = vpack.c.b16 %v1396, %v1394
        %v1425 = vpack.c.b16 %v1397, %v1395
        %v1426 = vpack.c.b16 %v1400, %v1398
        %v1427 = vpack.c.b16 %v1401, %v1399
        %v1428 = vpack.c.b16 %v1404, %v1402
        %v1429 = vpack.c.b16 %v1405, %v1403
        %v1430 = vpack.c.b16 %v1408, %v1406
        %v1431 = vpack.c.b16 %v1409, %v1407
        %v1432 = vpack.c.b16 %v1412, %v1410
        %v1433 = vpack.c.b16 %v1413, %v1411
        %v1434 = vpack.c.b16 %v1416, %v1414
        %v1435 = vpack.c.b16 %v1417, %v1415
        %v1436 = vpack.c.b16 %v1420, %v1418
        %v1437 = vpack.c.b16 %v1421, %v1419
        %v1486 = vunpack.c.l.b16 %v1342
        %v1487 = vunpack.c.l.b16 %v1343
        %v1488 = vunpack.c.l.b16 %v1344
        %v1489 = vunpack.c.l.b16 %v1345
        %v1490 = vunpack.c.l.b16 %v1346
        %v1491 = vunpack.c.l.b16 %v1347
        %v1492 = vunpack.c.l.b16 %v1348
        %v1493 = vunpack.c.l.b16 %v1349
        %v1494 = vunpack.c.l.b16 %v1350
        %v1495 = vunpack.c.l.b16 %v1351
        %v1496 = vunpack.c.l.b16 %v1352
        %v1497 = vunpack.c.l.b16 %v1353
        %v1498 = vunpack.c.l.b16 %v1354
        %v1499 = vunpack.c.l.b16 %v1355
        %v1500 = vunpack.c.l.b16 %v1356
        %v1501 = vunpack.c.l.b16 %v1357
        %v1502 = vunpack.c.l.b16 %v1358
        %v1503 = vunpack.c.l.b16 %v1359
        %v1504 = vunpack.c.l.b16 %v1360
        %v1505 = vunpack.c.l.b16 %v1361
        %v1506 = vunpack.c.l.b16 %v1362
        %v1507 = vunpack.c.l.b16 %v1363
        %v1508 = vunpack.c.l.b16 %v1364
        %v1509 = vunpack.c.l.b16 %v1365
        %v1510 = vunpack.c.l.b16 %v1366
        %v1511 = vunpack.c.l.b16 %v1367
        %v1512 = vunpack.c.l.b16 %v1368
        %v1513 = vunpack.c.l.b16 %v1369
        %v1514 = vunpack.c.l.b16 %v1370
        %v1515 = vunpack.c.l.b16 %v1371
        %v1516 = vunpack.c.l.b16 %v1372
        %v1517 = vunpack.c.l.b16 %v1373
        %v1518 = vpack.c.b16 %v1487, %v1486
        %v1519 = vpack.c.b16 %v1489, %v1488
        %v1520 = vpack.c.b16 %v1491, %v1490
        %v1521 = vpack.c.b16 %v1493, %v1492
        %v1522 = vpack.c.b16 %v1495, %v1494
        %v1523 = vpack.c.b16 %v1497, %v1496
        %v1524 = vpack.c.b16 %v1499, %v1498
        %v1525 = vpack.c.b16 %v1501, %v1500
        %v1526 = vpack.c.b16 %v1503, %v1502
        %v1527 = vpack.c.b16 %v1505, %v1504
        %v1528 = vpack.c.b16 %v1507, %v1506
        %v1529 = vpack.c.b16 %v1509, %v1508
        %v1530 = vpack.c.b16 %v1511, %v1510
        %v1531 = vpack.c.b16 %v1513, %v1512
        %v1532 = vpack.c.b16 %v1515, %v1514
        %v1533 = vpack.c.b16 %v1517, %v1516
        %1550 = vmatprep.subr.bf16.mxu0 0
        %1551 = vmatpush1.bf16.msra.mxu0 %v1518
        %1552 = vmatprep.subr.bf16.mxu0 0
        %1553 = vmatpush1.bf16.msra.mxu0 %v1519
        %1554 = vmatprep.subr.bf16.mxu0 0
        %1555 = vmatpush1.bf16.msra.mxu0 %v1520
        %1556 = vmatprep.subr.bf16.mxu0 0
        %1557 = vmatpush1.bf16.msra.mxu0 %v1521
        %1558 = vmatprep.subr.bf16.mxu0 0
        %1559 = vmatpush1.bf16.msra.mxu0 %v1522
        %1560 = vmatprep.subr.bf16.mxu0 0
        %1561 = vmatpush1.bf16.msra.mxu0 %v1523
        %1562 = vmatprep.subr.bf16.mxu0 0
        %1563 = vmatpush1.bf16.msra.mxu0 %v1524
        %1564 = vmatprep.subr.bf16.mxu0 0
        %1565 = vmatpush1.bf16.msra.mxu0 %v1525
        %1566 = vmatprep.subr.bf16.mxu0 0
        %1567 = vmatpush1.bf16.msra.mxu0 %v1526
        %1568 = vmatprep.subr.bf16.mxu0 0
        %1569 = vmatpush1.bf16.msra.mxu0 %v1527
        %1570 = vmatprep.subr.bf16.mxu0 0
        %1571 = vmatpush1.bf16.msra.mxu0 %v1528
        %1572 = vmatprep.subr.bf16.mxu0 0
        %1573 = vmatpush1.bf16.msra.mxu0 %v1529
        %1574 = vmatprep.subr.bf16.mxu0 0
        %1575 = vmatpush1.bf16.msra.mxu0 %v1530
        %1576 = vmatprep.subr.bf16.mxu0 0
        %1577 = vmatpush1.bf16.msra.mxu0 %v1531
        %1578 = vmatprep.subr.bf16.mxu0 0
        %1579 = vmatpush1.bf16.msra.mxu0 %v1532
        %1580 = vmatprep.subr.bf16.mxu0 0
        %1581 = vmatpush1.bf16.msra.mxu0 %v1533
        %1582 = vmatprep.mubr.bf16.mxu0 %v1423
        %1583 = vmatmul.mubr.bf16.gmra.mrb[0].mxu0 %v1422
        %v1584 = vpop.f32.mrb[0].mxu0
        %v1585 = vadd.f32 0.0, %v1584
        %v1586 = vpop.f32.mrb[0].mxu0
        %v1587 = vpop.f32.mrb[0].mxu0
        %v1588 = vadd.f32 0.0, %v1587
        %v1589 = vpop.f32.mrb[0].mxu0
        %1590 = vmatprep.mubr.bf16.mxu0 %v1425
        %1591 = vmatmul.mubr.bf16.gmra.mrb[0].mxu0 %v1424
        %v1592 = vpop.f32.mrb[0].mxu0
        %v1593 = vadd.f32 0.0, %v1592
        %v1594 = vpop.f32.mrb[0].mxu0
        %v1595 = vpop.f32.mrb[0].mxu0
        %v1596 = vadd.f32 0.0, %v1595
        %v1597 = vpop.f32.mrb[0].mxu0
        %1598 = vmatprep.mubr.bf16.mxu0 %v1427
        %1599 = vmatmul.mubr.bf16.gmra.mrb[0].mxu0 %v1426
        %v1600 = vpop.f32.mrb[0].mxu0
        %v1601 = vadd.f32 0.0, %v1600
        %v1602 = vpop.f32.mrb[0].mxu0
        %v1603 = vpop.f32.mrb[0].mxu0
        %v1604 = vadd.f32 0.0, %v1603
        %v1605 = vpop.f32.mrb[0].mxu0
        %1606 = vmatprep.mubr.bf16.mxu0 %v1429
        %1607 = vmatmul.mubr.bf16.gmra.mrb[0].mxu0 %v1428
        %v1608 = vpop.f32.mrb[0].mxu0
        %v1609 = vadd.f32 0.0, %v1608
        %v1610 = vpop.f32.mrb[0].mxu0
        %v1611 = vpop.f32.mrb[0].mxu0
        %v1612 = vadd.f32 0.0, %v1611
        %v1613 = vpop.f32.mrb[0].mxu0
        %1614 = vmatprep.mubr.bf16.mxu0 %v1431
        %1615 = vmatmul.mubr.bf16.gmra.mrb[0].mxu0 %v1430
        %v1616 = vpop.f32.mrb[0].mxu0
        %v1617 = vadd.f32 0.0, %v1616
        %v1618 = vpop.f32.mrb[0].mxu0
        %v1619 = vpop.f32.mrb[0].mxu0
        %v1620 = vadd.f32 0.0, %v1619
        %v1621 = vpop.f32.mrb[0].mxu0
        %1622 = vmatprep.mubr.bf16.mxu0 %v1433
        %1623 = vmatmul.mubr.bf16.gmra.mrb[0].mxu0 %v1432
        %v1624 = vpop.f32.mrb[0].mxu0
        %v1625 = vadd.f32 0.0, %v1624
        %v1626 = vpop.f32.mrb[0].mxu0
        %v1627 = vpop.f32.mrb[0].mxu0
        %v1628 = vadd.f32 0.0, %v1627
        %v1629 = vpop.f32.mrb[0].mxu0
        %1630 = vmatprep.mubr.bf16.mxu0 %v1435
        %1631 = vmatmul.mubr.bf16.gmra.mrb[0].mxu0 %v1434
        %v1632 = vpop.f32.mrb[0].mxu0
        %v1633 = vadd.f32 0.0, %v1632
        %v1634 = vpop.f32.mrb[0].mxu0
        %v1635 = vpop.f32.mrb[0].mxu0
        %v1636 = vadd.f32 0.0, %v1635
        %v1637 = vpop.f32.mrb[0].mxu0
        %1638 = vmatprep.mubr.bf16.mxu0 %v1437
        %1639 = vmatmul.mubr.bf16.gmra.mrb[0].mxu0 %v1436
        %v1640 = vpop.f32.mrb[0].mxu0
        %v1641 = vadd.f32 0.0, %v1640
        %v1642 = vpop.f32.mrb[0].mxu0
        %v1643 = vpop.f32.mrb[0].mxu0
        %v1644 = vadd.f32 0.0, %v1643
        %v1645 = vpop.f32.mrb[0].mxu0
        %1646 = vdwg.mxu0
        %v1647 = vadd.f32 %v1310, %v1585
        %v1648 = vadd.f32 %v1311, %v1588
        %v1649 = vadd.f32 %v1312, %v1593
        %v1650 = vadd.f32 %v1313, %v1596
        %v1651 = vadd.f32 %v1314, %v1601
        %v1652 = vadd.f32 %v1315, %v1604
        %v1653 = vadd.f32 %v1316, %v1609
        %v1654 = vadd.f32 %v1317, %v1612
        %v1655 = vadd.f32 %v1318, %v1617
        %v1656 = vadd.f32 %v1319, %v1620
        %v1657 = vadd.f32 %v1320, %v1625
        %v1658 = vadd.f32 %v1321, %v1628
        %v1659 = vadd.f32 %v1322, %v1633
        %v1660 = vadd.f32 %v1323, %v1636
        %v1661 = vadd.f32 %v1324, %v1641
        %v1662 = vadd.f32 %v1325, %v1644
        %1663 = vst [vmem:[#allocation3] sm:$0xff] %v1647
        %1664 = vst [vmem:[#allocation3 + $0x8] sm:$0xff] %v1648
        %1665 = vst [vmem:[#allocation3 + $0x10] sm:$0xff] %v1649
        %1666 = vst [vmem:[#allocation3 + $0x18] sm:$0xff] %v1650
        %1667 = vst [vmem:[#allocation3 + $0x20] sm:$0xff] %v1651
        %1668 = vst [vmem:[#allocation3 + $0x28] sm:$0xff] %v1652
        %1669 = vst [vmem:[#allocation3 + $0x30] sm:$0xff] %v1653
        %1670 = vst [vmem:[#allocation3 + $0x38] sm:$0xff] %v1654
        %1671 = vst [vmem:[#allocation3 + $0x40] sm:$0xff] %v1655
        %1672 = vst [vmem:[#allocation3 + $0x48] sm:$0xff] %v1656
        %1673 = vst [vmem:[#allocation3 + $0x50] sm:$0xff] %v1657
        %1674 = vst [vmem:[#allocation3 + $0x58] sm:$0xff] %v1658
        %1675 = vst [vmem:[#allocation3 + $0x60] sm:$0xff] %v1659
        %1676 = vst [vmem:[#allocation3 + $0x68] sm:$0xff] %v1660
        %1677 = vst [vmem:[#allocation3 + $0x70] sm:$0xff] %v1661
        %1678 = vst [vmem:[#allocation3 + $0x78] sm:$0xff] %v1662
        %p1679 = scmp.eq.s32.totalorder %s27, 1
        // Predicated region
        $region207: #{ternary_train_forward.3} parent=185 // pred_check
          %p1680 = pneg %p1679
        $region208: #{ternary_train_forward.3} parent=185 // pred_check_branch
          %1682 = sbr.rel (%p1680) target = $region210
        $region209: #{ternary_train_forward.3} parent=185 // pred_region
          %v1683 = vld [vmem:[#allocation3] sm:$0xff]
          %v1684 = vld [vmem:[#allocation3 + $0x8] sm:$0xff]
          %v1685 = vld [vmem:[#allocation3 + $0x10] sm:$0xff]
          %v1686 = vld [vmem:[#allocation3 + $0x18] sm:$0xff]
          %v1687 = vld [vmem:[#allocation3 + $0x20] sm:$0xff]
          %v1688 = vld [vmem:[#allocation3 + $0x28] sm:$0xff]
          %v1689 = vld [vmem:[#allocation3 + $0x30] sm:$0xff]
          %v1690 = vld [vmem:[#allocation3 + $0x38] sm:$0xff]
          %v1691 = vld [vmem:[#allocation3 + $0x40] sm:$0xff]
          %v1692 = vld [vmem:[#allocation3 + $0x48] sm:$0xff]
          %v1693 = vld [vmem:[#allocation3 + $0x50] sm:$0xff]
          %v1694 = vld [vmem:[#allocation3 + $0x58] sm:$0xff]
          %v1695 = vld [vmem:[#allocation3 + $0x60] sm:$0xff]
          %v1696 = vld [vmem:[#allocation3 + $0x68] sm:$0xff]
          %v1697 = vld [vmem:[#allocation3 + $0x70] sm:$0xff]
          %v1698 = vld [vmem:[#allocation3 + $0x78] sm:$0xff]
          %v1699 = vmax.f32 %v1683, 0.0001
          %v1700 = vmax.f32 %v1684, 0.0001
          %v1701 = vmax.f32 %v1685, 0.0001
          %v1702 = vmax.f32 %v1686, 0.0001
          %v1703 = vmax.f32 %v1687, 0.0001
          %v1704 = vmax.f32 %v1688, 0.0001
          %v1705 = vmax.f32 %v1689, 0.0001
          %v1706 = vmax.f32 %v1690, 0.0001
          %v1707 = vmax.f32 %v1691, 0.0001
          %v1708 = vmax.f32 %v1692, 0.0001
          %v1709 = vmax.f32 %v1693, 0.0001
          %v1710 = vmax.f32 %v1694, 0.0001
          %v1711 = vmax.f32 %v1695, 0.0001
          %v1712 = vmax.f32 %v1696, 0.0001
          %v1713 = vmax.f32 %v1697, 0.0001
          %v1714 = vmax.f32 %v1698, 0.0001
          %v1715 = vrsqrt.pop %v1699
          %v1716 = vmul.f32 %v1699, %v1715
          %vm1717 = vcmp.eq.f32.partialorder %v1699, inf
          %v1718 = vsel %vm1717, %v1699, %v1716
          %vm1719 = vcmp.eq.f32.partialorder %v1699, 0.0
          %v1720 = vand.u32 %v1699, 2147483648
          %v1721 = vsel %vm1719, %v1720, %v1718
          %v1722 = vrsqrt.pop %v1700
          %v1723 = vmul.f32 %v1700, %v1722
          %vm1724 = vcmp.eq.f32.partialorder %v1700, inf
          %v1725 = vsel %vm1724, %v1700, %v1723
          %vm1726 = vcmp.eq.f32.partialorder %v1700, 0.0
          %v1727 = vand.u32 %v1700, 2147483648
          %v1728 = vsel %vm1726, %v1727, %v1725
          %v1729 = vrsqrt.pop %v1701
          %v1730 = vmul.f32 %v1701, %v1729
          %vm1731 = vcmp.eq.f32.partialorder %v1701, inf
          %v1732 = vsel %vm1731, %v1701, %v1730
          %vm1733 = vcmp.eq.f32.partialorder %v1701, 0.0
          %v1734 = vand.u32 %v1701, 2147483648
          %v1735 = vsel %vm1733, %v1734, %v1732
          %v1736 = vrsqrt.pop %v1702
          %v1737 = vmul.f32 %v1702, %v1736
          %vm1738 = vcmp.eq.f32.partialorder %v1702, inf
          %v1739 = vsel %vm1738, %v1702, %v1737
          %vm1740 = vcmp.eq.f32.partialorder %v1702, 0.0
          %v1741 = vand.u32 %v1702, 2147483648
          %v1742 = vsel %vm1740, %v1741, %v1739
          %v1743 = vrsqrt.pop %v1703
          %v1744 = vmul.f32 %v1703, %v1743
          %vm1745 = vcmp.eq.f32.partialorder %v1703, inf
          %v1746 = vsel %vm1745, %v1703, %v1744
          %vm1747 = vcmp.eq.f32.partialorder %v1703, 0.0
          %v1748 = vand.u32 %v1703, 2147483648
          %v1749 = vsel %vm1747, %v1748, %v1746
          %v1750 = vrsqrt.pop %v1704
          %v1751 = vmul.f32 %v1704, %v1750
          %vm1752 = vcmp.eq.f32.partialorder %v1704, inf
          %v1753 = vsel %vm1752, %v1704, %v1751
          %vm1754 = vcmp.eq.f32.partialorder %v1704, 0.0
          %v1755 = vand.u32 %v1704, 2147483648
          %v1756 = vsel %vm1754, %v1755, %v1753
          %v1757 = vrsqrt.pop %v1705
          %v1758 = vmul.f32 %v1705, %v1757
          %vm1759 = vcmp.eq.f32.partialorder %v1705, inf
          %v1760 = vsel %vm1759, %v1705, %v1758
          %vm1761 = vcmp.eq.f32.partialorder %v1705, 0.0
          %v1762 = vand.u32 %v1705, 2147483648
          %v1763 = vsel %vm1761, %v1762, %v1760
          %v1764 = vrsqrt.pop %v1706
          %v1765 = vmul.f32 %v1706, %v1764
          %vm1766 = vcmp.eq.f32.partialorder %v1706, inf
          %v1767 = vsel %vm1766, %v1706, %v1765
          %vm1768 = vcmp.eq.f32.partialorder %v1706, 0.0
          %v1769 = vand.u32 %v1706, 2147483648
          %v1770 = vsel %vm1768, %v1769, %v1767
          %v1771 = vrsqrt.pop %v1707
          %v1772 = vmul.f32 %v1707, %v1771
          %vm1773 = vcmp.eq.f32.partialorder %v1707, inf
          %v1774 = vsel %vm1773, %v1707, %v1772
          %vm1775 = vcmp.eq.f32.partialorder %v1707, 0.0
          %v1776 = vand.u32 %v1707, 2147483648
          %v1777 = vsel %vm1775, %v1776, %v1774
          %v1778 = vrsqrt.pop %v1708
          %v1779 = vmul.f32 %v1708, %v1778
          %vm1780 = vcmp.eq.f32.partialorder %v1708, inf
          %v1781 = vsel %vm1780, %v1708, %v1779
          %vm1782 = vcmp.eq.f32.partialorder %v1708, 0.0
          %v1783 = vand.u32 %v1708, 2147483648
          %v1784 = vsel %vm1782, %v1783, %v1781
          %v1785 = vrsqrt.pop %v1709
          %v1786 = vmul.f32 %v1709, %v1785
          %vm1787 = vcmp.eq.f32.partialorder %v1709, inf
          %v1788 = vsel %vm1787, %v1709, %v1786
          %vm1789 = vcmp.eq.f32.partialorder %v1709, 0.0
          %v1790 = vand.u32 %v1709, 2147483648
          %v1791 = vsel %vm1789, %v1790, %v1788
          %v1792 = vrsqrt.pop %v1710
          %v1793 = vmul.f32 %v1710, %v1792
          %vm1794 = vcmp.eq.f32.partialorder %v1710, inf
          %v1795 = vsel %vm1794, %v1710, %v1793
          %vm1796 = vcmp.eq.f32.partialorder %v1710, 0.0
          %v1797 = vand.u32 %v1710, 2147483648
          %v1798 = vsel %vm1796, %v1797, %v1795
          %v1799 = vrsqrt.pop %v1711
          %v1800 = vmul.f32 %v1711, %v1799
          %vm1801 = vcmp.eq.f32.partialorder %v1711, inf
          %v1802 = vsel %vm1801, %v1711, %v1800
          %vm1803 = vcmp.eq.f32.partialorder %v1711, 0.0
          %v1804 = vand.u32 %v1711, 2147483648
          %v1805 = vsel %vm1803, %v1804, %v1802
          %v1806 = vrsqrt.pop %v1712
          %v1807 = vmul.f32 %v1712, %v1806
          %vm1808 = vcmp.eq.f32.partialorder %v1712, inf
          %v1809 = vsel %vm1808, %v1712, %v1807
          %vm1810 = vcmp.eq.f32.partialorder %v1712, 0.0
          %v1811 = vand.u32 %v1712, 2147483648
          %v1812 = vsel %vm1810, %v1811, %v1809
          %v1813 = vrsqrt.pop %v1713
          %v1814 = vmul.f32 %v1713, %v1813
          %vm1815 = vcmp.eq.f32.partialorder %v1713, inf
          %v1816 = vsel %vm1815, %v1713, %v1814
          %vm1817 = vcmp.eq.f32.partialorder %v1713, 0.0
          %v1818 = vand.u32 %v1713, 2147483648
          %v1819 = vsel %vm1817, %v1818, %v1816
          %v1820 = vrsqrt.pop %v1714
          %v1821 = vmul.f32 %v1714, %v1820
          %vm1822 = vcmp.eq.f32.partialorder %v1714, inf
          %v1823 = vsel %vm1822, %v1714, %v1821
          %vm1824 = vcmp.eq.f32.partialorder %v1714, 0.0
          %v1825 = vand.u32 %v1714, 2147483648
          %v1826 = vsel %vm1824, %v1825, %v1823
          %v1827 = vld [vmem:[#allocation2] sm:$0xff]
          %v1828 = vld [vmem:[#allocation2 + $0x8] sm:$0xff]
          %v1829 = vld [vmem:[#allocation2 + $0x10] sm:$0xff]
          %v1830 = vld [vmem:[#allocation2 + $0x18] sm:$0xff]
          %v1831 = vld [vmem:[#allocation2 + $0x20] sm:$0xff]
          %v1832 = vld [vmem:[#allocation2 + $0x28] sm:$0xff]
          %v1833 = vld [vmem:[#allocation2 + $0x30] sm:$0xff]
          %v1834 = vld [vmem:[#allocation2 + $0x38] sm:$0xff]
          %v1835 = vld [vmem:[#allocation2 + $0x40] sm:$0xff]
          %v1836 = vld [vmem:[#allocation2 + $0x48] sm:$0xff]
          %v1837 = vld [vmem:[#allocation2 + $0x50] sm:$0xff]
          %v1838 = vld [vmem:[#allocation2 + $0x58] sm:$0xff]
          %v1839 = vld [vmem:[#allocation2 + $0x60] sm:$0xff]
          %v1840 = vld [vmem:[#allocation2 + $0x68] sm:$0xff]
          %v1841 = vld [vmem:[#allocation2 + $0x70] sm:$0xff]
          %v1842 = vld [vmem:[#allocation2 + $0x78] sm:$0xff]
          %v1843 = vld [vmem:[%s847] sm:$0xff]
          %v1844 = vld [vmem:[%s847 + $0x8] sm:$0xff]
          %v1845 = vld [vmem:[%s847 + $0x10] sm:$0xff]
          %v1846 = vld [vmem:[%s847 + $0x18] sm:$0xff]
          %v1847 = vld [vmem:[%s847 + $0x20] sm:$0xff]
          %v1848 = vld [vmem:[%s847 + $0x28] sm:$0xff]
          %v1849 = vld [vmem:[%s847 + $0x30] sm:$0xff]
          %v1850 = vld [vmem:[%s847 + $0x38] sm:$0xff]
          %v1851 = vld [vmem:[%s847 + $0x40] sm:$0xff]
          %v1852 = vld [vmem:[%s847 + $0x48] sm:$0xff]
          %v1853 = vld [vmem:[%s847 + $0x50] sm:$0xff]
          %v1854 = vld [vmem:[%s847 + $0x58] sm:$0xff]
          %v1855 = vld [vmem:[%s847 + $0x60] sm:$0xff]
          %v1856 = vld [vmem:[%s847 + $0x68] sm:$0xff]
          %v1857 = vld [vmem:[%s847 + $0x70] sm:$0xff]
          %v1858 = vld [vmem:[%s847 + $0x78] sm:$0xff]
          %v1859 = vmul.f32 %v1721, %v1843
          %v1860 = vmul.f32 %v1728, %v1844
          %v1861 = vmul.f32 %v1735, %v1845
          %v1862 = vmul.f32 %v1742, %v1846
          %v1863 = vmul.f32 %v1749, %v1847
          %v1864 = vmul.f32 %v1756, %v1848
          %v1865 = vmul.f32 %v1763, %v1849
          %v1866 = vmul.f32 %v1770, %v1850
          %v1867 = vmul.f32 %v1777, %v1851
          %v1868 = vmul.f32 %v1784, %v1852
          %v1869 = vmul.f32 %v1791, %v1853
          %v1870 = vmul.f32 %v1798, %v1854
          %v1871 = vmul.f32 %v1805, %v1855
          %v1872 = vmul.f32 %v1812, %v1856
          %v1873 = vmul.f32 %v1819, %v1857
          %v1874 = vmul.f32 %v1826, %v1858
          %v1875 = vadd.f32 %v1827, %v1859
          %v1876 = vadd.f32 %v1828, %v1860
          %v1877 = vadd.f32 %v1829, %v1861
          %v1878 = vadd.f32 %v1830, %v1862
          %v1879 = vadd.f32 %v1831, %v1863
          %v1880 = vadd.f32 %v1832, %v1864
          %v1881 = vadd.f32 %v1833, %v1865
          %v1882 = vadd.f32 %v1834, %v1866
          %v1883 = vadd.f32 %v1835, %v1867
          %v1884 = vadd.f32 %v1836, %v1868
          %v1885 = vadd.f32 %v1837, %v1869
          %v1886 = vadd.f32 %v1838, %v1870
          %v1887 = vadd.f32 %v1839, %v1871
          %v1888 = vadd.f32 %v1840, %v1872
          %v1889 = vadd.f32 %v1841, %v1873
          %v1890 = vadd.f32 %v1842, %v1874
          %v1891 = vld [vmem:[%s898] sm:$0x1]
          %v1892 = vmax.f32 %v1891, 0.0
          %vm1893 = vcmp.ne.f32.partialorder %v1891, %v1891
          %v1894 = vadd.f32 %v1891, 0.0
          %v1895 = vand.u32 2147483647, %v1891
          %v1896 = vsub.f32 0.0, %v1895
          %v1897 = vmul.f32 %v1896, 1.442695
          %v1898 = vpow.pop %v1897
          %v1899 = vadd.f32 %v1898, 1.0
          %v1900 = vlog2.pop %v1899
          %v1901 = vmul.f32 %v1900, 0.6931472
          %v1902 = vmul.f32 -0.5, %v1898
          %v1903 = vadd.f32 %v1902, 1.0
          %v1904 = vmul.f32 %v1903, %v1898
          %v1905 = vand.u32 2147483647, %v1898
          %vm1906 = vcmp.lt.f32.partialorder %v1905, 0.0004427343
          %v1907 = vsel %vm1906, %v1904, %v1901
          %v1908 = vadd.f32 %v1892, %v1907
          %v1909 = vsel %vm1893, %v1894, %v1908
          %v1911 = vlaneseq
          %v1912 = vshrl.u32 %v1911, 7
          %v1913 = vsub.s32 0, %v1912
          %v1914 = vrot.slane %v1909, %v1913
          %v1916 = vmul.f32 %v1914, %v1875
          %v1917 = vmul.f32 %v1914, %v1876
          %v1918 = vmul.f32 %v1914, %v1877
          %v1919 = vmul.f32 %v1914, %v1878
          %v1920 = vmul.f32 %v1914, %v1879
          %v1921 = vmul.f32 %v1914, %v1880
          %v1922 = vmul.f32 %v1914, %v1881
          %v1923 = vmul.f32 %v1914, %v1882
          %v1924 = vmul.f32 %v1914, %v1883
          %v1925 = vmul.f32 %v1914, %v1884
          %v1926 = vmul.f32 %v1914, %v1885
          %v1927 = vmul.f32 %v1914, %v1886
          %v1928 = vmul.f32 %v1914, %v1887
          %v1929 = vmul.f32 %v1914, %v1888
          %v1930 = vmul.f32 %v1914, %v1889
          %v1931 = vmul.f32 %v1914, %v1890
          %v1932 = vld [vmem:[%s901] sm:$0x1]
          %v1934 = vlaneseq
          %v1935 = vshrl.u32 %v1934, 7
          %v1936 = vsub.s32 0, %v1935
          %v1937 = vrot.slane %v1932, %v1936
          %v1939 = vadd.f32 %v1916, %v1937
          %v1940 = vadd.f32 %v1917, %v1937
          %v1941 = vadd.f32 %v1918, %v1937
          %v1942 = vadd.f32 %v1919, %v1937
          %v1943 = vadd.f32 %v1920, %v1937
          %v1944 = vadd.f32 %v1921, %v1937
          %v1945 = vadd.f32 %v1922, %v1937
          %v1946 = vadd.f32 %v1923, %v1937
          %v1947 = vadd.f32 %v1924, %v1937
          %v1948 = vadd.f32 %v1925, %v1937
          %v1949 = vadd.f32 %v1926, %v1937
          %v1950 = vadd.f32 %v1927, %v1937
          %v1951 = vadd.f32 %v1928, %v1937
          %v1952 = vadd.f32 %v1929, %v1937
          %v1953 = vadd.f32 %v1930, %v1937
          %v1954 = vadd.f32 %v1931, %v1937
          %1955 = vst [vmem:[%s891] sm:$0xff] %v1939
          %1956 = vst [vmem:[%s891 + $0x8] sm:$0xff] %v1940
          %1957 = vst [vmem:[%s891 + $0x10] sm:$0xff] %v1941
          %1958 = vst [vmem:[%s891 + $0x18] sm:$0xff] %v1942
          %1959 = vst [vmem:[%s891 + $0x20] sm:$0xff] %v1943
          %1960 = vst [vmem:[%s891 + $0x28] sm:$0xff] %v1944
          %1961 = vst [vmem:[%s891 + $0x30] sm:$0xff] %v1945
          %1962 = vst [vmem:[%s891 + $0x38] sm:$0xff] %v1946
          %1963 = vst [vmem:[%s891 + $0x40] sm:$0xff] %v1947
          %1964 = vst [vmem:[%s891 + $0x48] sm:$0xff] %v1948
          %1965 = vst [vmem:[%s891 + $0x50] sm:$0xff] %v1949
          %1966 = vst [vmem:[%s891 + $0x58] sm:$0xff] %v1950
          %1967 = vst [vmem:[%s891 + $0x60] sm:$0xff] %v1951
          %1968 = vst [vmem:[%s891 + $0x68] sm:$0xff] %v1952
          %1969 = vst [vmem:[%s891 + $0x70] sm:$0xff] %v1953
          %1970 = vst [vmem:[%s891 + $0x78] sm:$0xff] %v1954
        $region210: #{ternary_train_forward.3} parent=185 // pred_fallthru
          _
        %s1971 = sand.u32 %s213, 1
        %s1972 = scalar_lea.sflag [#allocation9], %s1971
        %s1973 = sand.u32 %s213, 1
        %s1974 = smul.addr %s1973, 128
        %s1975 = scalar_lea.vmem [#allocation8], %s1974
        // Predicated region
        $region211: #{ternary_train_forward.3} parent=185 // pred_check
          %p1976 = pneg %p223
        $region212: #{ternary_train_forward.3} parent=185 // pred_check_branch
          %1978 = sbr.rel (%p1976) target = $region214
        $region213: #{ternary_train_forward.3} parent=185 // pred_region
          %s1979 = smul.u32 16, %s25
          %s1981 = ssub.s32 2048, 2048
          %1982 = vsyncadd %s1972, %s1981
          %s1983 = smul.addr %s1979, 2
          %s1984 = sadd.s32 %s26, %s1983
          %s1985 = smul.addr %s1984, 128
          %s1986 = scalar_lea.hbm %s6, %s1985
          %s1987 = sshll.u32 %s1975, 4
          %s1988 = int_to_ptr.vmem [resolvable:$true] %s1987
          %1993 = dma.vmem_to_hbm [thread:$0]  %s1988, 2048, %s1986, %s1972, 128, 256, 8
        $region214: #{ternary_train_forward.3} parent=185 // pred_fallthru
          _
      $region186: #{ternary_train_forward.3} parent=5 // pred_fallthru
        _
      %p1994 = scmp.le.s32.totalorder 2, %s15
      // Predicated region
      $region215: #{ternary_train_forward.3} parent=5 // pred_check
        %p1995 = pneg %p1994
      $region216: #{ternary_train_forward.3} parent=5 // pred_check_branch
        %1997 = sbr.rel (%p1995) target = $region218
      $region217: #{ternary_train_forward.3} parent=5 // pred_region
        %s1998 = ssub.s32 %s15, 2
        // Predicated region
        $region219: #{ternary_train_forward.3} parent=217 // pred_check
          %p1999 = pneg %p229
        $region220: #{ternary_train_forward.3} parent=217 // pred_check_branch
          %2001 = sbr.rel (%p1999) target = $region222
        $region221: #{ternary_train_forward.3} parent=217 // pred_region
          %s2002 = sand.u32 %s214, 1
          %s2003 = scalar_lea.sflag [#allocation9], %s2002
          %s2004 = sand.u32 %s214, 1
          %s2005 = smul.addr %s2004, 128
          %s2006 = scalar_lea.vmem [#allocation8], %s2005
          %2007 = dma.done %s2003, 2048
        $region222: #{ternary_train_forward.3} parent=217 // pred_fallthru
          _
      $region218: #{ternary_train_forward.3} parent=5 // pred_fallthru
        _
    $region6: #{ternary_train_forward.3} parent=1 // loop_footer
      %s19 = sadd.s32 1, %s15
    $region7: #{ternary_train_forward.3} parent=1 // loop_footer_branch
      %14 = sbr.rel target = $region3
    $region8: #{ternary_train_forward.3} parent=1 // loop_exit
      _
    %2008 = vsyncpa [#allocation9], 1
    %s2009 = scalar_lea.sflag [#allocation9], 1
    %2010 = vsyncpa %s2009, 1

</llo_original>
